<compile_context>
chip_gen: v7x
topology: tpu7x:2x2x1
jax: 0.10.0
libtpu: 0.0.40
codegen_flags: <defaults>
</compile_context>

<pallas_src>
import functools

import jax
import jax.numpy as jnp
from jax.experimental import pallas as pl
from jax.experimental.pallas import tpu as pltpu


# ---------------------------------------------------------------------------
# Fused kernel: runs the whole encoder+decoder for one batch tile.
#   refs = (w0, b0, w1, b1, ..., w{L-1}, b{L-1}, enc_out, dec_out)
# ---------------------------------------------------------------------------
def _fused_ae_kernel(x_ref, *refs, n_enc, n_dec):
    n_layers = n_enc + n_dec
    param_refs = refs[: 2 * n_layers]
    enc_ref = refs[2 * n_layers]
    dec_ref = refs[2 * n_layers + 1]

    h = x_ref[...].astype(jnp.float32)
    for i in range(n_layers):
        w = param_refs[2 * i][...]        # bf16 weights -> MXU at bf16 rate
        b = param_refs[2 * i + 1][...]    # f32 bias
        # bf16 x bf16 matmul, f32 accumulate; bias-add / ReLU in f32.
        h = jnp.dot(h.astype(w.dtype), w, preferred_element_type=jnp.float32) + b
        if i < n_layers - 1:              # ReLU after every layer except the final decoder layer
            h = jnp.maximum(h, 0.0)
        if i == n_enc - 1:                # encoder output (already ReLU'd, as in the PyTorch module)
            enc_ref[...] = h.astype(enc_ref.dtype)
    dec_ref[...] = h.astype(dec_ref.dtype)


def _choose_batch_tile(M):
    """Pick (tm, grid_m): big tiles amortize MXU weight-fill, >=2 tiles for v7x."""
    if M <= 256:
        # Single full-batch tile (block == full array dim, so no (8,128) issue
        # and no padding needed).  Below 256 rows megacore would not help
        # anyway: the layer chain is strictly sequential.
        return M, 1
    tm = min(512, max(128, ((M // 2) // 128) * 128))
    return tm, pl.cdiv(M, tm)


def autoencoder_forward(x, enc_params, dec_params):
    """x: [M, input]; params are lists of (W [in, out], b [1, out]).

    Returns (encoded [M, latent], decoded [M, input])."""
    n_enc, n_dec = len(enc_params), len(dec_params)
    params = list(enc_params) + list(dec_params)
    M, in_dim = x.shape
    latent_dim = enc_params[-1][0].shape[1]
    out_dim = dec_params[-1][0].shape[1]

    # Pre-cast: bf16 weights (MXU inputs), f32 biases (VPU bias-add/ReLU).
    cast_params = []
    for w, b in params:
        assert w.shape[0] % 128 == 0 and w.shape[1] % 128 == 0, (
            "feature dims must be multiples of 128 (pad the original widths)")
        assert b.shape == (1, w.shape[1])
        cast_params.append((w.astype(jnp.bfloat16), b.astype(jnp.float32)))

    tm, grid_m = _choose_batch_tile(M)

    # BlockSpecs: activation/outputs tiled over batch; weights/biases are
    # full-array blocks with a constant index map -> VMEM-resident and never
    # re-fetched across batch tiles.
    in_specs = [pl.BlockSpec((tm, in_dim), lambda m: (m, 0))]
    flat_params = []
    for w, b in cast_params:
        in_specs.append(pl.BlockSpec(w.shape, lambda m: (0, 0)))
        in_specs.append(pl.BlockSpec(b.shape, lambda m: (0, 0)))
        flat_params += [w, b]

    out_specs = [
        pl.BlockSpec((tm, latent_dim), lambda m: (m, 0)),   # lane-dense (128)
        pl.BlockSpec((tm, out_dim), lambda m: (m, 0)),      # lane-dense (512)
    ]
    out_shape = [
        jax.ShapeDtypeStruct((M, latent_dim), x.dtype),
        jax.ShapeDtypeStruct((M, out_dim), x.dtype),
    ]

    # --- cost estimate (lets XLA schedule around the custom call) ---
    weight_elems = sum(int(w.size) for w, _ in cast_params)
    bias_elems = sum(int(b.size) for _, b in cast_params)
    param_bytes = sum(int(a.size) * a.dtype.itemsize
                      for pair in cast_params for a in pair)
    io_bytes = (int(x.size) + M * latent_dim + M * out_dim) * x.dtype.itemsize
    cost = pl.CostEstimate(
        flops=int(2 * M * weight_elems + 2 * M * bias_elems),
        transcendentals=0,
        bytes_accessed=int(param_bytes + io_bytes),
    )

    # --- explicit scoped-VMEM budget (v5e defaults to 16 MiB; cap 64 MiB for v7x) ---
    max_width = max([in_dim] + [w.shape[1] for w, _ in cast_params])
    io_tile_bytes = tm * (in_dim + latent_dim + out_dim) * x.dtype.itemsize
    vmem_needed = (2 * param_bytes            # double-buffered resident weights/biases
                   + 2 * io_tile_bytes        # pipelined x/enc/dec tiles
                   + 4 * tm * max_width * 4   # live f32 intermediates (generous)
                   + (8 << 20))               # headroom
    vmem_limit = int(min(64 << 20, max(32 << 20, vmem_needed)))

    kernel = functools.partial(_fused_ae_kernel, n_enc=n_enc, n_dec=n_dec)
    enc, dec = pl.pallas_call(
        kernel,
        out_shape=out_shape,
        grid_spec=pltpu.PrefetchScalarGridSpec(
            num_scalar_prefetch=0,
            grid=(grid_m,),
            in_specs=in_specs,
            out_specs=out_specs,
        ),
        compiler_params=pltpu.CompilerParams(
            dimension_semantics=("parallel",),  # batch tiles are independent
            vmem_limit_bytes=vmem_limit,
        ),
        cost_estimate=cost,
    )(x, *flat_params)
    return enc, dec


# ---------------------------------------------------------------------------
# Parameter init (PyTorch-like uniform(-1/sqrt(fan_in), 1/sqrt(fan_in)))
# ---------------------------------------------------------------------------
def init_linear_params(key, in_dim, out_dim, dtype=jnp.float32):
    kw, kb = jax.random.split(key)
    bound = 1.0 / jnp.sqrt(jnp.float32(in_dim))
    w = jax.random.uniform(kw, (in_dim, out_dim), dtype, -bound, bound)
    b = jax.random.uniform(kb, (1, out_dim), dtype, -bound, bound)
    return w, b


if __name__ == "__main__":
    # Scaled-down dims (original: input->43201->21600->10800->4096->latent and mirror).
    INPUT_SIZE = 512
    LATENT_DIM = 128
    enc_dims = [INPUT_SIZE, 512, 384, 256, 128, LATENT_DIM]
    dec_dims = [LATENT_DIM, 128, 256, 384, 512, INPUT_SIZE]
    BATCH = 2  # any batch works; no wrapper-side padded copy is made

    key = jax.random.PRNGKey(0)
    key, xk = jax.random.split(key)
    x = jax.random.normal(xk, (BATCH, INPUT_SIZE), jnp.float32)

    enc_params = []
    for i in range(len(enc_dims) - 1):
        key, sub = jax.random.split(key)
        enc_params.append(init_linear_params(sub, enc_dims[i], enc_dims[i + 1]))

    dec_params = []
    for i in range(len(dec_dims) - 1):
        key, sub = jax.random.split(key)
        dec_params.append(init_linear_params(sub, dec_dims[i], dec_dims[i + 1]))

    encoded, decoded = jax.jit(autoencoder_forward)(x, enc_params, dec_params)
    jax.block_until_ready((encoded, decoded))

    # Reference forward in plain JAX mimicking the kernel's mixed precision
    # (bf16 matmul inputs, f32 accumulate / bias / ReLU).
    def ref_forward(x, enc_params, dec_params):
        def layer(h, w, b, relu):
            y = jnp.dot(h.astype(jnp.bfloat16), w.astype(jnp.bfloat16),
                        preferred_element_type=jnp.float32) + b.astype(jnp.float32)
            return jnp.maximum(y, 0.0) if relu else y

        h = x.astype(jnp.float32)
        for w, b in enc_params:
            h = layer(h, w, b, True)
        enc = h
        for i, (w, b) in enumerate(dec_params):
            h = layer(h, w, b, i < len(dec_params) - 1)
        return enc, h

    enc_ref, dec_ref = ref_forward(x, enc_params, dec_params)
    assert encoded.shape == (BATCH, LATENT_DIM)
    assert decoded.shape == (BATCH, INPUT_SIZE)
    assert jnp.allclose(encoded, enc_ref, atol=1e-2, rtol=1e-2)
    assert jnp.allclose(decoded, dec_ref, atol=1e-2, rtol=1e-2)

    print("KERNEL_OK")
</pallas_src>

<mosaic_0001>
module attributes {stable_mosaic.version = 11 : i64} {
  func.func @_fused_ae_kernel(%arg0: i32, %arg1: memref<2x512xf32, #tpu.memory_space<vmem>>, %arg2: memref<512x512xbf16, #tpu.memory_space<vmem>>, %arg3: memref<1x512xf32, #tpu.memory_space<vmem>>, %arg4: memref<512x384xbf16, #tpu.memory_space<vmem>>, %arg5: memref<1x384xf32, #tpu.memory_space<vmem>>, %arg6: memref<384x256xbf16, #tpu.memory_space<vmem>>, %arg7: memref<1x256xf32, #tpu.memory_space<vmem>>, %arg8: memref<256x128xbf16, #tpu.memory_space<vmem>>, %arg9: memref<1x128xf32, #tpu.memory_space<vmem>>, %arg10: memref<128x128xbf16, #tpu.memory_space<vmem>>, %arg11: memref<1x128xf32, #tpu.memory_space<vmem>>, %arg12: memref<128x128xbf16, #tpu.memory_space<vmem>>, %arg13: memref<1x128xf32, #tpu.memory_space<vmem>>, %arg14: memref<128x256xbf16, #tpu.memory_space<vmem>>, %arg15: memref<1x256xf32, #tpu.memory_space<vmem>>, %arg16: memref<256x384xbf16, #tpu.memory_space<vmem>>, %arg17: memref<1x384xf32, #tpu.memory_space<vmem>>, %arg18: memref<384x512xbf16, #tpu.memory_space<vmem>>, %arg19: memref<1x512xf32, #tpu.memory_space<vmem>>, %arg20: memref<512x512xbf16, #tpu.memory_space<vmem>>, %arg21: memref<1x512xf32, #tpu.memory_space<vmem>>, %arg22: memref<2x128xf32, #tpu.memory_space<vmem>>, %arg23: memref<2x512xf32, #tpu.memory_space<vmem>>) attributes {dimension_semantics = [#tpu.dimension_semantics<parallel>], iteration_bounds = array<i64: 1>, scalar_prefetch = 0 : i64, scratch_operands = 0 : i64, tpu.core_type = #tpu.core_type<tc>, window_params = [{transform_indices = @transform_0, window_bounds = array<i64: 2, 512>}, {pipeline_mode = #tpu.pipeline_mode<synchronous>, transform_indices = @transform_1, window_bounds = array<i64: 512, 512>}, {pipeline_mode = #tpu.pipeline_mode<synchronous>, transform_indices = @transform_2, window_bounds = array<i64: 1, 512>}, {pipeline_mode = #tpu.pipeline_mode<synchronous>, transform_indices = @transform_3, window_bounds = array<i64: 512, 384>}, {pipeline_mode = #tpu.pipeline_mode<synchronous>, transform_indices = @transform_4, window_bounds = array<i64: 1, 384>}, {pipeline_mode = #tpu.pipeline_mode<synchronous>, transform_indices = @transform_5, window_bounds = array<i64: 384, 256>}, {pipeline_mode = #tpu.pipeline_mode<synchronous>, transform_indices = @transform_6, window_bounds = array<i64: 1, 256>}, {pipeline_mode = #tpu.pipeline_mode<synchronous>, transform_indices = @transform_7, window_bounds = array<i64: 256, 128>}, {pipeline_mode = #tpu.pipeline_mode<synchronous>, transform_indices = @transform_8, window_bounds = array<i64: 1, 128>}, {pipeline_mode = #tpu.pipeline_mode<synchronous>, transform_indices = @transform_9, window_bounds = array<i64: 128, 128>}, {pipeline_mode = #tpu.pipeline_mode<synchronous>, transform_indices = @transform_10, window_bounds = array<i64: 1, 128>}, {pipeline_mode = #tpu.pipeline_mode<synchronous>, transform_indices = @transform_11, window_bounds = array<i64: 128, 128>}, {pipeline_mode = #tpu.pipeline_mode<synchronous>, transform_indices = @transform_12, window_bounds = array<i64: 1, 128>}, {pipeline_mode = #tpu.pipeline_mode<synchronous>, transform_indices = @transform_13, window_bounds = array<i64: 128, 256>}, {pipeline_mode = #tpu.pipeline_mode<synchronous>, transform_indices = @transform_14, window_bounds = array<i64: 1, 256>}, {pipeline_mode = #tpu.pipeline_mode<synchronous>, transform_indices = @transform_15, window_bounds = array<i64: 256, 384>}, {pipeline_mode = #tpu.pipeline_mode<synchronous>, transform_indices = @transform_16, window_bounds = array<i64: 1, 384>}, {pipeline_mode = #tpu.pipeline_mode<synchronous>, transform_indices = @transform_17, window_bounds = array<i64: 384, 512>}, {pipeline_mode = #tpu.pipeline_mode<synchronous>, transform_indices = @transform_18, window_bounds = array<i64: 1, 512>}, {pipeline_mode = #tpu.pipeline_mode<synchronous>, transform_indices = @transform_19, window_bounds = array<i64: 512, 512>}, {pipeline_mode = #tpu.pipeline_mode<synchronous>, transform_indices = @transform_20, window_bounds = array<i64: 1, 512>}, {transform_indices = @transform_21, window_bounds = array<i64: 2, 128>}, {transform_indices = @transform_22, window_bounds = array<i64: 2, 512>}]} {
    %c0 = arith.constant 0 : index
    %c0_0 = arith.constant 0 : index
    %0 = vector.load %arg1[%c0, %c0_0] : memref<2x512xf32, #tpu.memory_space<vmem>>, vector<2x512xf32>
    %c0_1 = arith.constant 0 : index
    %c0_2 = arith.constant 0 : index
    %1 = vector.load %arg2[%c0_1, %c0_2] : memref<512x512xbf16, #tpu.memory_space<vmem>>, vector<512x512xbf16>
    %c0_3 = arith.constant 0 : index
    %c0_4 = arith.constant 0 : index
    %2 = vector.load %arg3[%c0_3, %c0_4] : memref<1x512xf32, #tpu.memory_space<vmem>>, vector<1x512xf32>
    %3 = arith.truncf %0 : vector<2x512xf32> to vector<2x512xbf16>
    %cst = arith.constant dense<0.000000e+00> : vector<2x512xf32>
    %4 = tpu.matmul %3, %1, %cst {dimension_numbers = #tpu.dot_dimension_numbers<[1], [0], [0], [1], [0, 0, 1, 1], [], []>} : vector<2x512xbf16>, vector<512x512xbf16>, vector<2x512xf32> -> vector<2x512xf32>
    %5 = vector.broadcast %2 : vector<1x512xf32> to vector<2x512xf32>
    %6 = arith.addf %4, %5 : vector<2x512xf32>
    %cst_5 = arith.constant 0.000000e+00 : f32
    %7 = vector.broadcast %cst_5 : f32 to vector<2x512xf32>
    %8 = arith.maximumf %6, %7 : vector<2x512xf32>
    %c0_6 = arith.constant 0 : index
    %c0_7 = arith.constant 0 : index
    %9 = vector.load %arg4[%c0_6, %c0_7] : memref<512x384xbf16, #tpu.memory_space<vmem>>, vector<512x384xbf16>
    %c0_8 = arith.constant 0 : index
    %c0_9 = arith.constant 0 : index
    %10 = vector.load %arg5[%c0_8, %c0_9] : memref<1x384xf32, #tpu.memory_space<vmem>>, vector<1x384xf32>
    %11 = arith.truncf %8 : vector<2x512xf32> to vector<2x512xbf16>
    %cst_10 = arith.constant dense<0.000000e+00> : vector<2x384xf32>
    %12 = tpu.matmul %11, %9, %cst_10 {dimension_numbers = #tpu.dot_dimension_numbers<[1], [0], [0], [1], [0, 0, 1, 1], [], []>} : vector<2x512xbf16>, vector<512x384xbf16>, vector<2x384xf32> -> vector<2x384xf32>
    %13 = vector.broadcast %10 : vector<1x384xf32> to vector<2x384xf32>
    %14 = arith.addf %12, %13 : vector<2x384xf32>
    %cst_11 = arith.constant 0.000000e+00 : f32
    %15 = vector.broadcast %cst_11 : f32 to vector<2x384xf32>
    %16 = arith.maximumf %14, %15 : vector<2x384xf32>
    %c0_12 = arith.constant 0 : index
    %c0_13 = arith.constant 0 : index
    %17 = vector.load %arg6[%c0_12, %c0_13] : memref<384x256xbf16, #tpu.memory_space<vmem>>, vector<384x256xbf16>
    %c0_14 = arith.constant 0 : index
    %c0_15 = arith.constant 0 : index
    %18 = vector.load %arg7[%c0_14, %c0_15] : memref<1x256xf32, #tpu.memory_space<vmem>>, vector<1x256xf32>
    %19 = arith.truncf %16 : vector<2x384xf32> to vector<2x384xbf16>
    %cst_16 = arith.constant dense<0.000000e+00> : vector<2x256xf32>
    %20 = tpu.matmul %19, %17, %cst_16 {dimension_numbers = #tpu.dot_dimension_numbers<[1], [0], [0], [1], [0, 0, 1, 1], [], []>} : vector<2x384xbf16>, vector<384x256xbf16>, vector<2x256xf32> -> vector<2x256xf32>
    %21 = vector.broadcast %18 : vector<1x256xf32> to vector<2x256xf32>
    %22 = arith.addf %20, %21 : vector<2x256xf32>
    %cst_17 = arith.constant 0.000000e+00 : f32
    %23 = vector.broadcast %cst_17 : f32 to vector<2x256xf32>
    %24 = arith.maximumf %22, %23 : vector<2x256xf32>
    %c0_18 = arith.constant 0 : index
    %c0_19 = arith.constant 0 : index
    %25 = vector.load %arg8[%c0_18, %c0_19] : memref<256x128xbf16, #tpu.memory_space<vmem>>, vector<256x128xbf16>
    %c0_20 = arith.constant 0 : index
    %c0_21 = arith.constant 0 : index
    %26 = vector.load %arg9[%c0_20, %c0_21] : memref<1x128xf32, #tpu.memory_space<vmem>>, vector<1x128xf32>
    %27 = arith.truncf %24 : vector<2x256xf32> to vector<2x256xbf16>
    %cst_22 = arith.constant dense<0.000000e+00> : vector<2x128xf32>
    %28 = tpu.matmul %27, %25, %cst_22 {dimension_numbers = #tpu.dot_dimension_numbers<[1], [0], [0], [1], [0, 0, 1, 1], [], []>} : vector<2x256xbf16>, vector<256x128xbf16>, vector<2x128xf32> -> vector<2x128xf32>
    %29 = vector.broadcast %26 : vector<1x128xf32> to vector<2x128xf32>
    %30 = arith.addf %28, %29 : vector<2x128xf32>
    %cst_23 = arith.constant 0.000000e+00 : f32
    %31 = vector.broadcast %cst_23 : f32 to vector<2x128xf32>
    %32 = arith.maximumf %30, %31 : vector<2x128xf32>
    %c0_24 = arith.constant 0 : index
    %c0_25 = arith.constant 0 : index
    %33 = vector.load %arg10[%c0_24, %c0_25] : memref<128x128xbf16, #tpu.memory_space<vmem>>, vector<128x128xbf16>
    %c0_26 = arith.constant 0 : index
    %c0_27 = arith.constant 0 : index
    %34 = vector.load %arg11[%c0_26, %c0_27] : memref<1x128xf32, #tpu.memory_space<vmem>>, vector<1x128xf32>
    %35 = arith.truncf %32 : vector<2x128xf32> to vector<2x128xbf16>
    %cst_28 = arith.constant dense<0.000000e+00> : vector<2x128xf32>
    %36 = tpu.matmul %35, %33, %cst_28 {dimension_numbers = #tpu.dot_dimension_numbers<[1], [0], [0], [1], [0, 0, 1, 1], [], []>} : vector<2x128xbf16>, vector<128x128xbf16>, vector<2x128xf32> -> vector<2x128xf32>
    %37 = vector.broadcast %34 : vector<1x128xf32> to vector<2x128xf32>
    %38 = arith.addf %36, %37 : vector<2x128xf32>
    %cst_29 = arith.constant 0.000000e+00 : f32
    %39 = vector.broadcast %cst_29 : f32 to vector<2x128xf32>
    %40 = arith.maximumf %38, %39 : vector<2x128xf32>
    %c0_30 = arith.constant 0 : index
    %c0_31 = arith.constant 0 : index
    %41 = vector.load %arg22[%c0_30, %c0_31] : memref<2x128xf32, #tpu.memory_space<vmem>>, vector<2x128xf32>
    tpu.vector_store %arg22[%c0_30, %c0_31], %40 {strides = array<i32>} : memref<2x128xf32, #tpu.memory_space<vmem>>, vector<2x128xf32>,
    %c0_32 = arith.constant 0 : index
    %c0_33 = arith.constant 0 : index
    %42 = vector.load %arg12[%c0_32, %c0_33] : memref<128x128xbf16, #tpu.memory_space<vmem>>, vector<128x128xbf16>
    %c0_34 = arith.constant 0 : index
    %c0_35 = arith.constant 0 : index
    %43 = vector.load %arg13[%c0_34, %c0_35] : memref<1x128xf32, #tpu.memory_space<vmem>>, vector<1x128xf32>
    %44 = arith.truncf %40 : vector<2x128xf32> to vector<2x128xbf16>
    %cst_36 = arith.constant dense<0.000000e+00> : vector<2x128xf32>
    %45 = tpu.matmul %44, %42, %cst_36 {dimension_numbers = #tpu.dot_dimension_numbers<[1], [0], [0], [1], [0, 0, 1, 1], [], []>} : vector<2x128xbf16>, vector<128x128xbf16>, vector<2x128xf32> -> vector<2x128xf32>
    %46 = vector.broadcast %43 : vector<1x128xf32> to vector<2x128xf32>
    %47 = arith.addf %45, %46 : vector<2x128xf32>
    %cst_37 = arith.constant 0.000000e+00 : f32
    %48 = vector.broadcast %cst_37 : f32 to vector<2x128xf32>
    %49 = arith.maximumf %47, %48 : vector<2x128xf32>
    %c0_38 = arith.constant 0 : index
    %c0_39 = arith.constant 0 : index
    %50 = vector.load %arg14[%c0_38, %c0_39] : memref<128x256xbf16, #tpu.memory_space<vmem>>, vector<128x256xbf16>
    %c0_40 = arith.constant 0 : index
    %c0_41 = arith.constant 0 : index
    %51 = vector.load %arg15[%c0_40, %c0_41] : memref<1x256xf32, #tpu.memory_space<vmem>>, vector<1x256xf32>
    %52 = arith.truncf %49 : vector<2x128xf32> to vector<2x128xbf16>
    %cst_42 = arith.constant dense<0.000000e+00> : vector<2x256xf32>
    %53 = tpu.matmul %52, %50, %cst_42 {dimension_numbers = #tpu.dot_dimension_numbers<[1], [0], [0], [1], [0, 0, 1, 1], [], []>} : vector<2x128xbf16>, vector<128x256xbf16>, vector<2x256xf32> -> vector<2x256xf32>
    %54 = vector.broadcast %51 : vector<1x256xf32> to vector<2x256xf32>
    %55 = arith.addf %53, %54 : vector<2x256xf32>
    %cst_43 = arith.constant 0.000000e+00 : f32
    %56 = vector.broadcast %cst_43 : f32 to vector<2x256xf32>
    %57 = arith.maximumf %55, %56 : vector<2x256xf32>
    %c0_44 = arith.constant 0 : index
    %c0_45 = arith.constant 0 : index
    %58 = vector.load %arg16[%c0_44, %c0_45] : memref<256x384xbf16, #tpu.memory_space<vmem>>, vector<256x384xbf16>
    %c0_46 = arith.constant 0 : index
    %c0_47 = arith.constant 0 : index
    %59 = vector.load %arg17[%c0_46, %c0_47] : memref<1x384xf32, #tpu.memory_space<vmem>>, vector<1x384xf32>
    %60 = arith.truncf %57 : vector<2x256xf32> to vector<2x256xbf16>
    %cst_48 = arith.constant dense<0.000000e+00> : vector<2x384xf32>
    %61 = tpu.matmul %60, %58, %cst_48 {dimension_numbers = #tpu.dot_dimension_numbers<[1], [0], [0], [1], [0, 0, 1, 1], [], []>} : vector<2x256xbf16>, vector<256x384xbf16>, vector<2x384xf32> -> vector<2x384xf32>
    %62 = vector.broadcast %59 : vector<1x384xf32> to vector<2x384xf32>
    %63 = arith.addf %61, %62 : vector<2x384xf32>
    %cst_49 = arith.constant 0.000000e+00 : f32
    %64 = vector.broadcast %cst_49 : f32 to vector<2x384xf32>
    %65 = arith.maximumf %63, %64 : vector<2x384xf32>
    %c0_50 = arith.constant 0 : index
    %c0_51 = arith.constant 0 : index
    %66 = vector.load %arg18[%c0_50, %c0_51] : memref<384x512xbf16, #tpu.memory_space<vmem>>, vector<384x512xbf16>
    %c0_52 = arith.constant 0 : index
    %c0_53 = arith.constant 0 : index
    %67 = vector.load %arg19[%c0_52, %c0_53] : memref<1x512xf32, #tpu.memory_space<vmem>>, vector<1x512xf32>
    %68 = arith.truncf %65 : vector<2x384xf32> to vector<2x384xbf16>
    %cst_54 = arith.constant dense<0.000000e+00> : vector<2x512xf32>
    %69 = tpu.matmul %68, %66, %cst_54 {dimension_numbers = #tpu.dot_dimension_numbers<[1], [0], [0], [1], [0, 0, 1, 1], [], []>} : vector<2x384xbf16>, vector<384x512xbf16>, vector<2x512xf32> -> vector<2x512xf32>
    %70 = vector.broadcast %67 : vector<1x512xf32> to vector<2x512xf32>
    %71 = arith.addf %69, %70 : vector<2x512xf32>
    %cst_55 = arith.constant 0.000000e+00 : f32
    %72 = vector.broadcast %cst_55 : f32 to vector<2x512xf32>
    %73 = arith.maximumf %71, %72 : vector<2x512xf32>
    %c0_56 = arith.constant 0 : index
    %c0_57 = arith.constant 0 : index
    %74 = vector.load %arg20[%c0_56, %c0_57] : memref<512x512xbf16, #tpu.memory_space<vmem>>, vector<512x512xbf16>
    %c0_58 = arith.constant 0 : index
    %c0_59 = arith.constant 0 : index
    %75 = vector.load %arg21[%c0_58, %c0_59] : memref<1x512xf32, #tpu.memory_space<vmem>>, vector<1x512xf32>
    %76 = arith.truncf %73 : vector<2x512xf32> to vector<2x512xbf16>
    %cst_60 = arith.constant dense<0.000000e+00> : vector<2x512xf32>
    %77 = tpu.matmul %76, %74, %cst_60 {dimension_numbers = #tpu.dot_dimension_numbers<[1], [0], [0], [1], [0, 0, 1, 1], [], []>} : vector<2x512xbf16>, vector<512x512xbf16>, vector<2x512xf32> -> vector<2x512xf32>
    %78 = vector.broadcast %75 : vector<1x512xf32> to vector<2x512xf32>
    %79 = arith.addf %77, %78 : vector<2x512xf32>
    %c0_61 = arith.constant 0 : index
    %c0_62 = arith.constant 0 : index
    %80 = vector.load %arg23[%c0_61, %c0_62] : memref<2x512xf32, #tpu.memory_space<vmem>>, vector<2x512xf32>
    tpu.vector_store %arg23[%c0_61, %c0_62], %79 {strides = array<i32>} : memref<2x512xf32, #tpu.memory_space<vmem>>, vector<2x512xf32>,
    return
  }
  func.func @transform_0(%arg0: i32) -> (i32, i32) {
    %c0_i32 = arith.constant 0 : i32
    %c0_i32_0 = arith.constant 0 : i32
    return %arg0, %c0_i32 : i32, i32
  }
  func.func @transform_1(%arg0: i32) -> (i32, i32) {
    %c0_i32 = arith.constant 0 : i32
    %c0_i32_0 = arith.constant 0 : i32
    %c0_i32_1 = arith.constant 0 : i32
    return %c0_i32, %c0_i32_0 : i32, i32
  }
  func.func @transform_2(%arg0: i32) -> (i32, i32) {
    %c0_i32 = arith.constant 0 : i32
    %c0_i32_0 = arith.constant 0 : i32
    %c0_i32_1 = arith.constant 0 : i32
    return %c0_i32, %c0_i32_0 : i32, i32
  }
  func.func @transform_3(%arg0: i32) -> (i32, i32) {
    %c0_i32 = arith.constant 0 : i32
    %c0_i32_0 = arith.constant 0 : i32
    %c0_i32_1 = arith.constant 0 : i32
    return %c0_i32, %c0_i32_0 : i32, i32
  }
  func.func @transform_4(%arg0: i32) -> (i32, i32) {
    %c0_i32 = arith.constant 0 : i32
    %c0_i32_0 = arith.constant 0 : i32
    %c0_i32_1 = arith.constant 0 : i32
    return %c0_i32, %c0_i32_0 : i32, i32
  }
  func.func @transform_5(%arg0: i32) -> (i32, i32) {
    %c0_i32 = arith.constant 0 : i32
    %c0_i32_0 = arith.constant 0 : i32
    %c0_i32_1 = arith.constant 0 : i32
    return %c0_i32, %c0_i32_0 : i32, i32
  }
  func.func @transform_6(%arg0: i32) -> (i32, i32) {
    %c0_i32 = arith.constant 0 : i32
    %c0_i32_0 = arith.constant 0 : i32
    %c0_i32_1 = arith.constant 0 : i32
    return %c0_i32, %c0_i32_0 : i32, i32
  }
  func.func @transform_7(%arg0: i32) -> (i32, i32) {
    %c0_i32 = arith.constant 0 : i32
    %c0_i32_0 = arith.constant 0 : i32
    %c0_i32_1 = arith.constant 0 : i32
    return %c0_i32, %c0_i32_0 : i32, i32
  }
  func.func @transform_8(%arg0: i32) -> (i32, i32) {
    %c0_i32 = arith.constant 0 : i32
    %c0_i32_0 = arith.constant 0 : i32
    %c0_i32_1 = arith.constant 0 : i32
    return %c0_i32, %c0_i32_0 : i32, i32
  }
  func.func @transform_9(%arg0: i32) -> (i32, i32) {
    %c0_i32 = arith.constant 0 : i32
    %c0_i32_0 = arith.constant 0 : i32
    %c0_i32_1 = arith.constant 0 : i32
    return %c0_i32, %c0_i32_0 : i32, i32
  }
  func.func @transform_10(%arg0: i32) -> (i32, i32) {
    %c0_i32 = arith.constant 0 : i32
    %c0_i32_0 = arith.constant 0 : i32
    %c0_i32_1 = arith.constant 0 : i32
    return %c0_i32, %c0_i32_0 : i32, i32
  }
  func.func @transform_11(%arg0: i32) -> (i32, i32) {
    %c0_i32 = arith.constant 0 : i32
    %c0_i32_0 = arith.constant 0 : i32
    %c0_i32_1 = arith.constant 0 : i32
    return %c0_i32, %c0_i32_0 : i32, i32
  }
  func.func @transform_12(%arg0: i32) -> (i32, i32) {
    %c0_i32 = arith.constant 0 : i32
    %c0_i32_0 = arith.constant 0 : i32
    %c0_i32_1 = arith.constant 0 : i32
    return %c0_i32, %c0_i32_0 : i32, i32
  }
  func.func @transform_13(%arg0: i32) -> (i32, i32) {
    %c0_i32 = arith.constant 0 : i32
    %c0_i32_0 = arith.constant 0 : i32
    %c0_i32_1 = arith.constant 0 : i32
    return %c0_i32, %c0_i32_0 : i32, i32
  }
  func.func @transform_14(%arg0: i32) -> (i32, i32) {
    %c0_i32 = arith.constant 0 : i32
    %c0_i32_0 = arith.constant 0 : i32
    %c0_i32_1 = arith.constant 0 : i32
    return %c0_i32, %c0_i32_0 : i32, i32
  }
  func.func @transform_15(%arg0: i32) -> (i32, i32) {
    %c0_i32 = arith.constant 0 : i32
    %c0_i32_0 = arith.constant 0 : i32
    %c0_i32_1 = arith.constant 0 : i32
    return %c0_i32, %c0_i32_0 : i32, i32
  }
  func.func @transform_16(%arg0: i32) -> (i32, i32) {
    %c0_i32 = arith.constant 0 : i32
    %c0_i32_0 = arith.constant 0 : i32
    %c0_i32_1 = arith.constant 0 : i32
    return %c0_i32, %c0_i32_0 : i32, i32
  }
  func.func @transform_17(%arg0: i32) -> (i32, i32) {
    %c0_i32 = arith.constant 0 : i32
    %c0_i32_0 = arith.constant 0 : i32
    %c0_i32_1 = arith.constant 0 : i32
    return %c0_i32, %c0_i32_0 : i32, i32
  }
  func.func @transform_18(%arg0: i32) -> (i32, i32) {
    %c0_i32 = arith.constant 0 : i32
    %c0_i32_0 = arith.constant 0 : i32
    %c0_i32_1 = arith.constant 0 : i32
    return %c0_i32, %c0_i32_0 : i32, i32
  }
  func.func @transform_19(%arg0: i32) -> (i32, i32) {
    %c0_i32 = arith.constant 0 : i32
    %c0_i32_0 = arith.constant 0 : i32
    %c0_i32_1 = arith.constant 0 : i32
    return %c0_i32, %c0_i32_0 : i32, i32
  }
  func.func @transform_20(%arg0: i32) -> (i32, i32) {
    %c0_i32 = arith.constant 0 : i32
    %c0_i32_0 = arith.constant 0 : i32
    %c0_i32_1 = arith.constant 0 : i32
    return %c0_i32, %c0_i32_0 : i32, i32
  }
  func.func @transform_21(%arg0: i32) -> (i32, i32) {
    %c0_i32 = arith.constant 0 : i32
    %c0_i32_0 = arith.constant 0 : i32
    return %arg0, %c0_i32 : i32, i32
  }
  func.func @transform_22(%arg0: i32) -> (i32, i32) {
    %c0_i32 = arith.constant 0 : i32
    %c0_i32_0 = arith.constant 0 : i32
    return %arg0, %c0_i32 : i32, i32
  }
}

</mosaic_0001>

<llo_original>
// kernel: autoencoder_forward.1
$region0: #{autoencoder_forward.1}
  #allocation0 [shape = 'u32[]', space=smem, size = 0x4, offset = 0x4, fixed_abs, tag = 'smem constant byte address 0x4 - core index']
  #allocation1 [shape = 'u32[144,128]{1,0:T(1,128)}', space=vmem, size = 0x12000, scoped, tag = 'internal scratch']
  %s0 = inlined_call_operand.vmem [shape: f32[2,512], index: 0, kind: input, shape index: {}]
  %s1 = inlined_call_operand.vmem [shape: bf16[512,512], index: 1, kind: input, shape index: {}]
  %s2 = inlined_call_operand.vmem [shape: f32[1,512], index: 2, kind: input, shape index: {}]
  %s3 = inlined_call_operand.vmem [shape: bf16[512,384], index: 3, kind: input, shape index: {}]
  %s4 = inlined_call_operand.vmem [shape: f32[1,384], index: 4, kind: input, shape index: {}]
  %s5 = inlined_call_operand.vmem [shape: bf16[384,256], index: 5, kind: input, shape index: {}]
  %s6 = inlined_call_operand.vmem [shape: f32[1,256], index: 6, kind: input, shape index: {}]
  %s7 = inlined_call_operand.vmem [shape: bf16[256,128], index: 7, kind: input, shape index: {}]
  %s8 = inlined_call_operand.vmem [shape: f32[1,128], index: 8, kind: input, shape index: {}]
  %s9 = inlined_call_operand.vmem [shape: bf16[128,128], index: 9, kind: input, shape index: {}]
  %s10 = inlined_call_operand.vmem [shape: f32[1,128], index: 10, kind: input, shape index: {}]
  %s11 = inlined_call_operand.vmem [shape: bf16[128,128], index: 11, kind: input, shape index: {}]
  %s12 = inlined_call_operand.vmem [shape: f32[1,128], index: 12, kind: input, shape index: {}]
  %s13 = inlined_call_operand.vmem [shape: bf16[128,256], index: 13, kind: input, shape index: {}]
  %s14 = inlined_call_operand.vmem [shape: f32[1,256], index: 14, kind: input, shape index: {}]
  %s15 = inlined_call_operand.vmem [shape: bf16[256,384], index: 15, kind: input, shape index: {}]
  %s16 = inlined_call_operand.vmem [shape: f32[1,384], index: 16, kind: input, shape index: {}]
  %s17 = inlined_call_operand.vmem [shape: bf16[384,512], index: 17, kind: input, shape index: {}]
  %s18 = inlined_call_operand.vmem [shape: f32[1,512], index: 18, kind: input, shape index: {}]
  %s19 = inlined_call_operand.vmem [shape: bf16[512,512], index: 19, kind: input, shape index: {}]
  %s20 = inlined_call_operand.vmem [shape: f32[1,512], index: 20, kind: input, shape index: {}]
  %s21 = inlined_call_operand.hbm [shape: f32[2,128], index: 21, kind: output, shape index: {0}]
  %s22 = inlined_call_operand.hbm [shape: f32[2,512], index: 22, kind: output, shape index: {1}]
  %23 = xla_tuple %s21, %s22
  %s24 = sld [smem:[#allocation0]]
  $region102: #{autoencoder_forward.1} parent=0
    _
  %s26 = ssub.s32 1, %s24
  %s27 = scalar_select 0, %s26, %s24
  $region1: #{autoencoder_forward.1} parent=0
    #allocation2 [shape = 'u8[1024]{0}', space=vmem, size = 0x400, scoped, tag = 'output window, operand 0, single buffered']
    #allocation3 [shape = 's32[1]{0}', space=sflag, size = 0x4, scoped, tag = 'scoped memory for autoencoder_forward.1']
    #allocation4 [shape = 'u8[4096]{0}', space=vmem, size = 0x1000, scoped, tag = 'output window, operand 1, single buffered']
    #allocation5 [shape = 's32[1]{0}', space=sflag, size = 0x4, scoped, tag = 'scoped memory for autoencoder_forward.1']
    %28 = vsyncpa [#allocation3], 0
    %29 = vsyncpa [#allocation5], 0
    // Predicated region
    $region2: #{autoencoder_forward.1} parent=1 // pred_check
      _
    $region3: #{autoencoder_forward.1} parent=1 // pred_check_branch
      %31 = sbr.rel (0) target = $region5
    $region4: #{autoencoder_forward.1} parent=1 // pred_region
      _
    $region5: #{autoencoder_forward.1} parent=1 // pred_fallthru
      _
    // Predicated region
    $region6: #{autoencoder_forward.1} parent=1 // pred_check
      _
    $region7: #{autoencoder_forward.1} parent=1 // pred_check_branch
      %33 = sbr.rel (0) target = $region9
    $region8: #{autoencoder_forward.1} parent=1 // pred_region
      _
    $region9: #{autoencoder_forward.1} parent=1 // pred_fallthru
      _
    // Predicated region
    $region10: #{autoencoder_forward.1} parent=1 // pred_check
      _
    $region11: #{autoencoder_forward.1} parent=1 // pred_check_branch
      %35 = sbr.rel (0) target = $region13
    $region12: #{autoencoder_forward.1} parent=1 // pred_region
      _
    $region13: #{autoencoder_forward.1} parent=1 // pred_fallthru
      _
    // Predicated region
    $region14: #{autoencoder_forward.1} parent=1 // pred_check
      _
    $region15: #{autoencoder_forward.1} parent=1 // pred_check_branch
      %37 = sbr.rel (0) target = $region17
    $region16: #{autoencoder_forward.1} parent=1 // pred_region
      _
    $region17: #{autoencoder_forward.1} parent=1 // pred_fallthru
      _
    // Predicated region
    $region18: #{autoencoder_forward.1} parent=1 // pred_check
      _
    $region19: #{autoencoder_forward.1} parent=1 // pred_check_branch
      %39 = sbr.rel (0) target = $region21
    $region20: #{autoencoder_forward.1} parent=1 // pred_region
      _
    $region21: #{autoencoder_forward.1} parent=1 // pred_fallthru
      _
    // Predicated region
    $region22: #{autoencoder_forward.1} parent=1 // pred_check
      _
    $region23: #{autoencoder_forward.1} parent=1 // pred_check_branch
      %41 = sbr.rel (0) target = $region25
    $region24: #{autoencoder_forward.1} parent=1 // pred_region
      _
    $region25: #{autoencoder_forward.1} parent=1 // pred_fallthru
      _
    // Predicated region
    $region26: #{autoencoder_forward.1} parent=1 // pred_check
      _
    $region27: #{autoencoder_forward.1} parent=1 // pred_check_branch
      %43 = sbr.rel (0) target = $region29
    $region28: #{autoencoder_forward.1} parent=1 // pred_region
      _
    $region29: #{autoencoder_forward.1} parent=1 // pred_fallthru
      _
    // Predicated region
    $region30: #{autoencoder_forward.1} parent=1 // pred_check
      _
    $region31: #{autoencoder_forward.1} parent=1 // pred_check_branch
      %45 = sbr.rel (0) target = $region33
    $region32: #{autoencoder_forward.1} parent=1 // pred_region
      _
    $region33: #{autoencoder_forward.1} parent=1 // pred_fallthru
      _
    // Predicated region
    $region34: #{autoencoder_forward.1} parent=1 // pred_check
      _
    $region35: #{autoencoder_forward.1} parent=1 // pred_check_branch
      %47 = sbr.rel (0) target = $region37
    $region36: #{autoencoder_forward.1} parent=1 // pred_region
      _
    $region37: #{autoencoder_forward.1} parent=1 // pred_fallthru
      _
    // Predicated region
    $region38: #{autoencoder_forward.1} parent=1 // pred_check
      _
    $region39: #{autoencoder_forward.1} parent=1 // pred_check_branch
      %49 = sbr.rel (0) target = $region41
    $region40: #{autoencoder_forward.1} parent=1 // pred_region
      _
    $region41: #{autoencoder_forward.1} parent=1 // pred_fallthru
      _
    // Predicated region
    $region42: #{autoencoder_forward.1} parent=1 // pred_check
      _
    $region43: #{autoencoder_forward.1} parent=1 // pred_check_branch
      %51 = sbr.rel (0) target = $region45
    $region44: #{autoencoder_forward.1} parent=1 // pred_region
      _
    $region45: #{autoencoder_forward.1} parent=1 // pred_fallthru
      _
    // Predicated region
    $region46: #{autoencoder_forward.1} parent=1 // pred_check
      _
    $region47: #{autoencoder_forward.1} parent=1 // pred_check_branch
      %53 = sbr.rel (0) target = $region49
    $region48: #{autoencoder_forward.1} parent=1 // pred_region
      _
    $region49: #{autoencoder_forward.1} parent=1 // pred_fallthru
      _
    // Predicated region
    $region50: #{autoencoder_forward.1} parent=1 // pred_check
      _
    $region51: #{autoencoder_forward.1} parent=1 // pred_check_branch
      %55 = sbr.rel (0) target = $region53
    $region52: #{autoencoder_forward.1} parent=1 // pred_region
      _
    $region53: #{autoencoder_forward.1} parent=1 // pred_fallthru
      _
    // Predicated region
    $region54: #{autoencoder_forward.1} parent=1 // pred_check
      _
    $region55: #{autoencoder_forward.1} parent=1 // pred_check_branch
      %57 = sbr.rel (0) target = $region57
    $region56: #{autoencoder_forward.1} parent=1 // pred_region
      _
    $region57: #{autoencoder_forward.1} parent=1 // pred_fallthru
      _
    // Predicated region
    $region58: #{autoencoder_forward.1} parent=1 // pred_check
      _
    $region59: #{autoencoder_forward.1} parent=1 // pred_check_branch
      %59 = sbr.rel (0) target = $region61
    $region60: #{autoencoder_forward.1} parent=1 // pred_region
      _
    $region61: #{autoencoder_forward.1} parent=1 // pred_fallthru
      _
    // Predicated region
    $region62: #{autoencoder_forward.1} parent=1 // pred_check
      _
    $region63: #{autoencoder_forward.1} parent=1 // pred_check_branch
      %61 = sbr.rel (0) target = $region65
    $region64: #{autoencoder_forward.1} parent=1 // pred_region
      _
    $region65: #{autoencoder_forward.1} parent=1 // pred_fallthru
      _
    // Predicated region
    $region66: #{autoencoder_forward.1} parent=1 // pred_check
      _
    $region67: #{autoencoder_forward.1} parent=1 // pred_check_branch
      %63 = sbr.rel (0) target = $region69
    $region68: #{autoencoder_forward.1} parent=1 // pred_region
      _
    $region69: #{autoencoder_forward.1} parent=1 // pred_fallthru
      _
    // Predicated region
    $region70: #{autoencoder_forward.1} parent=1 // pred_check
      _
    $region71: #{autoencoder_forward.1} parent=1 // pred_check_branch
      %65 = sbr.rel (0) target = $region73
    $region72: #{autoencoder_forward.1} parent=1 // pred_region
      _
    $region73: #{autoencoder_forward.1} parent=1 // pred_fallthru
      _
    // Predicated region
    $region74: #{autoencoder_forward.1} parent=1 // pred_check
      _
    $region75: #{autoencoder_forward.1} parent=1 // pred_check_branch
      %67 = sbr.rel (0) target = $region77
    $region76: #{autoencoder_forward.1} parent=1 // pred_region
      _
    $region77: #{autoencoder_forward.1} parent=1 // pred_fallthru
      _
    // Predicated region
    $region78: #{autoencoder_forward.1} parent=1 // pred_check
      _
    $region79: #{autoencoder_forward.1} parent=1 // pred_check_branch
      %69 = sbr.rel (0) target = $region81
    $region80: #{autoencoder_forward.1} parent=1 // pred_region
      _
    $region81: #{autoencoder_forward.1} parent=1 // pred_fallthru
      _
    // Predicated region
    $region82: #{autoencoder_forward.1} parent=1 // pred_check
      _
    $region83: #{autoencoder_forward.1} parent=1 // pred_check_branch
      %71 = sbr.rel (0) target = $region85
    $region84: #{autoencoder_forward.1} parent=1 // pred_region
      _
    $region85: #{autoencoder_forward.1} parent=1 // pred_fallthru
      _
    %v73 = vld [vmem:[%s0] sm:$0xff]
    %v74 = vld [vmem:[%s1] sm:$0xff]
    %v75 = vld [vmem:[%s1 + $0x8] sm:$0xff]
    %v76 = vld [vmem:[%s1 + $0x10] sm:$0xff]
    %v77 = vld [vmem:[%s1 + $0x18] sm:$0xff]
    %v78 = vld [vmem:[%s1 + $0x20] sm:$0xff]
    %v79 = vld [vmem:[%s1 + $0x28] sm:$0xff]
    %v80 = vld [vmem:[%s1 + $0x30] sm:$0xff]
    %v81 = vld [vmem:[%s1 + $0x38] sm:$0xff]
    %v82 = vld [vmem:[%s1 + $0x40] sm:$0xff]
    %v83 = vld [vmem:[%s1 + $0x48] sm:$0xff]
    %v84 = vld [vmem:[%s1 + $0x50] sm:$0xff]
    %v85 = vld [vmem:[%s1 + $0x58] sm:$0xff]
    %v86 = vld [vmem:[%s1 + $0x60] sm:$0xff]
    %v87 = vld [vmem:[%s1 + $0x68] sm:$0xff]
    %v88 = vld [vmem:[%s1 + $0x70] sm:$0xff]
    %v89 = vld [vmem:[%s1 + $0x78] sm:$0xff]
    %v90 = vld [vmem:[%s1 + $0x80] sm:$0xff]
    %v91 = vld [vmem:[%s1 + $0x88] sm:$0xff]
    %v92 = vld [vmem:[%s1 + $0x90] sm:$0xff]
    %v93 = vld [vmem:[%s1 + $0x98] sm:$0xff]
    %v94 = vld [vmem:[%s1 + $0xa0] sm:$0xff]
    %v95 = vld [vmem:[%s1 + $0xa8] sm:$0xff]
    %v96 = vld [vmem:[%s1 + $0xb0] sm:$0xff]
    %v97 = vld [vmem:[%s1 + $0xb8] sm:$0xff]
    %v98 = vld [vmem:[%s1 + $0xc0] sm:$0xff]
    %v99 = vld [vmem:[%s1 + $0xc8] sm:$0xff]
    %v100 = vld [vmem:[%s1 + $0xd0] sm:$0xff]
    %v101 = vld [vmem:[%s1 + $0xd8] sm:$0xff]
    %v102 = vld [vmem:[%s1 + $0xe0] sm:$0xff]
    %v103 = vld [vmem:[%s1 + $0xe8] sm:$0xff]
    %v104 = vld [vmem:[%s1 + $0xf0] sm:$0xff]
    %v105 = vld [vmem:[%s1 + $0xf8] sm:$0xff]
    %v106 = vld [vmem:[%s1 + $0x100] sm:$0xff]
    %v107 = vld [vmem:[%s1 + $0x108] sm:$0xff]
    %v108 = vld [vmem:[%s1 + $0x110] sm:$0xff]
    %v109 = vld [vmem:[%s1 + $0x118] sm:$0xff]
    %v110 = vld [vmem:[%s1 + $0x120] sm:$0xff]
    %v111 = vld [vmem:[%s1 + $0x128] sm:$0xff]
    %v112 = vld [vmem:[%s1 + $0x130] sm:$0xff]
    %v113 = vld [vmem:[%s1 + $0x138] sm:$0xff]
    %v114 = vld [vmem:[%s1 + $0x140] sm:$0xff]
    %v115 = vld [vmem:[%s1 + $0x148] sm:$0xff]
    %v116 = vld [vmem:[%s1 + $0x150] sm:$0xff]
    %v117 = vld [vmem:[%s1 + $0x158] sm:$0xff]
    %v118 = vld [vmem:[%s1 + $0x160] sm:$0xff]
    %v119 = vld [vmem:[%s1 + $0x168] sm:$0xff]
    %v120 = vld [vmem:[%s1 + $0x170] sm:$0xff]
    %v121 = vld [vmem:[%s1 + $0x178] sm:$0xff]
    %v122 = vld [vmem:[%s1 + $0x180] sm:$0xff]
    %v123 = vld [vmem:[%s1 + $0x188] sm:$0xff]
    %v124 = vld [vmem:[%s1 + $0x190] sm:$0xff]
    %v125 = vld [vmem:[%s1 + $0x198] sm:$0xff]
    %v126 = vld [vmem:[%s1 + $0x1a0] sm:$0xff]
    %v127 = vld [vmem:[%s1 + $0x1a8] sm:$0xff]
    %v128 = vld [vmem:[%s1 + $0x1b0] sm:$0xff]
    %v129 = vld [vmem:[%s1 + $0x1b8] sm:$0xff]
    %v130 = vld [vmem:[%s1 + $0x1c0] sm:$0xff]
    %v131 = vld [vmem:[%s1 + $0x1c8] sm:$0xff]
    %v132 = vld [vmem:[%s1 + $0x1d0] sm:$0xff]
    %v133 = vld [vmem:[%s1 + $0x1d8] sm:$0xff]
    %v134 = vld [vmem:[%s1 + $0x1e0] sm:$0xff]
    %v135 = vld [vmem:[%s1 + $0x1e8] sm:$0xff]
    %v136 = vld [vmem:[%s1 + $0x1f0] sm:$0xff]
    %v137 = vld [vmem:[%s1 + $0x1f8] sm:$0xff]
    %v138 = vld [vmem:[%s1 + $0x200] sm:$0xff]
    %v139 = vld [vmem:[%s1 + $0x208] sm:$0xff]
    %v140 = vld [vmem:[%s1 + $0x210] sm:$0xff]
    %v141 = vld [vmem:[%s1 + $0x218] sm:$0xff]
    %v142 = vld [vmem:[%s1 + $0x220] sm:$0xff]
    %v143 = vld [vmem:[%s1 + $0x228] sm:$0xff]
    %v144 = vld [vmem:[%s1 + $0x230] sm:$0xff]
    %v145 = vld [vmem:[%s1 + $0x238] sm:$0xff]
    %v146 = vld [vmem:[%s1 + $0x240] sm:$0xff]
    %v147 = vld [vmem:[%s1 + $0x248] sm:$0xff]
    %v148 = vld [vmem:[%s1 + $0x250] sm:$0xff]
    %v149 = vld [vmem:[%s1 + $0x258] sm:$0xff]
    %v150 = vld [vmem:[%s1 + $0x260] sm:$0xff]
    %v151 = vld [vmem:[%s1 + $0x268] sm:$0xff]
    %v152 = vld [vmem:[%s1 + $0x270] sm:$0xff]
    %v153 = vld [vmem:[%s1 + $0x278] sm:$0xff]
    %v154 = vld [vmem:[%s1 + $0x280] sm:$0xff]
    %v155 = vld [vmem:[%s1 + $0x288] sm:$0xff]
    %v156 = vld [vmem:[%s1 + $0x290] sm:$0xff]
    %v157 = vld [vmem:[%s1 + $0x298] sm:$0xff]
    %v158 = vld [vmem:[%s1 + $0x2a0] sm:$0xff]
    %v159 = vld [vmem:[%s1 + $0x2a8] sm:$0xff]
    %v160 = vld [vmem:[%s1 + $0x2b0] sm:$0xff]
    %v161 = vld [vmem:[%s1 + $0x2b8] sm:$0xff]
    %v162 = vld [vmem:[%s1 + $0x2c0] sm:$0xff]
    %v163 = vld [vmem:[%s1 + $0x2c8] sm:$0xff]
    %v164 = vld [vmem:[%s1 + $0x2d0] sm:$0xff]
    %v165 = vld [vmem:[%s1 + $0x2d8] sm:$0xff]
    %v166 = vld [vmem:[%s1 + $0x2e0] sm:$0xff]
    %v167 = vld [vmem:[%s1 + $0x2e8] sm:$0xff]
    %v168 = vld [vmem:[%s1 + $0x2f0] sm:$0xff]
    %v169 = vld [vmem:[%s1 + $0x2f8] sm:$0xff]
    %v170 = vld [vmem:[%s1 + $0x300] sm:$0xff]
    %v171 = vld [vmem:[%s1 + $0x308] sm:$0xff]
    %v172 = vld [vmem:[%s1 + $0x310] sm:$0xff]
    %v173 = vld [vmem:[%s1 + $0x318] sm:$0xff]
    %v174 = vld [vmem:[%s1 + $0x320] sm:$0xff]
    %v175 = vld [vmem:[%s1 + $0x328] sm:$0xff]
    %v176 = vld [vmem:[%s1 + $0x330] sm:$0xff]
    %v177 = vld [vmem:[%s1 + $0x338] sm:$0xff]
    %v178 = vld [vmem:[%s1 + $0x340] sm:$0xff]
    %v179 = vld [vmem:[%s1 + $0x348] sm:$0xff]
    %v180 = vld [vmem:[%s1 + $0x350] sm:$0xff]
    %v181 = vld [vmem:[%s1 + $0x358] sm:$0xff]
    %v182 = vld [vmem:[%s1 + $0x360] sm:$0xff]
    %v183 = vld [vmem:[%s1 + $0x368] sm:$0xff]
    %v184 = vld [vmem:[%s1 + $0x370] sm:$0xff]
    %v185 = vld [vmem:[%s1 + $0x378] sm:$0xff]
    %v186 = vld [vmem:[%s1 + $0x380] sm:$0xff]
    %v187 = vld [vmem:[%s1 + $0x388] sm:$0xff]
    %v188 = vld [vmem:[%s1 + $0x390] sm:$0xff]
    %v189 = vld [vmem:[%s1 + $0x398] sm:$0xff]
    %v190 = vld [vmem:[%s1 + $0x3a0] sm:$0xff]
    %v191 = vld [vmem:[%s1 + $0x3a8] sm:$0xff]
    %v192 = vld [vmem:[%s1 + $0x3b0] sm:$0xff]
    %v193 = vld [vmem:[%s1 + $0x3b8] sm:$0xff]
    %v194 = vld [vmem:[%s1 + $0x3c0] sm:$0xff]
    %v195 = vld [vmem:[%s1 + $0x3c8] sm:$0xff]
    %v196 = vld [vmem:[%s1 + $0x3d0] sm:$0xff]
    %v197 = vld [vmem:[%s1 + $0x3d8] sm:$0xff]
    %v198 = vld [vmem:[%s1 + $0x3e0] sm:$0xff]
    %v199 = vld [vmem:[%s1 + $0x3e8] sm:$0xff]
    %v200 = vld [vmem:[%s1 + $0x3f0] sm:$0xff]
    %v201 = vld [vmem:[%s1 + $0x3f8] sm:$0xff]
    %v202 = vld [vmem:[%s2] sm:$0xf]
    %v204 = vcombine.high %v73, %v73
    %v206 = vunpack.c.l.s4 1983009808
    %v207 = vunpack.c.0.s8 %v206
    %v208 = vlaneseq
    %v209 = vshrl.u32 %v208, 7
    %v210 = vsub.s32 %v207, %v209
    %v211 = vrot.slane %v73, %v210
    %v213 = vunpack.c.l.s4 1983009808
    %v214 = vunpack.c.0.s8 %v213
    %v215 = vlaneseq
    %v216 = vshrl.u32 %v215, 7
    %v217 = vsub.s32 %v214, %v216
    %v218 = vrot.slane %v204, %v217
    %v219 = vcombine.high %v211, %v211
    %v220 = vcombine.high %v218, %v218
    %v225 = vpack.c.bf16 %v211, %v211
    %v226 = vpack.c.bf16 %v219, %v219
    %v227 = vpack.c.bf16 %v218, %v218
    %v228 = vpack.c.bf16 %v220, %v220
    %v230 = vlaneseq
    %v231 = vshrl.u32 %v230, 7
    %v232 = vsub.s32 0, %v231
    %v233 = vrot.slane %v202, %v232
    %v234 = vlaneseq
    %v235 = vshrl.u32 %v234, 7
    %v236 = vsub.s32 1, %v235
    %v237 = vrot.slane %v202, %v236
    %v238 = vlaneseq
    %v239 = vshrl.u32 %v238, 7
    %v240 = vsub.s32 2, %v239
    %v241 = vrot.slane %v202, %v240
    %v242 = vlaneseq
    %v243 = vshrl.u32 %v242, 7
    %v244 = vsub.s32 3, %v243
    %v245 = vrot.slane %v202, %v244
    %v378 = vunpack.c.l.b16 %v74
    %v379 = vunpack.c.h.b16 %v74
    %v380 = vunpack.c.l.b16 %v75
    %v381 = vunpack.c.h.b16 %v75
    %v382 = vunpack.c.l.b16 %v76
    %v383 = vunpack.c.h.b16 %v76
    %v384 = vunpack.c.l.b16 %v77
    %v385 = vunpack.c.h.b16 %v77
    %v386 = vunpack.c.l.b16 %v78
    %v387 = vunpack.c.h.b16 %v78
    %v388 = vunpack.c.l.b16 %v79
    %v389 = vunpack.c.h.b16 %v79
    %v390 = vunpack.c.l.b16 %v80
    %v391 = vunpack.c.h.b16 %v80
    %v392 = vunpack.c.l.b16 %v81
    %v393 = vunpack.c.h.b16 %v81
    %v394 = vunpack.c.l.b16 %v82
    %v395 = vunpack.c.h.b16 %v82
    %v396 = vunpack.c.l.b16 %v83
    %v397 = vunpack.c.h.b16 %v83
    %v398 = vunpack.c.l.b16 %v84
    %v399 = vunpack.c.h.b16 %v84
    %v400 = vunpack.c.l.b16 %v85
    %v401 = vunpack.c.h.b16 %v85
    %v402 = vunpack.c.l.b16 %v86
    %v403 = vunpack.c.h.b16 %v86
    %v404 = vunpack.c.l.b16 %v87
    %v405 = vunpack.c.h.b16 %v87
    %v406 = vunpack.c.l.b16 %v88
    %v407 = vunpack.c.h.b16 %v88
    %v408 = vunpack.c.l.b16 %v89
    %v409 = vunpack.c.h.b16 %v89
    %v410 = vunpack.c.l.b16 %v90
    %v411 = vunpack.c.h.b16 %v90
    %v412 = vunpack.c.l.b16 %v91
    %v413 = vunpack.c.h.b16 %v91
    %v414 = vunpack.c.l.b16 %v92
    %v415 = vunpack.c.h.b16 %v92
    %v416 = vunpack.c.l.b16 %v93
    %v417 = vunpack.c.h.b16 %v93
    %v418 = vunpack.c.l.b16 %v94
    %v419 = vunpack.c.h.b16 %v94
    %v420 = vunpack.c.l.b16 %v95
    %v421 = vunpack.c.h.b16 %v95
    %v422 = vunpack.c.l.b16 %v96
    %v423 = vunpack.c.h.b16 %v96
    %v424 = vunpack.c.l.b16 %v97
    %v425 = vunpack.c.h.b16 %v97
    %v426 = vunpack.c.l.b16 %v98
    %v427 = vunpack.c.h.b16 %v98
    %v428 = vunpack.c.l.b16 %v99
    %v429 = vunpack.c.h.b16 %v99
    %v430 = vunpack.c.l.b16 %v100
    %v431 = vunpack.c.h.b16 %v100
    %v432 = vunpack.c.l.b16 %v101
    %v433 = vunpack.c.h.b16 %v101
    %v434 = vunpack.c.l.b16 %v102
    %v435 = vunpack.c.h.b16 %v102
    %v436 = vunpack.c.l.b16 %v103
    %v437 = vunpack.c.h.b16 %v103
    %v438 = vunpack.c.l.b16 %v104
    %v439 = vunpack.c.h.b16 %v104
    %v440 = vunpack.c.l.b16 %v105
    %v441 = vunpack.c.h.b16 %v105
    %v442 = vunpack.c.l.b16 %v106
    %v443 = vunpack.c.h.b16 %v106
    %v444 = vunpack.c.l.b16 %v107
    %v445 = vunpack.c.h.b16 %v107
    %v446 = vunpack.c.l.b16 %v108
    %v447 = vunpack.c.h.b16 %v108
    %v448 = vunpack.c.l.b16 %v109
    %v449 = vunpack.c.h.b16 %v109
    %v450 = vunpack.c.l.b16 %v110
    %v451 = vunpack.c.h.b16 %v110
    %v452 = vunpack.c.l.b16 %v111
    %v453 = vunpack.c.h.b16 %v111
    %v454 = vunpack.c.l.b16 %v112
    %v455 = vunpack.c.h.b16 %v112
    %v456 = vunpack.c.l.b16 %v113
    %v457 = vunpack.c.h.b16 %v113
    %v458 = vunpack.c.l.b16 %v114
    %v459 = vunpack.c.h.b16 %v114
    %v460 = vunpack.c.l.b16 %v115
    %v461 = vunpack.c.h.b16 %v115
    %v462 = vunpack.c.l.b16 %v116
    %v463 = vunpack.c.h.b16 %v116
    %v464 = vunpack.c.l.b16 %v117
    %v465 = vunpack.c.h.b16 %v117
    %v466 = vunpack.c.l.b16 %v118
    %v467 = vunpack.c.h.b16 %v118
    %v468 = vunpack.c.l.b16 %v119
    %v469 = vunpack.c.h.b16 %v119
    %v470 = vunpack.c.l.b16 %v120
    %v471 = vunpack.c.h.b16 %v120
    %v472 = vunpack.c.l.b16 %v121
    %v473 = vunpack.c.h.b16 %v121
    %v474 = vunpack.c.l.b16 %v122
    %v475 = vunpack.c.h.b16 %v122
    %v476 = vunpack.c.l.b16 %v123
    %v477 = vunpack.c.h.b16 %v123
    %v478 = vunpack.c.l.b16 %v124
    %v479 = vunpack.c.h.b16 %v124
    %v480 = vunpack.c.l.b16 %v125
    %v481 = vunpack.c.h.b16 %v125
    %v482 = vunpack.c.l.b16 %v126
    %v483 = vunpack.c.h.b16 %v126
    %v484 = vunpack.c.l.b16 %v127
    %v485 = vunpack.c.h.b16 %v127
    %v486 = vunpack.c.l.b16 %v128
    %v487 = vunpack.c.h.b16 %v128
    %v488 = vunpack.c.l.b16 %v129
    %v489 = vunpack.c.h.b16 %v129
    %v490 = vunpack.c.l.b16 %v130
    %v491 = vunpack.c.h.b16 %v130
    %v492 = vunpack.c.l.b16 %v131
    %v493 = vunpack.c.h.b16 %v131
    %v494 = vunpack.c.l.b16 %v132
    %v495 = vunpack.c.h.b16 %v132
    %v496 = vunpack.c.l.b16 %v133
    %v497 = vunpack.c.h.b16 %v133
    %v498 = vunpack.c.l.b16 %v134
    %v499 = vunpack.c.h.b16 %v134
    %v500 = vunpack.c.l.b16 %v135
    %v501 = vunpack.c.h.b16 %v135
    %v502 = vunpack.c.l.b16 %v136
    %v503 = vunpack.c.h.b16 %v136
    %v504 = vunpack.c.l.b16 %v137
    %v505 = vunpack.c.h.b16 %v137
    %v506 = vunpack.c.l.b16 %v138
    %v507 = vunpack.c.h.b16 %v138
    %v508 = vunpack.c.l.b16 %v139
    %v509 = vunpack.c.h.b16 %v139
    %v510 = vunpack.c.l.b16 %v140
    %v511 = vunpack.c.h.b16 %v140
    %v512 = vunpack.c.l.b16 %v141
    %v513 = vunpack.c.h.b16 %v141
    %v514 = vunpack.c.l.b16 %v142
    %v515 = vunpack.c.h.b16 %v142
    %v516 = vunpack.c.l.b16 %v143
    %v517 = vunpack.c.h.b16 %v143
    %v518 = vunpack.c.l.b16 %v144
    %v519 = vunpack.c.h.b16 %v144
    %v520 = vunpack.c.l.b16 %v145
    %v521 = vunpack.c.h.b16 %v145
    %v522 = vunpack.c.l.b16 %v146
    %v523 = vunpack.c.h.b16 %v146
    %v524 = vunpack.c.l.b16 %v147
    %v525 = vunpack.c.h.b16 %v147
    %v526 = vunpack.c.l.b16 %v148
    %v527 = vunpack.c.h.b16 %v148
    %v528 = vunpack.c.l.b16 %v149
    %v529 = vunpack.c.h.b16 %v149
    %v530 = vunpack.c.l.b16 %v150
    %v531 = vunpack.c.h.b16 %v150
    %v532 = vunpack.c.l.b16 %v151
    %v533 = vunpack.c.h.b16 %v151
    %v534 = vunpack.c.l.b16 %v152
    %v535 = vunpack.c.h.b16 %v152
    %v536 = vunpack.c.l.b16 %v153
    %v537 = vunpack.c.h.b16 %v153
    %v538 = vunpack.c.l.b16 %v154
    %v539 = vunpack.c.h.b16 %v154
    %v540 = vunpack.c.l.b16 %v155
    %v541 = vunpack.c.h.b16 %v155
    %v542 = vunpack.c.l.b16 %v156
    %v543 = vunpack.c.h.b16 %v156
    %v544 = vunpack.c.l.b16 %v157
    %v545 = vunpack.c.h.b16 %v157
    %v546 = vunpack.c.l.b16 %v158
    %v547 = vunpack.c.h.b16 %v158
    %v548 = vunpack.c.l.b16 %v159
    %v549 = vunpack.c.h.b16 %v159
    %v550 = vunpack.c.l.b16 %v160
    %v551 = vunpack.c.h.b16 %v160
    %v552 = vunpack.c.l.b16 %v161
    %v553 = vunpack.c.h.b16 %v161
    %v554 = vunpack.c.l.b16 %v162
    %v555 = vunpack.c.h.b16 %v162
    %v556 = vunpack.c.l.b16 %v163
    %v557 = vunpack.c.h.b16 %v163
    %v558 = vunpack.c.l.b16 %v164
    %v559 = vunpack.c.h.b16 %v164
    %v560 = vunpack.c.l.b16 %v165
    %v561 = vunpack.c.h.b16 %v165
    %v562 = vunpack.c.l.b16 %v166
    %v563 = vunpack.c.h.b16 %v166
    %v564 = vunpack.c.l.b16 %v167
    %v565 = vunpack.c.h.b16 %v167
    %v566 = vunpack.c.l.b16 %v168
    %v567 = vunpack.c.h.b16 %v168
    %v568 = vunpack.c.l.b16 %v169
    %v569 = vunpack.c.h.b16 %v169
    %v570 = vunpack.c.l.b16 %v170
    %v571 = vunpack.c.h.b16 %v170
    %v572 = vunpack.c.l.b16 %v171
    %v573 = vunpack.c.h.b16 %v171
    %v574 = vunpack.c.l.b16 %v172
    %v575 = vunpack.c.h.b16 %v172
    %v576 = vunpack.c.l.b16 %v173
    %v577 = vunpack.c.h.b16 %v173
    %v578 = vunpack.c.l.b16 %v174
    %v579 = vunpack.c.h.b16 %v174
    %v580 = vunpack.c.l.b16 %v175
    %v581 = vunpack.c.h.b16 %v175
    %v582 = vunpack.c.l.b16 %v176
    %v583 = vunpack.c.h.b16 %v176
    %v584 = vunpack.c.l.b16 %v177
    %v585 = vunpack.c.h.b16 %v177
    %v586 = vunpack.c.l.b16 %v178
    %v587 = vunpack.c.h.b16 %v178
    %v588 = vunpack.c.l.b16 %v179
    %v589 = vunpack.c.h.b16 %v179
    %v590 = vunpack.c.l.b16 %v180
    %v591 = vunpack.c.h.b16 %v180
    %v592 = vunpack.c.l.b16 %v181
    %v593 = vunpack.c.h.b16 %v181
    %v594 = vunpack.c.l.b16 %v182
    %v595 = vunpack.c.h.b16 %v182
    %v596 = vunpack.c.l.b16 %v183
    %v597 = vunpack.c.h.b16 %v183
    %v598 = vunpack.c.l.b16 %v184
    %v599 = vunpack.c.h.b16 %v184
    %v600 = vunpack.c.l.b16 %v185
    %v601 = vunpack.c.h.b16 %v185
    %v602 = vunpack.c.l.b16 %v186
    %v603 = vunpack.c.h.b16 %v186
    %v604 = vunpack.c.l.b16 %v187
    %v605 = vunpack.c.h.b16 %v187
    %v606 = vunpack.c.l.b16 %v188
    %v607 = vunpack.c.h.b16 %v188
    %v608 = vunpack.c.l.b16 %v189
    %v609 = vunpack.c.h.b16 %v189
    %v610 = vunpack.c.l.b16 %v190
    %v611 = vunpack.c.h.b16 %v190
    %v612 = vunpack.c.l.b16 %v191
    %v613 = vunpack.c.h.b16 %v191
    %v614 = vunpack.c.l.b16 %v192
    %v615 = vunpack.c.h.b16 %v192
    %v616 = vunpack.c.l.b16 %v193
    %v617 = vunpack.c.h.b16 %v193
    %v618 = vunpack.c.l.b16 %v194
    %v619 = vunpack.c.h.b16 %v194
    %v620 = vunpack.c.l.b16 %v195
    %v621 = vunpack.c.h.b16 %v195
    %v622 = vunpack.c.l.b16 %v196
    %v623 = vunpack.c.h.b16 %v196
    %v624 = vunpack.c.l.b16 %v197
    %v625 = vunpack.c.h.b16 %v197
    %v626 = vunpack.c.l.b16 %v198
    %v627 = vunpack.c.h.b16 %v198
    %v628 = vunpack.c.l.b16 %v199
    %v629 = vunpack.c.h.b16 %v199
    %v630 = vunpack.c.l.b16 %v200
    %v631 = vunpack.c.h.b16 %v200
    %v632 = vunpack.c.l.b16 %v201
    %v633 = vunpack.c.h.b16 %v201
    %v634 = vpack.c.b16 %v382, %v378
    %v635 = vpack.c.b16 %v383, %v379
    %v636 = vpack.c.b16 %v384, %v380
    %v637 = vpack.c.b16 %v385, %v381
    %v638 = vpack.c.b16 %v390, %v386
    %v639 = vpack.c.b16 %v391, %v387
    %v640 = vpack.c.b16 %v392, %v388
    %v641 = vpack.c.b16 %v393, %v389
    %v642 = vpack.c.b16 %v398, %v394
    %v643 = vpack.c.b16 %v399, %v395
    %v644 = vpack.c.b16 %v400, %v396
    %v645 = vpack.c.b16 %v401, %v397
    %v646 = vpack.c.b16 %v406, %v402
    %v647 = vpack.c.b16 %v407, %v403
    %v648 = vpack.c.b16 %v408, %v404
    %v649 = vpack.c.b16 %v409, %v405
    %v650 = vpack.c.b16 %v414, %v410
    %v651 = vpack.c.b16 %v415, %v411
    %v652 = vpack.c.b16 %v416, %v412
    %v653 = vpack.c.b16 %v417, %v413
    %v654 = vpack.c.b16 %v422, %v418
    %v655 = vpack.c.b16 %v423, %v419
    %v656 = vpack.c.b16 %v424, %v420
    %v657 = vpack.c.b16 %v425, %v421
    %v658 = vpack.c.b16 %v430, %v426
    %v659 = vpack.c.b16 %v431, %v427
    %v660 = vpack.c.b16 %v432, %v428
    %v661 = vpack.c.b16 %v433, %v429
    %v662 = vpack.c.b16 %v438, %v434
    %v663 = vpack.c.b16 %v439, %v435
    %v664 = vpack.c.b16 %v440, %v436
    %v665 = vpack.c.b16 %v441, %v437
    %v666 = vpack.c.b16 %v446, %v442
    %v667 = vpack.c.b16 %v447, %v443
    %v668 = vpack.c.b16 %v448, %v444
    %v669 = vpack.c.b16 %v449, %v445
    %v670 = vpack.c.b16 %v454, %v450
    %v671 = vpack.c.b16 %v455, %v451
    %v672 = vpack.c.b16 %v456, %v452
    %v673 = vpack.c.b16 %v457, %v453
    %v674 = vpack.c.b16 %v462, %v458
    %v675 = vpack.c.b16 %v463, %v459
    %v676 = vpack.c.b16 %v464, %v460
    %v677 = vpack.c.b16 %v465, %v461
    %v678 = vpack.c.b16 %v470, %v466
    %v679 = vpack.c.b16 %v471, %v467
    %v680 = vpack.c.b16 %v472, %v468
    %v681 = vpack.c.b16 %v473, %v469
    %v682 = vpack.c.b16 %v478, %v474
    %v683 = vpack.c.b16 %v479, %v475
    %v684 = vpack.c.b16 %v480, %v476
    %v685 = vpack.c.b16 %v481, %v477
    %v686 = vpack.c.b16 %v486, %v482
    %v687 = vpack.c.b16 %v487, %v483
    %v688 = vpack.c.b16 %v488, %v484
    %v689 = vpack.c.b16 %v489, %v485
    %v690 = vpack.c.b16 %v494, %v490
    %v691 = vpack.c.b16 %v495, %v491
    %v692 = vpack.c.b16 %v496, %v492
    %v693 = vpack.c.b16 %v497, %v493
    %v694 = vpack.c.b16 %v502, %v498
    %v695 = vpack.c.b16 %v503, %v499
    %v696 = vpack.c.b16 %v504, %v500
    %v697 = vpack.c.b16 %v505, %v501
    %v698 = vpack.c.b16 %v510, %v506
    %v699 = vpack.c.b16 %v511, %v507
    %v700 = vpack.c.b16 %v512, %v508
    %v701 = vpack.c.b16 %v513, %v509
    %v702 = vpack.c.b16 %v518, %v514
    %v703 = vpack.c.b16 %v519, %v515
    %v704 = vpack.c.b16 %v520, %v516
    %v705 = vpack.c.b16 %v521, %v517
    %v706 = vpack.c.b16 %v526, %v522
    %v707 = vpack.c.b16 %v527, %v523
    %v708 = vpack.c.b16 %v528, %v524
    %v709 = vpack.c.b16 %v529, %v525
    %v710 = vpack.c.b16 %v534, %v530
    %v711 = vpack.c.b16 %v535, %v531
    %v712 = vpack.c.b16 %v536, %v532
    %v713 = vpack.c.b16 %v537, %v533
    %v714 = vpack.c.b16 %v542, %v538
    %v715 = vpack.c.b16 %v543, %v539
    %v716 = vpack.c.b16 %v544, %v540
    %v717 = vpack.c.b16 %v545, %v541
    %v718 = vpack.c.b16 %v550, %v546
    %v719 = vpack.c.b16 %v551, %v547
    %v720 = vpack.c.b16 %v552, %v548
    %v721 = vpack.c.b16 %v553, %v549
    %v722 = vpack.c.b16 %v558, %v554
    %v723 = vpack.c.b16 %v559, %v555
    %v724 = vpack.c.b16 %v560, %v556
    %v725 = vpack.c.b16 %v561, %v557
    %v726 = vpack.c.b16 %v566, %v562
    %v727 = vpack.c.b16 %v567, %v563
    %v728 = vpack.c.b16 %v568, %v564
    %v729 = vpack.c.b16 %v569, %v565
    %v730 = vpack.c.b16 %v574, %v570
    %v731 = vpack.c.b16 %v575, %v571
    %v732 = vpack.c.b16 %v576, %v572
    %v733 = vpack.c.b16 %v577, %v573
    %v734 = vpack.c.b16 %v582, %v578
    %v735 = vpack.c.b16 %v583, %v579
    %v736 = vpack.c.b16 %v584, %v580
    %v737 = vpack.c.b16 %v585, %v581
    %v738 = vpack.c.b16 %v590, %v586
    %v739 = vpack.c.b16 %v591, %v587
    %v740 = vpack.c.b16 %v592, %v588
    %v741 = vpack.c.b16 %v593, %v589
    %v742 = vpack.c.b16 %v598, %v594
    %v743 = vpack.c.b16 %v599, %v595
    %v744 = vpack.c.b16 %v600, %v596
    %v745 = vpack.c.b16 %v601, %v597
    %v746 = vpack.c.b16 %v606, %v602
    %v747 = vpack.c.b16 %v607, %v603
    %v748 = vpack.c.b16 %v608, %v604
    %v749 = vpack.c.b16 %v609, %v605
    %v750 = vpack.c.b16 %v614, %v610
    %v751 = vpack.c.b16 %v615, %v611
    %v752 = vpack.c.b16 %v616, %v612
    %v753 = vpack.c.b16 %v617, %v613
    %v754 = vpack.c.b16 %v622, %v618
    %v755 = vpack.c.b16 %v623, %v619
    %v756 = vpack.c.b16 %v624, %v620
    %v757 = vpack.c.b16 %v625, %v621
    %v758 = vpack.c.b16 %v630, %v626
    %v759 = vpack.c.b16 %v631, %v627
    %v760 = vpack.c.b16 %v632, %v628
    %v761 = vpack.c.b16 %v633, %v629
    %890 = vmatprep.subr.bf16.mxu0 %v635
    %891 = vmatpush1.bf16.msra.mxu0 %v634
    %892 = vmatprep.subr.bf16.mxu0 %v639
    %893 = vmatpush1.bf16.msra.mxu0 %v638
    %894 = vmatprep.subr.bf16.mxu0 %v643
    %895 = vmatpush1.bf16.msra.mxu0 %v642
    %896 = vmatprep.subr.bf16.mxu0 %v647
    %897 = vmatpush1.bf16.msra.mxu0 %v646
    %898 = vmatprep.subr.bf16.mxu0 %v651
    %899 = vmatpush1.bf16.msra.mxu0 %v650
    %900 = vmatprep.subr.bf16.mxu0 %v655
    %901 = vmatpush1.bf16.msra.mxu0 %v654
    %902 = vmatprep.subr.bf16.mxu0 %v659
    %903 = vmatpush1.bf16.msra.mxu0 %v658
    %904 = vmatprep.subr.bf16.mxu0 %v663
    %905 = vmatpush1.bf16.msra.mxu0 %v662
    %906 = vmatprep.subr.bf16.mxu0 %v667
    %907 = vmatpush1.bf16.msra.mxu0 %v666
    %908 = vmatprep.subr.bf16.mxu0 %v671
    %909 = vmatpush1.bf16.msra.mxu0 %v670
    %910 = vmatprep.subr.bf16.mxu0 %v675
    %911 = vmatpush1.bf16.msra.mxu0 %v674
    %912 = vmatprep.subr.bf16.mxu0 %v679
    %913 = vmatpush1.bf16.msra.mxu0 %v678
    %914 = vmatprep.subr.bf16.mxu0 %v683
    %915 = vmatpush1.bf16.msra.mxu0 %v682
    %916 = vmatprep.subr.bf16.mxu0 %v687
    %917 = vmatpush1.bf16.msra.mxu0 %v686
    %918 = vmatprep.subr.bf16.mxu0 %v691
    %919 = vmatpush1.bf16.msra.mxu0 %v690
    %920 = vmatprep.subr.bf16.mxu0 %v695
    %921 = vmatpush1.bf16.msra.mxu0 %v694
    %922 = vmatprep.mubr.bf16.mxu0 %v226
    %923 = vmatmul.mubr.bf16.gmra.mrb[0].mxu0 %v225
    %v924 = vpop.f32.mrb[0].mxu0
    %v925 = vadd.f32 %v233, %v924
    %v926 = vpop.f32.mrb[0].mxu0
    %v927 = vadd.f32 %v237, %v926
    %v928 = vpop.f32.mrb[0].mxu0
    %v929 = vpop.f32.mrb[0].mxu0
    %930 = vdwg.mxu0
    %931 = vmatprep.subr.bf16.mxu0 %v699
    %932 = vmatpush1.bf16.msra.mxu0 %v698
    %933 = vmatprep.subr.bf16.mxu0 %v703
    %934 = vmatpush1.bf16.msra.mxu0 %v702
    %935 = vmatprep.subr.bf16.mxu0 %v707
    %936 = vmatpush1.bf16.msra.mxu0 %v706
    %937 = vmatprep.subr.bf16.mxu0 %v711
    %938 = vmatpush1.bf16.msra.mxu0 %v710
    %939 = vmatprep.subr.bf16.mxu0 %v715
    %940 = vmatpush1.bf16.msra.mxu0 %v714
    %941 = vmatprep.subr.bf16.mxu0 %v719
    %942 = vmatpush1.bf16.msra.mxu0 %v718
    %943 = vmatprep.subr.bf16.mxu0 %v723
    %944 = vmatpush1.bf16.msra.mxu0 %v722
    %945 = vmatprep.subr.bf16.mxu0 %v727
    %946 = vmatpush1.bf16.msra.mxu0 %v726
    %947 = vmatprep.subr.bf16.mxu0 %v731
    %948 = vmatpush1.bf16.msra.mxu0 %v730
    %949 = vmatprep.subr.bf16.mxu0 %v735
    %950 = vmatpush1.bf16.msra.mxu0 %v734
    %951 = vmatprep.subr.bf16.mxu0 %v739
    %952 = vmatpush1.bf16.msra.mxu0 %v738
    %953 = vmatprep.subr.bf16.mxu0 %v743
    %954 = vmatpush1.bf16.msra.mxu0 %v742
    %955 = vmatprep.subr.bf16.mxu0 %v747
    %956 = vmatpush1.bf16.msra.mxu0 %v746
    %957 = vmatprep.subr.bf16.mxu0 %v751
    %958 = vmatpush1.bf16.msra.mxu0 %v750
    %959 = vmatprep.subr.bf16.mxu0 %v755
    %960 = vmatpush1.bf16.msra.mxu0 %v754
    %961 = vmatprep.subr.bf16.mxu0 %v759
    %962 = vmatpush1.bf16.msra.mxu0 %v758
    %963 = vmatprep.mubr.bf16.mxu0 %v228
    %964 = vmatmul.mubr.bf16.gmra.mrb[0].mxu0 %v227
    %v965 = vpop.f32.mrb[0].mxu0
    %v966 = vadd.f32 %v925, %v965
    %v967 = vpop.f32.mrb[0].mxu0
    %v968 = vadd.f32 %v927, %v967
    %v969 = vpop.f32.mrb[0].mxu0
    %v970 = vpop.f32.mrb[0].mxu0
    %971 = vdwg.mxu0
    %972 = vmatprep.subr.bf16.mxu0 %v637
    %973 = vmatpush1.bf16.msra.mxu0 %v636
    %974 = vmatprep.subr.bf16.mxu0 %v641
    %975 = vmatpush1.bf16.msra.mxu0 %v640
    %976 = vmatprep.subr.bf16.mxu0 %v645
    %977 = vmatpush1.bf16.msra.mxu0 %v644
    %978 = vmatprep.subr.bf16.mxu0 %v649
    %979 = vmatpush1.bf16.msra.mxu0 %v648
    %980 = vmatprep.subr.bf16.mxu0 %v653
    %981 = vmatpush1.bf16.msra.mxu0 %v652
    %982 = vmatprep.subr.bf16.mxu0 %v657
    %983 = vmatpush1.bf16.msra.mxu0 %v656
    %984 = vmatprep.subr.bf16.mxu0 %v661
    %985 = vmatpush1.bf16.msra.mxu0 %v660
    %986 = vmatprep.subr.bf16.mxu0 %v665
    %987 = vmatpush1.bf16.msra.mxu0 %v664
    %988 = vmatprep.subr.bf16.mxu0 %v669
    %989 = vmatpush1.bf16.msra.mxu0 %v668
    %990 = vmatprep.subr.bf16.mxu0 %v673
    %991 = vmatpush1.bf16.msra.mxu0 %v672
    %992 = vmatprep.subr.bf16.mxu0 %v677
    %993 = vmatpush1.bf16.msra.mxu0 %v676
    %994 = vmatprep.subr.bf16.mxu0 %v681
    %995 = vmatpush1.bf16.msra.mxu0 %v680
    %996 = vmatprep.subr.bf16.mxu0 %v685
    %997 = vmatpush1.bf16.msra.mxu0 %v684
    %998 = vmatprep.subr.bf16.mxu0 %v689
    %999 = vmatpush1.bf16.msra.mxu0 %v688
    %1000 = vmatprep.subr.bf16.mxu0 %v693
    %1001 = vmatpush1.bf16.msra.mxu0 %v692
    %1002 = vmatprep.subr.bf16.mxu0 %v697
    %1003 = vmatpush1.bf16.msra.mxu0 %v696
    %1004 = vmatprep.mubr.bf16.mxu0 %v226
    %1005 = vmatmul.mubr.bf16.gmra.mrb[0].mxu0 %v225
    %v1006 = vpop.f32.mrb[0].mxu0
    %v1007 = vadd.f32 %v241, %v1006
    %v1008 = vpop.f32.mrb[0].mxu0
    %v1009 = vadd.f32 %v245, %v1008
    %v1010 = vpop.f32.mrb[0].mxu0
    %v1011 = vpop.f32.mrb[0].mxu0
    %1012 = vdwg.mxu0
    %1013 = vmatprep.subr.bf16.mxu0 %v701
    %1014 = vmatpush1.bf16.msra.mxu0 %v700
    %1015 = vmatprep.subr.bf16.mxu0 %v705
    %1016 = vmatpush1.bf16.msra.mxu0 %v704
    %1017 = vmatprep.subr.bf16.mxu0 %v709
    %1018 = vmatpush1.bf16.msra.mxu0 %v708
    %1019 = vmatprep.subr.bf16.mxu0 %v713
    %1020 = vmatpush1.bf16.msra.mxu0 %v712
    %1021 = vmatprep.subr.bf16.mxu0 %v717
    %1022 = vmatpush1.bf16.msra.mxu0 %v716
    %1023 = vmatprep.subr.bf16.mxu0 %v721
    %1024 = vmatpush1.bf16.msra.mxu0 %v720
    %1025 = vmatprep.subr.bf16.mxu0 %v725
    %1026 = vmatpush1.bf16.msra.mxu0 %v724
    %1027 = vmatprep.subr.bf16.mxu0 %v729
    %1028 = vmatpush1.bf16.msra.mxu0 %v728
    %1029 = vmatprep.subr.bf16.mxu0 %v733
    %1030 = vmatpush1.bf16.msra.mxu0 %v732
    %1031 = vmatprep.subr.bf16.mxu0 %v737
    %1032 = vmatpush1.bf16.msra.mxu0 %v736
    %1033 = vmatprep.subr.bf16.mxu0 %v741
    %1034 = vmatpush1.bf16.msra.mxu0 %v740
    %1035 = vmatprep.subr.bf16.mxu0 %v745
    %1036 = vmatpush1.bf16.msra.mxu0 %v744
    %1037 = vmatprep.subr.bf16.mxu0 %v749
    %1038 = vmatpush1.bf16.msra.mxu0 %v748
    %1039 = vmatprep.subr.bf16.mxu0 %v753
    %1040 = vmatpush1.bf16.msra.mxu0 %v752
    %1041 = vmatprep.subr.bf16.mxu0 %v757
    %1042 = vmatpush1.bf16.msra.mxu0 %v756
    %1043 = vmatprep.subr.bf16.mxu0 %v761
    %1044 = vmatpush1.bf16.msra.mxu0 %v760
    %1045 = vmatprep.mubr.bf16.mxu0 %v228
    %1046 = vmatmul.mubr.bf16.gmra.mrb[0].mxu0 %v227
    %v1047 = vpop.f32.mrb[0].mxu0
    %v1048 = vadd.f32 %v1007, %v1047
    %v1049 = vpop.f32.mrb[0].mxu0
    %v1050 = vadd.f32 %v1009, %v1049
    %v1051 = vpop.f32.mrb[0].mxu0
    %v1052 = vpop.f32.mrb[0].mxu0
    %1053 = vdwg.mxu0
    %v1054 = vmax.f32 %v966, 0.0
    %v1055 = vmax.f32 %v968, 0.0
    %v1056 = vmax.f32 %v1048, 0.0
    %v1057 = vmax.f32 %v1050, 0.0
    %v1058 = vld [vmem:[%s3] sm:$0xff]
    %v1059 = vld [vmem:[%s3 + $0x8] sm:$0xf]
    %v1060 = vld [vmem:[%s3 + $0xc] sm:$0xff]
    %v1061 = vld [vmem:[%s3 + $0x14] sm:$0xf]
    %v1062 = vld [vmem:[%s3 + $0x18] sm:$0xff]
    %v1063 = vld [vmem:[%s3 + $0x20] sm:$0xf]
    %v1064 = vld [vmem:[%s3 + $0x24] sm:$0xff]
    %v1065 = vld [vmem:[%s3 + $0x2c] sm:$0xf]
    %v1066 = vld [vmem:[%s3 + $0x30] sm:$0xff]
    %v1067 = vld [vmem:[%s3 + $0x38] sm:$0xf]
    %v1068 = vld [vmem:[%s3 + $0x3c] sm:$0xff]
    %v1069 = vld [vmem:[%s3 + $0x44] sm:$0xf]
    %v1070 = vld [vmem:[%s3 + $0x48] sm:$0xff]
    %v1071 = vld [vmem:[%s3 + $0x50] sm:$0xf]
    %v1072 = vld [vmem:[%s3 + $0x54] sm:$0xff]
    %v1073 = vld [vmem:[%s3 + $0x5c] sm:$0xf]
    %v1074 = vld [vmem:[%s3 + $0x60] sm:$0xff]
    %v1075 = vld [vmem:[%s3 + $0x68] sm:$0xf]
    %v1076 = vld [vmem:[%s3 + $0x6c] sm:$0xff]
    %v1077 = vld [vmem:[%s3 + $0x74] sm:$0xf]
    %v1078 = vld [vmem:[%s3 + $0x78] sm:$0xff]
    %v1079 = vld [vmem:[%s3 + $0x80] sm:$0xf]
    %v1080 = vld [vmem:[%s3 + $0x84] sm:$0xff]
    %v1081 = vld [vmem:[%s3 + $0x8c] sm:$0xf]
    %v1082 = vld [vmem:[%s3 + $0x90] sm:$0xff]
    %v1083 = vld [vmem:[%s3 + $0x98] sm:$0xf]
    %v1084 = vld [vmem:[%s3 + $0x9c] sm:$0xff]
    %v1085 = vld [vmem:[%s3 + $0xa4] sm:$0xf]
    %v1086 = vld [vmem:[%s3 + $0xa8] sm:$0xff]
    %v1087 = vld [vmem:[%s3 + $0xb0] sm:$0xf]
    %v1088 = vld [vmem:[%s3 + $0xb4] sm:$0xff]
    %v1089 = vld [vmem:[%s3 + $0xbc] sm:$0xf]
    %v1090 = vld [vmem:[%s3 + $0xc0] sm:$0xff]
    %v1091 = vld [vmem:[%s3 + $0xc8] sm:$0xf]
    %v1092 = vld [vmem:[%s3 + $0xcc] sm:$0xff]
    %v1093 = vld [vmem:[%s3 + $0xd4] sm:$0xf]
    %v1094 = vld [vmem:[%s3 + $0xd8] sm:$0xff]
    %v1095 = vld [vmem:[%s3 + $0xe0] sm:$0xf]
    %v1096 = vld [vmem:[%s3 + $0xe4] sm:$0xff]
    %v1097 = vld [vmem:[%s3 + $0xec] sm:$0xf]
    %v1098 = vld [vmem:[%s3 + $0xf0] sm:$0xff]
    %v1099 = vld [vmem:[%s3 + $0xf8] sm:$0xf]
    %v1100 = vld [vmem:[%s3 + $0xfc] sm:$0xff]
    %v1101 = vld [vmem:[%s3 + $0x104] sm:$0xf]
    %v1102 = vld [vmem:[%s3 + $0x108] sm:$0xff]
    %v1103 = vld [vmem:[%s3 + $0x110] sm:$0xf]
    %v1104 = vld [vmem:[%s3 + $0x114] sm:$0xff]
    %v1105 = vld [vmem:[%s3 + $0x11c] sm:$0xf]
    %v1106 = vld [vmem:[%s3 + $0x120] sm:$0xff]
    %v1107 = vld [vmem:[%s3 + $0x128] sm:$0xf]
    %v1108 = vld [vmem:[%s3 + $0x12c] sm:$0xff]
    %v1109 = vld [vmem:[%s3 + $0x134] sm:$0xf]
    %v1110 = vld [vmem:[%s3 + $0x138] sm:$0xff]
    %v1111 = vld [vmem:[%s3 + $0x140] sm:$0xf]
    %v1112 = vld [vmem:[%s3 + $0x144] sm:$0xff]
    %v1113 = vld [vmem:[%s3 + $0x14c] sm:$0xf]
    %v1114 = vld [vmem:[%s3 + $0x150] sm:$0xff]
    %v1115 = vld [vmem:[%s3 + $0x158] sm:$0xf]
    %v1116 = vld [vmem:[%s3 + $0x15c] sm:$0xff]
    %v1117 = vld [vmem:[%s3 + $0x164] sm:$0xf]
    %v1118 = vld [vmem:[%s3 + $0x168] sm:$0xff]
    %v1119 = vld [vmem:[%s3 + $0x170] sm:$0xf]
    %v1120 = vld [vmem:[%s3 + $0x174] sm:$0xff]
    %v1121 = vld [vmem:[%s3 + $0x17c] sm:$0xf]
    %v1122 = vld [vmem:[%s3 + $0x180] sm:$0xff]
    %v1123 = vld [vmem:[%s3 + $0x188] sm:$0xf]
    %v1124 = vld [vmem:[%s3 + $0x18c] sm:$0xff]
    %v1125 = vld [vmem:[%s3 + $0x194] sm:$0xf]
    %v1126 = vld [vmem:[%s3 + $0x198] sm:$0xff]
    %v1127 = vld [vmem:[%s3 + $0x1a0] sm:$0xf]
    %v1128 = vld [vmem:[%s3 + $0x1a4] sm:$0xff]
    %v1129 = vld [vmem:[%s3 + $0x1ac] sm:$0xf]
    %v1130 = vld [vmem:[%s3 + $0x1b0] sm:$0xff]
    %v1131 = vld [vmem:[%s3 + $0x1b8] sm:$0xf]
    %v1132 = vld [vmem:[%s3 + $0x1bc] sm:$0xff]
    %v1133 = vld [vmem:[%s3 + $0x1c4] sm:$0xf]
    %v1134 = vld [vmem:[%s3 + $0x1c8] sm:$0xff]
    %v1135 = vld [vmem:[%s3 + $0x1d0] sm:$0xf]
    %v1136 = vld [vmem:[%s3 + $0x1d4] sm:$0xff]
    %v1137 = vld [vmem:[%s3 + $0x1dc] sm:$0xf]
    %v1138 = vld [vmem:[%s3 + $0x1e0] sm:$0xff]
    %v1139 = vld [vmem:[%s3 + $0x1e8] sm:$0xf]
    %v1140 = vld [vmem:[%s3 + $0x1ec] sm:$0xff]
    %v1141 = vld [vmem:[%s3 + $0x1f4] sm:$0xf]
    %v1142 = vld [vmem:[%s3 + $0x1f8] sm:$0xff]
    %v1143 = vld [vmem:[%s3 + $0x200] sm:$0xf]
    %v1144 = vld [vmem:[%s3 + $0x204] sm:$0xff]
    %v1145 = vld [vmem:[%s3 + $0x20c] sm:$0xf]
    %v1146 = vld [vmem:[%s3 + $0x210] sm:$0xff]
    %v1147 = vld [vmem:[%s3 + $0x218] sm:$0xf]
    %v1148 = vld [vmem:[%s3 + $0x21c] sm:$0xff]
    %v1149 = vld [vmem:[%s3 + $0x224] sm:$0xf]
    %v1150 = vld [vmem:[%s3 + $0x228] sm:$0xff]
    %v1151 = vld [vmem:[%s3 + $0x230] sm:$0xf]
    %v1152 = vld [vmem:[%s3 + $0x234] sm:$0xff]
    %v1153 = vld [vmem:[%s3 + $0x23c] sm:$0xf]
    %v1154 = vld [vmem:[%s3 + $0x240] sm:$0xff]
    %v1155 = vld [vmem:[%s3 + $0x248] sm:$0xf]
    %v1156 = vld [vmem:[%s3 + $0x24c] sm:$0xff]
    %v1157 = vld [vmem:[%s3 + $0x254] sm:$0xf]
    %v1158 = vld [vmem:[%s3 + $0x258] sm:$0xff]
    %v1159 = vld [vmem:[%s3 + $0x260] sm:$0xf]
    %v1160 = vld [vmem:[%s3 + $0x264] sm:$0xff]
    %v1161 = vld [vmem:[%s3 + $0x26c] sm:$0xf]
    %v1162 = vld [vmem:[%s3 + $0x270] sm:$0xff]
    %v1163 = vld [vmem:[%s3 + $0x278] sm:$0xf]
    %v1164 = vld [vmem:[%s3 + $0x27c] sm:$0xff]
    %v1165 = vld [vmem:[%s3 + $0x284] sm:$0xf]
    %v1166 = vld [vmem:[%s3 + $0x288] sm:$0xff]
    %v1167 = vld [vmem:[%s3 + $0x290] sm:$0xf]
    %v1168 = vld [vmem:[%s3 + $0x294] sm:$0xff]
    %v1169 = vld [vmem:[%s3 + $0x29c] sm:$0xf]
    %v1170 = vld [vmem:[%s3 + $0x2a0] sm:$0xff]
    %v1171 = vld [vmem:[%s3 + $0x2a8] sm:$0xf]
    %v1172 = vld [vmem:[%s3 + $0x2ac] sm:$0xff]
    %v1173 = vld [vmem:[%s3 + $0x2b4] sm:$0xf]
    %v1174 = vld [vmem:[%s3 + $0x2b8] sm:$0xff]
    %v1175 = vld [vmem:[%s3 + $0x2c0] sm:$0xf]
    %v1176 = vld [vmem:[%s3 + $0x2c4] sm:$0xff]
    %v1177 = vld [vmem:[%s3 + $0x2cc] sm:$0xf]
    %v1178 = vld [vmem:[%s3 + $0x2d0] sm:$0xff]
    %v1179 = vld [vmem:[%s3 + $0x2d8] sm:$0xf]
    %v1180 = vld [vmem:[%s3 + $0x2dc] sm:$0xff]
    %v1181 = vld [vmem:[%s3 + $0x2e4] sm:$0xf]
    %v1182 = vld [vmem:[%s3 + $0x2e8] sm:$0xff]
    %v1183 = vld [vmem:[%s3 + $0x2f0] sm:$0xf]
    %v1184 = vld [vmem:[%s3 + $0x2f4] sm:$0xff]
    %v1185 = vld [vmem:[%s3 + $0x2fc] sm:$0xf]
    %v1186 = vld [vmem:[%s4] sm:$0x7]
    %v1187 = vpack.c.bf16 %v1054, %v1054
    %v1188 = vpack.c.bf16 %v1055, %v1055
    %v1189 = vpack.c.bf16 %v1056, %v1056
    %v1190 = vpack.c.bf16 %v1057, %v1057
    %v1192 = vlaneseq
    %v1193 = vshrl.u32 %v1192, 7
    %v1194 = vsub.s32 0, %v1193
    %v1195 = vrot.slane %v1186, %v1194
    %v1196 = vlaneseq
    %v1197 = vshrl.u32 %v1196, 7
    %v1198 = vsub.s32 1, %v1197
    %v1199 = vrot.slane %v1186, %v1198
    %v1200 = vlaneseq
    %v1201 = vshrl.u32 %v1200, 7
    %v1202 = vsub.s32 2, %v1201
    %v1203 = vrot.slane %v1186, %v1202
    %v1335 = vunpack.c.l.b16 %v1058
    %v1336 = vunpack.c.h.b16 %v1058
    %v1337 = vunpack.c.l.b16 %v1059
    %v1338 = vunpack.c.l.b16 %v1060
    %v1339 = vunpack.c.h.b16 %v1060
    %v1340 = vunpack.c.l.b16 %v1061
    %v1341 = vunpack.c.l.b16 %v1062
    %v1342 = vunpack.c.h.b16 %v1062
    %v1343 = vunpack.c.l.b16 %v1063
    %v1344 = vunpack.c.l.b16 %v1064
    %v1345 = vunpack.c.h.b16 %v1064
    %v1346 = vunpack.c.l.b16 %v1065
    %v1347 = vunpack.c.l.b16 %v1066
    %v1348 = vunpack.c.h.b16 %v1066
    %v1349 = vunpack.c.l.b16 %v1067
    %v1350 = vunpack.c.l.b16 %v1068
    %v1351 = vunpack.c.h.b16 %v1068
    %v1352 = vunpack.c.l.b16 %v1069
    %v1353 = vunpack.c.l.b16 %v1070
    %v1354 = vunpack.c.h.b16 %v1070
    %v1355 = vunpack.c.l.b16 %v1071
    %v1356 = vunpack.c.l.b16 %v1072
    %v1357 = vunpack.c.h.b16 %v1072
    %v1358 = vunpack.c.l.b16 %v1073
    %v1359 = vunpack.c.l.b16 %v1074
    %v1360 = vunpack.c.h.b16 %v1074
    %v1361 = vunpack.c.l.b16 %v1075
    %v1362 = vunpack.c.l.b16 %v1076
    %v1363 = vunpack.c.h.b16 %v1076
    %v1364 = vunpack.c.l.b16 %v1077
    %v1365 = vunpack.c.l.b16 %v1078
    %v1366 = vunpack.c.h.b16 %v1078
    %v1367 = vunpack.c.l.b16 %v1079
    %v1368 = vunpack.c.l.b16 %v1080
    %v1369 = vunpack.c.h.b16 %v1080
    %v1370 = vunpack.c.l.b16 %v1081
    %v1371 = vunpack.c.l.b16 %v1082
    %v1372 = vunpack.c.h.b16 %v1082
    %v1373 = vunpack.c.l.b16 %v1083
    %v1374 = vunpack.c.l.b16 %v1084
    %v1375 = vunpack.c.h.b16 %v1084
    %v1376 = vunpack.c.l.b16 %v1085
    %v1377 = vunpack.c.l.b16 %v1086
    %v1378 = vunpack.c.h.b16 %v1086
    %v1379 = vunpack.c.l.b16 %v1087
    %v1380 = vunpack.c.l.b16 %v1088
    %v1381 = vunpack.c.h.b16 %v1088
    %v1382 = vunpack.c.l.b16 %v1089
    %v1383 = vunpack.c.l.b16 %v1090
    %v1384 = vunpack.c.h.b16 %v1090
    %v1385 = vunpack.c.l.b16 %v1091
    %v1386 = vunpack.c.l.b16 %v1092
    %v1387 = vunpack.c.h.b16 %v1092
    %v1388 = vunpack.c.l.b16 %v1093
    %v1389 = vunpack.c.l.b16 %v1094
    %v1390 = vunpack.c.h.b16 %v1094
    %v1391 = vunpack.c.l.b16 %v1095
    %v1392 = vunpack.c.l.b16 %v1096
    %v1393 = vunpack.c.h.b16 %v1096
    %v1394 = vunpack.c.l.b16 %v1097
    %v1395 = vunpack.c.l.b16 %v1098
    %v1396 = vunpack.c.h.b16 %v1098
    %v1397 = vunpack.c.l.b16 %v1099
    %v1398 = vunpack.c.l.b16 %v1100
    %v1399 = vunpack.c.h.b16 %v1100
    %v1400 = vunpack.c.l.b16 %v1101
    %v1401 = vunpack.c.l.b16 %v1102
    %v1402 = vunpack.c.h.b16 %v1102
    %v1403 = vunpack.c.l.b16 %v1103
    %v1404 = vunpack.c.l.b16 %v1104
    %v1405 = vunpack.c.h.b16 %v1104
    %v1406 = vunpack.c.l.b16 %v1105
    %v1407 = vunpack.c.l.b16 %v1106
    %v1408 = vunpack.c.h.b16 %v1106
    %v1409 = vunpack.c.l.b16 %v1107
    %v1410 = vunpack.c.l.b16 %v1108
    %v1411 = vunpack.c.h.b16 %v1108
    %v1412 = vunpack.c.l.b16 %v1109
    %v1413 = vunpack.c.l.b16 %v1110
    %v1414 = vunpack.c.h.b16 %v1110
    %v1415 = vunpack.c.l.b16 %v1111
    %v1416 = vunpack.c.l.b16 %v1112
    %v1417 = vunpack.c.h.b16 %v1112
    %v1418 = vunpack.c.l.b16 %v1113
    %v1419 = vunpack.c.l.b16 %v1114
    %v1420 = vunpack.c.h.b16 %v1114
    %v1421 = vunpack.c.l.b16 %v1115
    %v1422 = vunpack.c.l.b16 %v1116
    %v1423 = vunpack.c.h.b16 %v1116
    %v1424 = vunpack.c.l.b16 %v1117
    %v1425 = vunpack.c.l.b16 %v1118
    %v1426 = vunpack.c.h.b16 %v1118
    %v1427 = vunpack.c.l.b16 %v1119
    %v1428 = vunpack.c.l.b16 %v1120
    %v1429 = vunpack.c.h.b16 %v1120
    %v1430 = vunpack.c.l.b16 %v1121
    %v1431 = vunpack.c.l.b16 %v1122
    %v1432 = vunpack.c.h.b16 %v1122
    %v1433 = vunpack.c.l.b16 %v1123
    %v1434 = vunpack.c.l.b16 %v1124
    %v1435 = vunpack.c.h.b16 %v1124
    %v1436 = vunpack.c.l.b16 %v1125
    %v1437 = vunpack.c.l.b16 %v1126
    %v1438 = vunpack.c.h.b16 %v1126
    %v1439 = vunpack.c.l.b16 %v1127
    %v1440 = vunpack.c.l.b16 %v1128
    %v1441 = vunpack.c.h.b16 %v1128
    %v1442 = vunpack.c.l.b16 %v1129
    %v1443 = vunpack.c.l.b16 %v1130
    %v1444 = vunpack.c.h.b16 %v1130
    %v1445 = vunpack.c.l.b16 %v1131
    %v1446 = vunpack.c.l.b16 %v1132
    %v1447 = vunpack.c.h.b16 %v1132
    %v1448 = vunpack.c.l.b16 %v1133
    %v1449 = vunpack.c.l.b16 %v1134
    %v1450 = vunpack.c.h.b16 %v1134
    %v1451 = vunpack.c.l.b16 %v1135
    %v1452 = vunpack.c.l.b16 %v1136
    %v1453 = vunpack.c.h.b16 %v1136
    %v1454 = vunpack.c.l.b16 %v1137
    %v1455 = vunpack.c.l.b16 %v1138
    %v1456 = vunpack.c.h.b16 %v1138
    %v1457 = vunpack.c.l.b16 %v1139
    %v1458 = vunpack.c.l.b16 %v1140
    %v1459 = vunpack.c.h.b16 %v1140
    %v1460 = vunpack.c.l.b16 %v1141
    %v1461 = vunpack.c.l.b16 %v1142
    %v1462 = vunpack.c.h.b16 %v1142
    %v1463 = vunpack.c.l.b16 %v1143
    %v1464 = vunpack.c.l.b16 %v1144
    %v1465 = vunpack.c.h.b16 %v1144
    %v1466 = vunpack.c.l.b16 %v1145
    %v1467 = vunpack.c.l.b16 %v1146
    %v1468 = vunpack.c.h.b16 %v1146
    %v1469 = vunpack.c.l.b16 %v1147
    %v1470 = vunpack.c.l.b16 %v1148
    %v1471 = vunpack.c.h.b16 %v1148
    %v1472 = vunpack.c.l.b16 %v1149
    %v1473 = vunpack.c.l.b16 %v1150
    %v1474 = vunpack.c.h.b16 %v1150
    %v1475 = vunpack.c.l.b16 %v1151
    %v1476 = vunpack.c.l.b16 %v1152
    %v1477 = vunpack.c.h.b16 %v1152
    %v1478 = vunpack.c.l.b16 %v1153
    %v1479 = vunpack.c.l.b16 %v1154
    %v1480 = vunpack.c.h.b16 %v1154
    %v1481 = vunpack.c.l.b16 %v1155
    %v1482 = vunpack.c.l.b16 %v1156
    %v1483 = vunpack.c.h.b16 %v1156
    %v1484 = vunpack.c.l.b16 %v1157
    %v1485 = vunpack.c.l.b16 %v1158
    %v1486 = vunpack.c.h.b16 %v1158
    %v1487 = vunpack.c.l.b16 %v1159
    %v1488 = vunpack.c.l.b16 %v1160
    %v1489 = vunpack.c.h.b16 %v1160
    %v1490 = vunpack.c.l.b16 %v1161
    %v1491 = vunpack.c.l.b16 %v1162
    %v1492 = vunpack.c.h.b16 %v1162
    %v1493 = vunpack.c.l.b16 %v1163
    %v1494 = vunpack.c.l.b16 %v1164
    %v1495 = vunpack.c.h.b16 %v1164
    %v1496 = vunpack.c.l.b16 %v1165
    %v1497 = vunpack.c.l.b16 %v1166
    %v1498 = vunpack.c.h.b16 %v1166
    %v1499 = vunpack.c.l.b16 %v1167
    %v1500 = vunpack.c.l.b16 %v1168
    %v1501 = vunpack.c.h.b16 %v1168
    %v1502 = vunpack.c.l.b16 %v1169
    %v1503 = vunpack.c.l.b16 %v1170
    %v1504 = vunpack.c.h.b16 %v1170
    %v1505 = vunpack.c.l.b16 %v1171
    %v1506 = vunpack.c.l.b16 %v1172
    %v1507 = vunpack.c.h.b16 %v1172
    %v1508 = vunpack.c.l.b16 %v1173
    %v1509 = vunpack.c.l.b16 %v1174
    %v1510 = vunpack.c.h.b16 %v1174
    %v1511 = vunpack.c.l.b16 %v1175
    %v1512 = vunpack.c.l.b16 %v1176
    %v1513 = vunpack.c.h.b16 %v1176
    %v1514 = vunpack.c.l.b16 %v1177
    %v1515 = vunpack.c.l.b16 %v1178
    %v1516 = vunpack.c.h.b16 %v1178
    %v1517 = vunpack.c.l.b16 %v1179
    %v1518 = vunpack.c.l.b16 %v1180
    %v1519 = vunpack.c.h.b16 %v1180
    %v1520 = vunpack.c.l.b16 %v1181
    %v1521 = vunpack.c.l.b16 %v1182
    %v1522 = vunpack.c.h.b16 %v1182
    %v1523 = vunpack.c.l.b16 %v1183
    %v1524 = vunpack.c.l.b16 %v1184
    %v1525 = vunpack.c.h.b16 %v1184
    %v1526 = vunpack.c.l.b16 %v1185
    %v1527 = vpack.c.b16 %v1338, %v1335
    %v1528 = vpack.c.b16 %v1339, %v1336
    %v1529 = vpack.c.b16 %v1340, %v1337
    %v1530 = vpack.c.b16 %v1344, %v1341
    %v1531 = vpack.c.b16 %v1345, %v1342
    %v1532 = vpack.c.b16 %v1346, %v1343
    %v1533 = vpack.c.b16 %v1350, %v1347
    %v1534 = vpack.c.b16 %v1351, %v1348
    %v1535 = vpack.c.b16 %v1352, %v1349
    %v1536 = vpack.c.b16 %v1356, %v1353
    %v1537 = vpack.c.b16 %v1357, %v1354
    %v1538 = vpack.c.b16 %v1358, %v1355
    %v1539 = vpack.c.b16 %v1362, %v1359
    %v1540 = vpack.c.b16 %v1363, %v1360
    %v1541 = vpack.c.b16 %v1364, %v1361
    %v1542 = vpack.c.b16 %v1368, %v1365
    %v1543 = vpack.c.b16 %v1369, %v1366
    %v1544 = vpack.c.b16 %v1370, %v1367
    %v1545 = vpack.c.b16 %v1374, %v1371
    %v1546 = vpack.c.b16 %v1375, %v1372
    %v1547 = vpack.c.b16 %v1376, %v1373
    %v1548 = vpack.c.b16 %v1380, %v1377
    %v1549 = vpack.c.b16 %v1381, %v1378
    %v1550 = vpack.c.b16 %v1382, %v1379
    %v1551 = vpack.c.b16 %v1386, %v1383
    %v1552 = vpack.c.b16 %v1387, %v1384
    %v1553 = vpack.c.b16 %v1388, %v1385
    %v1554 = vpack.c.b16 %v1392, %v1389
    %v1555 = vpack.c.b16 %v1393, %v1390
    %v1556 = vpack.c.b16 %v1394, %v1391
    %v1557 = vpack.c.b16 %v1398, %v1395
    %v1558 = vpack.c.b16 %v1399, %v1396
    %v1559 = vpack.c.b16 %v1400, %v1397
    %v1560 = vpack.c.b16 %v1404, %v1401
    %v1561 = vpack.c.b16 %v1405, %v1402
    %v1562 = vpack.c.b16 %v1406, %v1403
    %v1563 = vpack.c.b16 %v1410, %v1407
    %v1564 = vpack.c.b16 %v1411, %v1408
    %v1565 = vpack.c.b16 %v1412, %v1409
    %v1566 = vpack.c.b16 %v1416, %v1413
    %v1567 = vpack.c.b16 %v1417, %v1414
    %v1568 = vpack.c.b16 %v1418, %v1415
    %v1569 = vpack.c.b16 %v1422, %v1419
    %v1570 = vpack.c.b16 %v1423, %v1420
    %v1571 = vpack.c.b16 %v1424, %v1421
    %v1572 = vpack.c.b16 %v1428, %v1425
    %v1573 = vpack.c.b16 %v1429, %v1426
    %v1574 = vpack.c.b16 %v1430, %v1427
    %v1575 = vpack.c.b16 %v1434, %v1431
    %v1576 = vpack.c.b16 %v1435, %v1432
    %v1577 = vpack.c.b16 %v1436, %v1433
    %v1578 = vpack.c.b16 %v1440, %v1437
    %v1579 = vpack.c.b16 %v1441, %v1438
    %v1580 = vpack.c.b16 %v1442, %v1439
    %v1581 = vpack.c.b16 %v1446, %v1443
    %v1582 = vpack.c.b16 %v1447, %v1444
    %v1583 = vpack.c.b16 %v1448, %v1445
    %v1584 = vpack.c.b16 %v1452, %v1449
    %v1585 = vpack.c.b16 %v1453, %v1450
    %v1586 = vpack.c.b16 %v1454, %v1451
    %v1587 = vpack.c.b16 %v1458, %v1455
    %v1588 = vpack.c.b16 %v1459, %v1456
    %v1589 = vpack.c.b16 %v1460, %v1457
    %v1590 = vpack.c.b16 %v1464, %v1461
    %v1591 = vpack.c.b16 %v1465, %v1462
    %v1592 = vpack.c.b16 %v1466, %v1463
    %v1593 = vpack.c.b16 %v1470, %v1467
    %v1594 = vpack.c.b16 %v1471, %v1468
    %v1595 = vpack.c.b16 %v1472, %v1469
    %v1596 = vpack.c.b16 %v1476, %v1473
    %v1597 = vpack.c.b16 %v1477, %v1474
    %v1598 = vpack.c.b16 %v1478, %v1475
    %v1599 = vpack.c.b16 %v1482, %v1479
    %v1600 = vpack.c.b16 %v1483, %v1480
    %v1601 = vpack.c.b16 %v1484, %v1481
    %v1602 = vpack.c.b16 %v1488, %v1485
    %v1603 = vpack.c.b16 %v1489, %v1486
    %v1604 = vpack.c.b16 %v1490, %v1487
    %v1605 = vpack.c.b16 %v1494, %v1491
    %v1606 = vpack.c.b16 %v1495, %v1492
    %v1607 = vpack.c.b16 %v1496, %v1493
    %v1608 = vpack.c.b16 %v1500, %v1497
    %v1609 = vpack.c.b16 %v1501, %v1498
    %v1610 = vpack.c.b16 %v1502, %v1499
    %v1611 = vpack.c.b16 %v1506, %v1503
    %v1612 = vpack.c.b16 %v1507, %v1504
    %v1613 = vpack.c.b16 %v1508, %v1505
    %v1614 = vpack.c.b16 %v1512, %v1509
    %v1615 = vpack.c.b16 %v1513, %v1510
    %v1616 = vpack.c.b16 %v1514, %v1511
    %v1617 = vpack.c.b16 %v1518, %v1515
    %v1618 = vpack.c.b16 %v1519, %v1516
    %v1619 = vpack.c.b16 %v1520, %v1517
    %v1620 = vpack.c.b16 %v1524, %v1521
    %v1621 = vpack.c.b16 %v1525, %v1522
    %v1622 = vpack.c.b16 %v1526, %v1523
    %1719 = vmatprep.subr.bf16.mxu0 %v1528
    %1720 = vmatpush1.bf16.msra.mxu0 %v1527
    %1721 = vmatprep.subr.bf16.mxu0 %v1531
    %1722 = vmatpush1.bf16.msra.mxu0 %v1530
    %1723 = vmatprep.subr.bf16.mxu0 %v1534
    %1724 = vmatpush1.bf16.msra.mxu0 %v1533
    %1725 = vmatprep.subr.bf16.mxu0 %v1537
    %1726 = vmatpush1.bf16.msra.mxu0 %v1536
    %1727 = vmatprep.subr.bf16.mxu0 %v1540
    %1728 = vmatpush1.bf16.msra.mxu0 %v1539
    %1729 = vmatprep.subr.bf16.mxu0 %v1543
    %1730 = vmatpush1.bf16.msra.mxu0 %v1542
    %1731 = vmatprep.subr.bf16.mxu0 %v1546
    %1732 = vmatpush1.bf16.msra.mxu0 %v1545
    %1733 = vmatprep.subr.bf16.mxu0 %v1549
    %1734 = vmatpush1.bf16.msra.mxu0 %v1548
    %1735 = vmatprep.subr.bf16.mxu0 %v1552
    %1736 = vmatpush1.bf16.msra.mxu0 %v1551
    %1737 = vmatprep.subr.bf16.mxu0 %v1555
    %1738 = vmatpush1.bf16.msra.mxu0 %v1554
    %1739 = vmatprep.subr.bf16.mxu0 %v1558
    %1740 = vmatpush1.bf16.msra.mxu0 %v1557
    %1741 = vmatprep.subr.bf16.mxu0 %v1561
    %1742 = vmatpush1.bf16.msra.mxu0 %v1560
    %1743 = vmatprep.subr.bf16.mxu0 %v1564
    %1744 = vmatpush1.bf16.msra.mxu0 %v1563
    %1745 = vmatprep.subr.bf16.mxu0 %v1567
    %1746 = vmatpush1.bf16.msra.mxu0 %v1566
    %1747 = vmatprep.subr.bf16.mxu0 %v1570
    %1748 = vmatpush1.bf16.msra.mxu0 %v1569
    %1749 = vmatprep.subr.bf16.mxu0 %v1573
    %1750 = vmatpush1.bf16.msra.mxu0 %v1572
    %1751 = vmatprep.mubr.bf16.mxu0 %v1188
    %1752 = vmatmul.mubr.bf16.gmra.mrb[0].mxu0 %v1187
    %v1753 = vpop.f32.mrb[0].mxu0
    %v1754 = vadd.f32 %v1195, %v1753
    %v1755 = vpop.f32.mrb[0].mxu0
    %v1756 = vadd.f32 %v1199, %v1755
    %v1757 = vpop.f32.mrb[0].mxu0
    %v1758 = vpop.f32.mrb[0].mxu0
    %1759 = vdwg.mxu0
    %1760 = vmatprep.subr.bf16.mxu0 %v1576
    %1761 = vmatpush1.bf16.msra.mxu0 %v1575
    %1762 = vmatprep.subr.bf16.mxu0 %v1579
    %1763 = vmatpush1.bf16.msra.mxu0 %v1578
    %1764 = vmatprep.subr.bf16.mxu0 %v1582
    %1765 = vmatpush1.bf16.msra.mxu0 %v1581
    %1766 = vmatprep.subr.bf16.mxu0 %v1585
    %1767 = vmatpush1.bf16.msra.mxu0 %v1584
    %1768 = vmatprep.subr.bf16.mxu0 %v1588
    %1769 = vmatpush1.bf16.msra.mxu0 %v1587
    %1770 = vmatprep.subr.bf16.mxu0 %v1591
    %1771 = vmatpush1.bf16.msra.mxu0 %v1590
    %1772 = vmatprep.subr.bf16.mxu0 %v1594
    %1773 = vmatpush1.bf16.msra.mxu0 %v1593
    %1774 = vmatprep.subr.bf16.mxu0 %v1597
    %1775 = vmatpush1.bf16.msra.mxu0 %v1596
    %1776 = vmatprep.subr.bf16.mxu0 %v1600
    %1777 = vmatpush1.bf16.msra.mxu0 %v1599
    %1778 = vmatprep.subr.bf16.mxu0 %v1603
    %1779 = vmatpush1.bf16.msra.mxu0 %v1602
    %1780 = vmatprep.subr.bf16.mxu0 %v1606
    %1781 = vmatpush1.bf16.msra.mxu0 %v1605
    %1782 = vmatprep.subr.bf16.mxu0 %v1609
    %1783 = vmatpush1.bf16.msra.mxu0 %v1608
    %1784 = vmatprep.subr.bf16.mxu0 %v1612
    %1785 = vmatpush1.bf16.msra.mxu0 %v1611
    %1786 = vmatprep.subr.bf16.mxu0 %v1615
    %1787 = vmatpush1.bf16.msra.mxu0 %v1614
    %1788 = vmatprep.subr.bf16.mxu0 %v1618
    %1789 = vmatpush1.bf16.msra.mxu0 %v1617
    %1790 = vmatprep.subr.bf16.mxu0 %v1621
    %1791 = vmatpush1.bf16.msra.mxu0 %v1620
    %1792 = vmatprep.mubr.bf16.mxu0 %v1190
    %1793 = vmatmul.mubr.bf16.gmra.mrb[0].mxu0 %v1189
    %v1794 = vpop.f32.mrb[0].mxu0
    %v1795 = vadd.f32 %v1754, %v1794
    %v1796 = vpop.f32.mrb[0].mxu0
    %v1797 = vadd.f32 %v1756, %v1796
    %v1798 = vpop.f32.mrb[0].mxu0
    %v1799 = vpop.f32.mrb[0].mxu0
    %1800 = vdwg.mxu0
    %1801 = vmatprep.subr.bf16.mxu0 0
    %1802 = vmatpush1.bf16.msra.mxu0 %v1529
    %1803 = vmatprep.subr.bf16.mxu0 0
    %1804 = vmatpush1.bf16.msra.mxu0 %v1532
    %1805 = vmatprep.subr.bf16.mxu0 0
    %1806 = vmatpush1.bf16.msra.mxu0 %v1535
    %1807 = vmatprep.subr.bf16.mxu0 0
    %1808 = vmatpush1.bf16.msra.mxu0 %v1538
    %1809 = vmatprep.subr.bf16.mxu0 0
    %1810 = vmatpush1.bf16.msra.mxu0 %v1541
    %1811 = vmatprep.subr.bf16.mxu0 0
    %1812 = vmatpush1.bf16.msra.mxu0 %v1544
    %1813 = vmatprep.subr.bf16.mxu0 0
    %1814 = vmatpush1.bf16.msra.mxu0 %v1547
    %1815 = vmatprep.subr.bf16.mxu0 0
    %1816 = vmatpush1.bf16.msra.mxu0 %v1550
    %1817 = vmatprep.subr.bf16.mxu0 0
    %1818 = vmatpush1.bf16.msra.mxu0 %v1553
    %1819 = vmatprep.subr.bf16.mxu0 0
    %1820 = vmatpush1.bf16.msra.mxu0 %v1556
    %1821 = vmatprep.subr.bf16.mxu0 0
    %1822 = vmatpush1.bf16.msra.mxu0 %v1559
    %1823 = vmatprep.subr.bf16.mxu0 0
    %1824 = vmatpush1.bf16.msra.mxu0 %v1562
    %1825 = vmatprep.subr.bf16.mxu0 0
    %1826 = vmatpush1.bf16.msra.mxu0 %v1565
    %1827 = vmatprep.subr.bf16.mxu0 0
    %1828 = vmatpush1.bf16.msra.mxu0 %v1568
    %1829 = vmatprep.subr.bf16.mxu0 0
    %1830 = vmatpush1.bf16.msra.mxu0 %v1571
    %1831 = vmatprep.subr.bf16.mxu0 0
    %1832 = vmatpush1.bf16.msra.mxu0 %v1574
    %1833 = vmatprep.mubr.bf16.mxu0 %v1188
    %1834 = vmatmul.mubr.bf16.gmra.mrb[0].mxu0 %v1187
    %v1835 = vpop.f32.mrb[0].mxu0
    %v1836 = vadd.f32 %v1203, %v1835
    %v1837 = vpop.f32.mrb[0].mxu0
    %v1838 = vpop.f32.mrb[0].mxu0
    %v1839 = vpop.f32.mrb[0].mxu0
    %1840 = vdwg.mxu0
    %1841 = vmatprep.subr.bf16.mxu0 0
    %1842 = vmatpush1.bf16.msra.mxu0 %v1577
    %1843 = vmatprep.subr.bf16.mxu0 0
    %1844 = vmatpush1.bf16.msra.mxu0 %v1580
    %1845 = vmatprep.subr.bf16.mxu0 0
    %1846 = vmatpush1.bf16.msra.mxu0 %v1583
    %1847 = vmatprep.subr.bf16.mxu0 0
    %1848 = vmatpush1.bf16.msra.mxu0 %v1586
    %1849 = vmatprep.subr.bf16.mxu0 0
    %1850 = vmatpush1.bf16.msra.mxu0 %v1589
    %1851 = vmatprep.subr.bf16.mxu0 0
    %1852 = vmatpush1.bf16.msra.mxu0 %v1592
    %1853 = vmatprep.subr.bf16.mxu0 0
    %1854 = vmatpush1.bf16.msra.mxu0 %v1595
    %1855 = vmatprep.subr.bf16.mxu0 0
    %1856 = vmatpush1.bf16.msra.mxu0 %v1598
    %1857 = vmatprep.subr.bf16.mxu0 0
    %1858 = vmatpush1.bf16.msra.mxu0 %v1601
    %1859 = vmatprep.subr.bf16.mxu0 0
    %1860 = vmatpush1.bf16.msra.mxu0 %v1604
    %1861 = vmatprep.subr.bf16.mxu0 0
    %1862 = vmatpush1.bf16.msra.mxu0 %v1607
    %1863 = vmatprep.subr.bf16.mxu0 0
    %1864 = vmatpush1.bf16.msra.mxu0 %v1610
    %1865 = vmatprep.subr.bf16.mxu0 0
    %1866 = vmatpush1.bf16.msra.mxu0 %v1613
    %1867 = vmatprep.subr.bf16.mxu0 0
    %1868 = vmatpush1.bf16.msra.mxu0 %v1616
    %1869 = vmatprep.subr.bf16.mxu0 0
    %1870 = vmatpush1.bf16.msra.mxu0 %v1619
    %1871 = vmatprep.subr.bf16.mxu0 0
    %1872 = vmatpush1.bf16.msra.mxu0 %v1622
    %1873 = vmatprep.mubr.bf16.mxu0 %v1190
    %1874 = vmatmul.mubr.bf16.gmra.mrb[0].mxu0 %v1189
    %v1875 = vpop.f32.mrb[0].mxu0
    %v1876 = vadd.f32 %v1836, %v1875
    %v1877 = vpop.f32.mrb[0].mxu0
    %v1878 = vpop.f32.mrb[0].mxu0
    %v1879 = vpop.f32.mrb[0].mxu0
    %1880 = vdwg.mxu0
    %v1881 = vmax.f32 %v1795, 0.0
    %v1882 = vmax.f32 %v1797, 0.0
    %v1883 = vmax.f32 %v1876, 0.0
    %v1884 = vld [vmem:[%s5] sm:$0xff]
    %v1885 = vld [vmem:[%s5 + $0x8] sm:$0xff]
    %v1886 = vld [vmem:[%s5 + $0x10] sm:$0xff]
    %v1887 = vld [vmem:[%s5 + $0x18] sm:$0xff]
    %v1888 = vld [vmem:[%s5 + $0x20] sm:$0xff]
    %v1889 = vld [vmem:[%s5 + $0x28] sm:$0xff]
    %v1890 = vld [vmem:[%s5 + $0x30] sm:$0xff]
    %v1891 = vld [vmem:[%s5 + $0x38] sm:$0xff]
    %v1892 = vld [vmem:[%s5 + $0x40] sm:$0xff]
    %v1893 = vld [vmem:[%s5 + $0x48] sm:$0xff]
    %v1894 = vld [vmem:[%s5 + $0x50] sm:$0xff]
    %v1895 = vld [vmem:[%s5 + $0x58] sm:$0xff]
    %v1896 = vld [vmem:[%s5 + $0x60] sm:$0xff]
    %v1897 = vld [vmem:[%s5 + $0x68] sm:$0xff]
    %v1898 = vld [vmem:[%s5 + $0x70] sm:$0xff]
    %v1899 = vld [vmem:[%s5 + $0x78] sm:$0xff]
    %v1900 = vld [vmem:[%s5 + $0x80] sm:$0xff]
    %v1901 = vld [vmem:[%s5 + $0x88] sm:$0xff]
    %v1902 = vld [vmem:[%s5 + $0x90] sm:$0xff]
    %v1903 = vld [vmem:[%s5 + $0x98] sm:$0xff]
    %v1904 = vld [vmem:[%s5 + $0xa0] sm:$0xff]
    %v1905 = vld [vmem:[%s5 + $0xa8] sm:$0xff]
    %v1906 = vld [vmem:[%s5 + $0xb0] sm:$0xff]
    %v1907 = vld [vmem:[%s5 + $0xb8] sm:$0xff]
    %v1908 = vld [vmem:[%s5 + $0xc0] sm:$0xff]
    %v1909 = vld [vmem:[%s5 + $0xc8] sm:$0xff]
    %v1910 = vld [vmem:[%s5 + $0xd0] sm:$0xff]
    %v1911 = vld [vmem:[%s5 + $0xd8] sm:$0xff]
    %v1912 = vld [vmem:[%s5 + $0xe0] sm:$0xff]
    %v1913 = vld [vmem:[%s5 + $0xe8] sm:$0xff]
    %v1914 = vld [vmem:[%s5 + $0xf0] sm:$0xff]
    %v1915 = vld [vmem:[%s5 + $0xf8] sm:$0xff]
    %v1916 = vld [vmem:[%s5 + $0x100] sm:$0xff]
    %v1917 = vld [vmem:[%s5 + $0x108] sm:$0xff]
    %v1918 = vld [vmem:[%s5 + $0x110] sm:$0xff]
    %v1919 = vld [vmem:[%s5 + $0x118] sm:$0xff]
    %v1920 = vld [vmem:[%s5 + $0x120] sm:$0xff]
    %v1921 = vld [vmem:[%s5 + $0x128] sm:$0xff]
    %v1922 = vld [vmem:[%s5 + $0x130] sm:$0xff]
    %v1923 = vld [vmem:[%s5 + $0x138] sm:$0xff]
    %v1924 = vld [vmem:[%s5 + $0x140] sm:$0xff]
    %v1925 = vld [vmem:[%s5 + $0x148] sm:$0xff]
    %v1926 = vld [vmem:[%s5 + $0x150] sm:$0xff]
    %v1927 = vld [vmem:[%s5 + $0x158] sm:$0xff]
    %v1928 = vld [vmem:[%s5 + $0x160] sm:$0xff]
    %v1929 = vld [vmem:[%s5 + $0x168] sm:$0xff]
    %v1930 = vld [vmem:[%s5 + $0x170] sm:$0xff]
    %v1931 = vld [vmem:[%s5 + $0x178] sm:$0xff]
    %v1932 = vld [vmem:[%s6] sm:$0x3]
    %v1933 = vpack.c.bf16 %v1881, %v1881
    %v1934 = vpack.c.bf16 %v1882, %v1882
    %v1935 = vpack.c.bf16 %v1883, %v1883
    %v1937 = vlaneseq
    %v1938 = vshrl.u32 %v1937, 7
    %v1939 = vsub.s32 0, %v1938
    %v1940 = vrot.slane %v1932, %v1939
    %v1941 = vlaneseq
    %v1942 = vshrl.u32 %v1941, 7
    %v1943 = vsub.s32 1, %v1942
    %v1944 = vrot.slane %v1932, %v1943
    %v1995 = vunpack.c.l.b16 %v1884
    %v1996 = vunpack.c.h.b16 %v1884
    %v1997 = vunpack.c.l.b16 %v1885
    %v1998 = vunpack.c.h.b16 %v1885
    %v1999 = vunpack.c.l.b16 %v1886
    %v2000 = vunpack.c.h.b16 %v1886
    %v2001 = vunpack.c.l.b16 %v1887
    %v2002 = vunpack.c.h.b16 %v1887
    %v2003 = vunpack.c.l.b16 %v1888
    %v2004 = vunpack.c.h.b16 %v1888
    %v2005 = vunpack.c.l.b16 %v1889
    %v2006 = vunpack.c.h.b16 %v1889
    %v2007 = vunpack.c.l.b16 %v1890
    %v2008 = vunpack.c.h.b16 %v1890
    %v2009 = vunpack.c.l.b16 %v1891
    %v2010 = vunpack.c.h.b16 %v1891
    %v2011 = vunpack.c.l.b16 %v1892
    %v2012 = vunpack.c.h.b16 %v1892
    %v2013 = vunpack.c.l.b16 %v1893
    %v2014 = vunpack.c.h.b16 %v1893
    %v2015 = vunpack.c.l.b16 %v1894
    %v2016 = vunpack.c.h.b16 %v1894
    %v2017 = vunpack.c.l.b16 %v1895
    %v2018 = vunpack.c.h.b16 %v1895
    %v2019 = vunpack.c.l.b16 %v1896
    %v2020 = vunpack.c.h.b16 %v1896
    %v2021 = vunpack.c.l.b16 %v1897
    %v2022 = vunpack.c.h.b16 %v1897
    %v2023 = vunpack.c.l.b16 %v1898
    %v2024 = vunpack.c.h.b16 %v1898
    %v2025 = vunpack.c.l.b16 %v1899
    %v2026 = vunpack.c.h.b16 %v1899
    %v2027 = vunpack.c.l.b16 %v1900
    %v2028 = vunpack.c.h.b16 %v1900
    %v2029 = vunpack.c.l.b16 %v1901
    %v2030 = vunpack.c.h.b16 %v1901
    %v2031 = vunpack.c.l.b16 %v1902
    %v2032 = vunpack.c.h.b16 %v1902
    %v2033 = vunpack.c.l.b16 %v1903
    %v2034 = vunpack.c.h.b16 %v1903
    %v2035 = vunpack.c.l.b16 %v1904
    %v2036 = vunpack.c.h.b16 %v1904
    %v2037 = vunpack.c.l.b16 %v1905
    %v2038 = vunpack.c.h.b16 %v1905
    %v2039 = vunpack.c.l.b16 %v1906
    %v2040 = vunpack.c.h.b16 %v1906
    %v2041 = vunpack.c.l.b16 %v1907
    %v2042 = vunpack.c.h.b16 %v1907
    %v2043 = vunpack.c.l.b16 %v1908
    %v2044 = vunpack.c.h.b16 %v1908
    %v2045 = vunpack.c.l.b16 %v1909
    %v2046 = vunpack.c.h.b16 %v1909
    %v2047 = vunpack.c.l.b16 %v1910
    %v2048 = vunpack.c.h.b16 %v1910
    %v2049 = vunpack.c.l.b16 %v1911
    %v2050 = vunpack.c.h.b16 %v1911
    %v2051 = vunpack.c.l.b16 %v1912
    %v2052 = vunpack.c.h.b16 %v1912
    %v2053 = vunpack.c.l.b16 %v1913
    %v2054 = vunpack.c.h.b16 %v1913
    %v2055 = vunpack.c.l.b16 %v1914
    %v2056 = vunpack.c.h.b16 %v1914
    %v2057 = vunpack.c.l.b16 %v1915
    %v2058 = vunpack.c.h.b16 %v1915
    %v2059 = vunpack.c.l.b16 %v1916
    %v2060 = vunpack.c.h.b16 %v1916
    %v2061 = vunpack.c.l.b16 %v1917
    %v2062 = vunpack.c.h.b16 %v1917
    %v2063 = vunpack.c.l.b16 %v1918
    %v2064 = vunpack.c.h.b16 %v1918
    %v2065 = vunpack.c.l.b16 %v1919
    %v2066 = vunpack.c.h.b16 %v1919
    %v2067 = vunpack.c.l.b16 %v1920
    %v2068 = vunpack.c.h.b16 %v1920
    %v2069 = vunpack.c.l.b16 %v1921
    %v2070 = vunpack.c.h.b16 %v1921
    %v2071 = vunpack.c.l.b16 %v1922
    %v2072 = vunpack.c.h.b16 %v1922
    %v2073 = vunpack.c.l.b16 %v1923
    %v2074 = vunpack.c.h.b16 %v1923
    %v2075 = vunpack.c.l.b16 %v1924
    %v2076 = vunpack.c.h.b16 %v1924
    %v2077 = vunpack.c.l.b16 %v1925
    %v2078 = vunpack.c.h.b16 %v1925
    %v2079 = vunpack.c.l.b16 %v1926
    %v2080 = vunpack.c.h.b16 %v1926
    %v2081 = vunpack.c.l.b16 %v1927
    %v2082 = vunpack.c.h.b16 %v1927
    %v2083 = vunpack.c.l.b16 %v1928
    %v2084 = vunpack.c.h.b16 %v1928
    %v2085 = vunpack.c.l.b16 %v1929
    %v2086 = vunpack.c.h.b16 %v1929
    %v2087 = vunpack.c.l.b16 %v1930
    %v2088 = vunpack.c.h.b16 %v1930
    %v2089 = vunpack.c.l.b16 %v1931
    %v2090 = vunpack.c.h.b16 %v1931
    %v2091 = vpack.c.b16 %v1997, %v1995
    %v2092 = vpack.c.b16 %v1998, %v1996
    %v2093 = vpack.c.b16 %v2001, %v1999
    %v2094 = vpack.c.b16 %v2002, %v2000
    %v2095 = vpack.c.b16 %v2005, %v2003
    %v2096 = vpack.c.b16 %v2006, %v2004
    %v2097 = vpack.c.b16 %v2009, %v2007
    %v2098 = vpack.c.b16 %v2010, %v2008
    %v2099 = vpack.c.b16 %v2013, %v2011
    %v2100 = vpack.c.b16 %v2014, %v2012
    %v2101 = vpack.c.b16 %v2017, %v2015
    %v2102 = vpack.c.b16 %v2018, %v2016
    %v2103 = vpack.c.b16 %v2021, %v2019
    %v2104 = vpack.c.b16 %v2022, %v2020
    %v2105 = vpack.c.b16 %v2025, %v2023
    %v2106 = vpack.c.b16 %v2026, %v2024
    %v2107 = vpack.c.b16 %v2029, %v2027
    %v2108 = vpack.c.b16 %v2030, %v2028
    %v2109 = vpack.c.b16 %v2033, %v2031
    %v2110 = vpack.c.b16 %v2034, %v2032
    %v2111 = vpack.c.b16 %v2037, %v2035
    %v2112 = vpack.c.b16 %v2038, %v2036
    %v2113 = vpack.c.b16 %v2041, %v2039
    %v2114 = vpack.c.b16 %v2042, %v2040
    %v2115 = vpack.c.b16 %v2045, %v2043
    %v2116 = vpack.c.b16 %v2046, %v2044
    %v2117 = vpack.c.b16 %v2049, %v2047
    %v2118 = vpack.c.b16 %v2050, %v2048
    %v2119 = vpack.c.b16 %v2053, %v2051
    %v2120 = vpack.c.b16 %v2054, %v2052
    %v2121 = vpack.c.b16 %v2057, %v2055
    %v2122 = vpack.c.b16 %v2058, %v2056
    %v2123 = vpack.c.b16 %v2061, %v2059
    %v2124 = vpack.c.b16 %v2062, %v2060
    %v2125 = vpack.c.b16 %v2065, %v2063
    %v2126 = vpack.c.b16 %v2066, %v2064
    %v2127 = vpack.c.b16 %v2069, %v2067
    %v2128 = vpack.c.b16 %v2070, %v2068
    %v2129 = vpack.c.b16 %v2073, %v2071
    %v2130 = vpack.c.b16 %v2074, %v2072
    %v2131 = vpack.c.b16 %v2077, %v2075
    %v2132 = vpack.c.b16 %v2078, %v2076
    %v2133 = vpack.c.b16 %v2081, %v2079
    %v2134 = vpack.c.b16 %v2082, %v2080
    %v2135 = vpack.c.b16 %v2085, %v2083
    %v2136 = vpack.c.b16 %v2086, %v2084
    %v2137 = vpack.c.b16 %v2089, %v2087
    %v2138 = vpack.c.b16 %v2090, %v2088
    %2187 = vmatprep.subr.bf16.mxu0 %v2092
    %2188 = vmatpush1.bf16.msra.mxu0 %v2091
    %2189 = vmatprep.subr.bf16.mxu0 %v2094
    %2190 = vmatpush1.bf16.msra.mxu0 %v2093
    %2191 = vmatprep.subr.bf16.mxu0 %v2096
    %2192 = vmatpush1.bf16.msra.mxu0 %v2095
    %2193 = vmatprep.subr.bf16.mxu0 %v2098
    %2194 = vmatpush1.bf16.msra.mxu0 %v2097
    %2195 = vmatprep.subr.bf16.mxu0 %v2100
    %2196 = vmatpush1.bf16.msra.mxu0 %v2099
    %2197 = vmatprep.subr.bf16.mxu0 %v2102
    %2198 = vmatpush1.bf16.msra.mxu0 %v2101
    %2199 = vmatprep.subr.bf16.mxu0 %v2104
    %2200 = vmatpush1.bf16.msra.mxu0 %v2103
    %2201 = vmatprep.subr.bf16.mxu0 %v2106
    %2202 = vmatpush1.bf16.msra.mxu0 %v2105
    %2203 = vmatprep.subr.bf16.mxu0 %v2108
    %2204 = vmatpush1.bf16.msra.mxu0 %v2107
    %2205 = vmatprep.subr.bf16.mxu0 %v2110
    %2206 = vmatpush1.bf16.msra.mxu0 %v2109
    %2207 = vmatprep.subr.bf16.mxu0 %v2112
    %2208 = vmatpush1.bf16.msra.mxu0 %v2111
    %2209 = vmatprep.subr.bf16.mxu0 %v2114
    %2210 = vmatpush1.bf16.msra.mxu0 %v2113
    %2211 = vmatprep.subr.bf16.mxu0 %v2116
    %2212 = vmatpush1.bf16.msra.mxu0 %v2115
    %2213 = vmatprep.subr.bf16.mxu0 %v2118
    %2214 = vmatpush1.bf16.msra.mxu0 %v2117
    %2215 = vmatprep.subr.bf16.mxu0 %v2120
    %2216 = vmatpush1.bf16.msra.mxu0 %v2119
    %2217 = vmatprep.subr.bf16.mxu0 %v2122
    %2218 = vmatpush1.bf16.msra.mxu0 %v2121
    %2219 = vmatprep.mubr.bf16.mxu0 %v1934
    %2220 = vmatmul.mubr.bf16.gmra.mrb[0].mxu0 %v1933
    %v2221 = vpop.f32.mrb[0].mxu0
    %v2222 = vadd.f32 %v1940, %v2221
    %v2223 = vpop.f32.mrb[0].mxu0
    %v2224 = vadd.f32 %v1944, %v2223
    %v2225 = vpop.f32.mrb[0].mxu0
    %v2226 = vpop.f32.mrb[0].mxu0
    %2227 = vdwg.mxu0
    %2228 = vmatprep.subr.bf16.mxu0 %v2124
    %2229 = vmatpush1.bf16.msra.mxu0 %v2123
    %2230 = vmatprep.subr.bf16.mxu0 %v2126
    %2231 = vmatpush1.bf16.msra.mxu0 %v2125
    %2232 = vmatprep.subr.bf16.mxu0 %v2128
    %2233 = vmatpush1.bf16.msra.mxu0 %v2127
    %2234 = vmatprep.subr.bf16.mxu0 %v2130
    %2235 = vmatpush1.bf16.msra.mxu0 %v2129
    %2236 = vmatprep.subr.bf16.mxu0 %v2132
    %2237 = vmatpush1.bf16.msra.mxu0 %v2131
    %2238 = vmatprep.subr.bf16.mxu0 %v2134
    %2239 = vmatpush1.bf16.msra.mxu0 %v2133
    %2240 = vmatprep.subr.bf16.mxu0 %v2136
    %2241 = vmatpush1.bf16.msra.mxu0 %v2135
    %2242 = vmatprep.subr.bf16.mxu0 %v2138
    %2243 = vmatpush1.bf16.msra.mxu0 %v2137
    %2244 = vmatprep.subr.bf16.mxu0 0
    %2245 = vmatpush1.bf16.msra.mxu0 0
    %2246 = vmatprep.subr.bf16.mxu0 0
    %2247 = vmatpush1.bf16.msra.mxu0 0
    %2248 = vmatprep.subr.bf16.mxu0 0
    %2249 = vmatpush1.bf16.msra.mxu0 0
    %2250 = vmatprep.subr.bf16.mxu0 0
    %2251 = vmatpush1.bf16.msra.mxu0 0
    %2252 = vmatprep.subr.bf16.mxu0 0
    %2253 = vmatpush1.bf16.msra.mxu0 0
    %2254 = vmatprep.subr.bf16.mxu0 0
    %2255 = vmatpush1.bf16.msra.mxu0 0
    %2256 = vmatprep.subr.bf16.mxu0 0
    %2257 = vmatpush1.bf16.msra.mxu0 0
    %2258 = vmatprep.subr.bf16.mxu0 0
    %2259 = vmatpush1.bf16.msra.mxu0 0
    %2260 = vmatprep.mubr.bf16.mxu0 0
    %2261 = vmatmul.mubr.bf16.gmra.mrb[0].mxu0 %v1935
    %v2262 = vpop.f32.mrb[0].mxu0
    %v2263 = vadd.f32 %v2222, %v2262
    %v2264 = vpop.f32.mrb[0].mxu0
    %v2265 = vadd.f32 %v2224, %v2264
    %v2266 = vpop.f32.mrb[0].mxu0
    %v2267 = vpop.f32.mrb[0].mxu0
    %2268 = vdwg.mxu0
    %v2269 = vmax.f32 %v2263, 0.0
    %v2270 = vmax.f32 %v2265, 0.0
    %v2271 = vld [vmem:[%s7] sm:$0xf]
    %v2272 = vld [vmem:[%s7 + $0x4] sm:$0xf]
    %v2273 = vld [vmem:[%s7 + $0x8] sm:$0xf]
    %v2274 = vld [vmem:[%s7 + $0xc] sm:$0xf]
    %v2275 = vld [vmem:[%s7 + $0x10] sm:$0xf]
    %v2276 = vld [vmem:[%s7 + $0x14] sm:$0xf]
    %v2277 = vld [vmem:[%s7 + $0x18] sm:$0xf]
    %v2278 = vld [vmem:[%s7 + $0x1c] sm:$0xf]
    %v2279 = vld [vmem:[%s7 + $0x20] sm:$0xf]
    %v2280 = vld [vmem:[%s7 + $0x24] sm:$0xf]
    %v2281 = vld [vmem:[%s7 + $0x28] sm:$0xf]
    %v2282 = vld [vmem:[%s7 + $0x2c] sm:$0xf]
    %v2283 = vld [vmem:[%s7 + $0x30] sm:$0xf]
    %v2284 = vld [vmem:[%s7 + $0x34] sm:$0xf]
    %v2285 = vld [vmem:[%s7 + $0x38] sm:$0xf]
    %v2286 = vld [vmem:[%s7 + $0x3c] sm:$0xf]
    %v2287 = vld [vmem:[%s7 + $0x40] sm:$0xf]
    %v2288 = vld [vmem:[%s7 + $0x44] sm:$0xf]
    %v2289 = vld [vmem:[%s7 + $0x48] sm:$0xf]
    %v2290 = vld [vmem:[%s7 + $0x4c] sm:$0xf]
    %v2291 = vld [vmem:[%s7 + $0x50] sm:$0xf]
    %v2292 = vld [vmem:[%s7 + $0x54] sm:$0xf]
    %v2293 = vld [vmem:[%s7 + $0x58] sm:$0xf]
    %v2294 = vld [vmem:[%s7 + $0x5c] sm:$0xf]
    %v2295 = vld [vmem:[%s7 + $0x60] sm:$0xf]
    %v2296 = vld [vmem:[%s7 + $0x64] sm:$0xf]
    %v2297 = vld [vmem:[%s7 + $0x68] sm:$0xf]
    %v2298 = vld [vmem:[%s7 + $0x6c] sm:$0xf]
    %v2299 = vld [vmem:[%s7 + $0x70] sm:$0xf]
    %v2300 = vld [vmem:[%s7 + $0x74] sm:$0xf]
    %v2301 = vld [vmem:[%s7 + $0x78] sm:$0xf]
    %v2302 = vld [vmem:[%s7 + $0x7c] sm:$0xf]
    %v2303 = vld [vmem:[%s8] sm:$0x1]
    %v2304 = vpack.c.bf16 %v2269, %v2269
    %v2305 = vpack.c.bf16 %v2270, %v2270
    %v2307 = vlaneseq
    %v2308 = vshrl.u32 %v2307, 7
    %v2309 = vsub.s32 0, %v2308
    %v2310 = vrot.slane %v2303, %v2309
    %v2344 = vunpack.c.l.b16 %v2271
    %v2345 = vunpack.c.l.b16 %v2272
    %v2346 = vunpack.c.l.b16 %v2273
    %v2347 = vunpack.c.l.b16 %v2274
    %v2348 = vunpack.c.l.b16 %v2275
    %v2349 = vunpack.c.l.b16 %v2276
    %v2350 = vunpack.c.l.b16 %v2277
    %v2351 = vunpack.c.l.b16 %v2278
    %v2352 = vunpack.c.l.b16 %v2279
    %v2353 = vunpack.c.l.b16 %v2280
    %v2354 = vunpack.c.l.b16 %v2281
    %v2355 = vunpack.c.l.b16 %v2282
    %v2356 = vunpack.c.l.b16 %v2283
    %v2357 = vunpack.c.l.b16 %v2284
    %v2358 = vunpack.c.l.b16 %v2285
    %v2359 = vunpack.c.l.b16 %v2286
    %v2360 = vunpack.c.l.b16 %v2287
    %v2361 = vunpack.c.l.b16 %v2288
    %v2362 = vunpack.c.l.b16 %v2289
    %v2363 = vunpack.c.l.b16 %v2290
    %v2364 = vunpack.c.l.b16 %v2291
    %v2365 = vunpack.c.l.b16 %v2292
    %v2366 = vunpack.c.l.b16 %v2293
    %v2367 = vunpack.c.l.b16 %v2294
    %v2368 = vunpack.c.l.b16 %v2295
    %v2369 = vunpack.c.l.b16 %v2296
    %v2370 = vunpack.c.l.b16 %v2297
    %v2371 = vunpack.c.l.b16 %v2298
    %v2372 = vunpack.c.l.b16 %v2299
    %v2373 = vunpack.c.l.b16 %v2300
    %v2374 = vunpack.c.l.b16 %v2301
    %v2375 = vunpack.c.l.b16 %v2302
    %v2376 = vpack.c.b16 %v2345, %v2344
    %v2377 = vpack.c.b16 %v2347, %v2346
    %v2378 = vpack.c.b16 %v2349, %v2348
    %v2379 = vpack.c.b16 %v2351, %v2350
    %v2380 = vpack.c.b16 %v2353, %v2352
    %v2381 = vpack.c.b16 %v2355, %v2354
    %v2382 = vpack.c.b16 %v2357, %v2356
    %v2383 = vpack.c.b16 %v2359, %v2358
    %v2384 = vpack.c.b16 %v2361, %v2360
    %v2385 = vpack.c.b16 %v2363, %v2362
    %v2386 = vpack.c.b16 %v2365, %v2364
    %v2387 = vpack.c.b16 %v2367, %v2366
    %v2388 = vpack.c.b16 %v2369, %v2368
    %v2389 = vpack.c.b16 %v2371, %v2370
    %v2390 = vpack.c.b16 %v2373, %v2372
    %v2391 = vpack.c.b16 %v2375, %v2374
    %2408 = vmatprep.subr.bf16.mxu0 0
    %2409 = vmatpush1.bf16.msra.mxu0 %v2376
    %2410 = vmatprep.subr.bf16.mxu0 0
    %2411 = vmatpush1.bf16.msra.mxu0 %v2377
    %2412 = vmatprep.subr.bf16.mxu0 0
    %2413 = vmatpush1.bf16.msra.mxu0 %v2378
    %2414 = vmatprep.subr.bf16.mxu0 0
    %2415 = vmatpush1.bf16.msra.mxu0 %v2379
    %2416 = vmatprep.subr.bf16.mxu0 0
    %2417 = vmatpush1.bf16.msra.mxu0 %v2380
    %2418 = vmatprep.subr.bf16.mxu0 0
    %2419 = vmatpush1.bf16.msra.mxu0 %v2381
    %2420 = vmatprep.subr.bf16.mxu0 0
    %2421 = vmatpush1.bf16.msra.mxu0 %v2382
    %2422 = vmatprep.subr.bf16.mxu0 0
    %2423 = vmatpush1.bf16.msra.mxu0 %v2383
    %2424 = vmatprep.subr.bf16.mxu0 0
    %2425 = vmatpush1.bf16.msra.mxu0 %v2384
    %2426 = vmatprep.subr.bf16.mxu0 0
    %2427 = vmatpush1.bf16.msra.mxu0 %v2385
    %2428 = vmatprep.subr.bf16.mxu0 0
    %2429 = vmatpush1.bf16.msra.mxu0 %v2386
    %2430 = vmatprep.subr.bf16.mxu0 0
    %2431 = vmatpush1.bf16.msra.mxu0 %v2387
    %2432 = vmatprep.subr.bf16.mxu0 0
    %2433 = vmatpush1.bf16.msra.mxu0 %v2388
    %2434 = vmatprep.subr.bf16.mxu0 0
    %2435 = vmatpush1.bf16.msra.mxu0 %v2389
    %2436 = vmatprep.subr.bf16.mxu0 0
    %2437 = vmatpush1.bf16.msra.mxu0 %v2390
    %2438 = vmatprep.subr.bf16.mxu0 0
    %2439 = vmatpush1.bf16.msra.mxu0 %v2391
    %2440 = vmatprep.mubr.bf16.mxu0 %v2305
    %2441 = vmatmul.mubr.bf16.gmra.mrb[0].mxu0 %v2304
    %v2442 = vpop.f32.mrb[0].mxu0
    %v2443 = vadd.f32 %v2310, %v2442
    %v2444 = vpop.f32.mrb[0].mxu0
    %v2445 = vpop.f32.mrb[0].mxu0
    %v2446 = vpop.f32.mrb[0].mxu0
    %2447 = vdwg.mxu0
    %v2448 = vmax.f32 %v2443, 0.0
    %v2449 = vld [vmem:[%s9] sm:$0xf]
    %v2450 = vld [vmem:[%s9 + $0x4] sm:$0xf]
    %v2451 = vld [vmem:[%s9 + $0x8] sm:$0xf]
    %v2452 = vld [vmem:[%s9 + $0xc] sm:$0xf]
    %v2453 = vld [vmem:[%s9 + $0x10] sm:$0xf]
    %v2454 = vld [vmem:[%s9 + $0x14] sm:$0xf]
    %v2455 = vld [vmem:[%s9 + $0x18] sm:$0xf]
    %v2456 = vld [vmem:[%s9 + $0x1c] sm:$0xf]
    %v2457 = vld [vmem:[%s9 + $0x20] sm:$0xf]
    %v2458 = vld [vmem:[%s9 + $0x24] sm:$0xf]
    %v2459 = vld [vmem:[%s9 + $0x28] sm:$0xf]
    %v2460 = vld [vmem:[%s9 + $0x2c] sm:$0xf]
    %v2461 = vld [vmem:[%s9 + $0x30] sm:$0xf]
    %v2462 = vld [vmem:[%s9 + $0x34] sm:$0xf]
    %v2463 = vld [vmem:[%s9 + $0x38] sm:$0xf]
    %v2464 = vld [vmem:[%s9 + $0x3c] sm:$0xf]
    %v2465 = vld [vmem:[%s10] sm:$0x1]
    %v2466 = vpack.c.bf16 %v2448, %v2448
    %v2468 = vlaneseq
    %v2469 = vshrl.u32 %v2468, 7
    %v2470 = vsub.s32 0, %v2469
    %v2471 = vrot.slane %v2465, %v2470
    %v2489 = vunpack.c.l.b16 %v2449
    %v2490 = vunpack.c.l.b16 %v2450
    %v2491 = vunpack.c.l.b16 %v2451
    %v2492 = vunpack.c.l.b16 %v2452
    %v2493 = vunpack.c.l.b16 %v2453
    %v2494 = vunpack.c.l.b16 %v2454
    %v2495 = vunpack.c.l.b16 %v2455
    %v2496 = vunpack.c.l.b16 %v2456
    %v2497 = vunpack.c.l.b16 %v2457
    %v2498 = vunpack.c.l.b16 %v2458
    %v2499 = vunpack.c.l.b16 %v2459
    %v2500 = vunpack.c.l.b16 %v2460
    %v2501 = vunpack.c.l.b16 %v2461
    %v2502 = vunpack.c.l.b16 %v2462
    %v2503 = vunpack.c.l.b16 %v2463
    %v2504 = vunpack.c.l.b16 %v2464
    %v2505 = vpack.c.b16 %v2490, %v2489
    %v2506 = vpack.c.b16 %v2492, %v2491
    %v2507 = vpack.c.b16 %v2494, %v2493
    %v2508 = vpack.c.b16 %v2496, %v2495
    %v2509 = vpack.c.b16 %v2498, %v2497
    %v2510 = vpack.c.b16 %v2500, %v2499
    %v2511 = vpack.c.b16 %v2502, %v2501
    %v2512 = vpack.c.b16 %v2504, %v2503
    %2521 = vmatprep.subr.bf16.mxu0 0
    %2522 = vmatpush1.bf16.msra.mxu0 %v2505
    %2523 = vmatprep.subr.bf16.mxu0 0
    %2524 = vmatpush1.bf16.msra.mxu0 %v2506
    %2525 = vmatprep.subr.bf16.mxu0 0
    %2526 = vmatpush1.bf16.msra.mxu0 %v2507
    %2527 = vmatprep.subr.bf16.mxu0 0
    %2528 = vmatpush1.bf16.msra.mxu0 %v2508
    %2529 = vmatprep.subr.bf16.mxu0 0
    %2530 = vmatpush1.bf16.msra.mxu0 %v2509
    %2531 = vmatprep.subr.bf16.mxu0 0
    %2532 = vmatpush1.bf16.msra.mxu0 %v2510
    %2533 = vmatprep.subr.bf16.mxu0 0
    %2534 = vmatpush1.bf16.msra.mxu0 %v2511
    %2535 = vmatprep.subr.bf16.mxu0 0
    %2536 = vmatpush1.bf16.msra.mxu0 %v2512
    %2537 = vmatprep.subr.bf16.mxu0 0
    %2538 = vmatpush1.bf16.msra.mxu0 0
    %2539 = vmatprep.subr.bf16.mxu0 0
    %2540 = vmatpush1.bf16.msra.mxu0 0
    %2541 = vmatprep.subr.bf16.mxu0 0
    %2542 = vmatpush1.bf16.msra.mxu0 0
    %2543 = vmatprep.subr.bf16.mxu0 0
    %2544 = vmatpush1.bf16.msra.mxu0 0
    %2545 = vmatprep.subr.bf16.mxu0 0
    %2546 = vmatpush1.bf16.msra.mxu0 0
    %2547 = vmatprep.subr.bf16.mxu0 0
    %2548 = vmatpush1.bf16.msra.mxu0 0
    %2549 = vmatprep.subr.bf16.mxu0 0
    %2550 = vmatpush1.bf16.msra.mxu0 0
    %2551 = vmatprep.subr.bf16.mxu0 0
    %2552 = vmatpush1.bf16.msra.mxu0 0
    %2553 = vmatprep.mubr.bf16.mxu0 0
    %2554 = vmatmul.mubr.bf16.gmra.mrb[0].mxu0 %v2466
    %v2555 = vpop.f32.mrb[0].mxu0
    %v2556 = vadd.f32 %v2471, %v2555
    %v2557 = vpop.f32.mrb[0].mxu0
    %v2558 = vpop.f32.mrb[0].mxu0
    %v2559 = vpop.f32.mrb[0].mxu0
    %2560 = vdwg.mxu0
    %v2561 = vmax.f32 %v2556, 0.0
    %2562 = vst [vmem:[#allocation2] sm:$0x3] %v2561
    %v2563 = vld [vmem:[%s11] sm:$0xf]
    %v2564 = vld [vmem:[%s11 + $0x4] sm:$0xf]
    %v2565 = vld [vmem:[%s11 + $0x8] sm:$0xf]
    %v2566 = vld [vmem:[%s11 + $0xc] sm:$0xf]
    %v2567 = vld [vmem:[%s11 + $0x10] sm:$0xf]
    %v2568 = vld [vmem:[%s11 + $0x14] sm:$0xf]
    %v2569 = vld [vmem:[%s11 + $0x18] sm:$0xf]
    %v2570 = vld [vmem:[%s11 + $0x1c] sm:$0xf]
    %v2571 = vld [vmem:[%s11 + $0x20] sm:$0xf]
    %v2572 = vld [vmem:[%s11 + $0x24] sm:$0xf]
    %v2573 = vld [vmem:[%s11 + $0x28] sm:$0xf]
    %v2574 = vld [vmem:[%s11 + $0x2c] sm:$0xf]
    %v2575 = vld [vmem:[%s11 + $0x30] sm:$0xf]
    %v2576 = vld [vmem:[%s11 + $0x34] sm:$0xf]
    %v2577 = vld [vmem:[%s11 + $0x38] sm:$0xf]
    %v2578 = vld [vmem:[%s11 + $0x3c] sm:$0xf]
    %v2579 = vld [vmem:[%s12] sm:$0x1]
    %v2580 = vpack.c.bf16 %v2561, %v2561
    %v2582 = vlaneseq
    %v2583 = vshrl.u32 %v2582, 7
    %v2584 = vsub.s32 0, %v2583
    %v2585 = vrot.slane %v2579, %v2584
    %v2603 = vunpack.c.l.b16 %v2563
    %v2604 = vunpack.c.l.b16 %v2564
    %v2605 = vunpack.c.l.b16 %v2565
    %v2606 = vunpack.c.l.b16 %v2566
    %v2607 = vunpack.c.l.b16 %v2567
    %v2608 = vunpack.c.l.b16 %v2568
    %v2609 = vunpack.c.l.b16 %v2569
    %v2610 = vunpack.c.l.b16 %v2570
    %v2611 = vunpack.c.l.b16 %v2571
    %v2612 = vunpack.c.l.b16 %v2572
    %v2613 = vunpack.c.l.b16 %v2573
    %v2614 = vunpack.c.l.b16 %v2574
    %v2615 = vunpack.c.l.b16 %v2575
    %v2616 = vunpack.c.l.b16 %v2576
    %v2617 = vunpack.c.l.b16 %v2577
    %v2618 = vunpack.c.l.b16 %v2578
    %v2619 = vpack.c.b16 %v2604, %v2603
    %v2620 = vpack.c.b16 %v2606, %v2605
    %v2621 = vpack.c.b16 %v2608, %v2607
    %v2622 = vpack.c.b16 %v2610, %v2609
    %v2623 = vpack.c.b16 %v2612, %v2611
    %v2624 = vpack.c.b16 %v2614, %v2613
    %v2625 = vpack.c.b16 %v2616, %v2615
    %v2626 = vpack.c.b16 %v2618, %v2617
    %2635 = vmatprep.subr.bf16.mxu0 0
    %2636 = vmatpush1.bf16.msra.mxu0 %v2619
    %2637 = vmatprep.subr.bf16.mxu0 0
    %2638 = vmatpush1.bf16.msra.mxu0 %v2620
    %2639 = vmatprep.subr.bf16.mxu0 0
    %2640 = vmatpush1.bf16.msra.mxu0 %v2621
    %2641 = vmatprep.subr.bf16.mxu0 0
    %2642 = vmatpush1.bf16.msra.mxu0 %v2622
    %2643 = vmatprep.subr.bf16.mxu0 0
    %2644 = vmatpush1.bf16.msra.mxu0 %v2623
    %2645 = vmatprep.subr.bf16.mxu0 0
    %2646 = vmatpush1.bf16.msra.mxu0 %v2624
    %2647 = vmatprep.subr.bf16.mxu0 0
    %2648 = vmatpush1.bf16.msra.mxu0 %v2625
    %2649 = vmatprep.subr.bf16.mxu0 0
    %2650 = vmatpush1.bf16.msra.mxu0 %v2626
    %2651 = vmatprep.subr.bf16.mxu0 0
    %2652 = vmatpush1.bf16.msra.mxu0 0
    %2653 = vmatprep.subr.bf16.mxu0 0
    %2654 = vmatpush1.bf16.msra.mxu0 0
    %2655 = vmatprep.subr.bf16.mxu0 0
    %2656 = vmatpush1.bf16.msra.mxu0 0
    %2657 = vmatprep.subr.bf16.mxu0 0
    %2658 = vmatpush1.bf16.msra.mxu0 0
    %2659 = vmatprep.subr.bf16.mxu0 0
    %2660 = vmatpush1.bf16.msra.mxu0 0
    %2661 = vmatprep.subr.bf16.mxu0 0
    %2662 = vmatpush1.bf16.msra.mxu0 0
    %2663 = vmatprep.subr.bf16.mxu0 0
    %2664 = vmatpush1.bf16.msra.mxu0 0
    %2665 = vmatprep.subr.bf16.mxu0 0
    %2666 = vmatpush1.bf16.msra.mxu0 0
    %2667 = vmatprep.mubr.bf16.mxu0 0
    %2668 = vmatmul.mubr.bf16.gmra.mrb[0].mxu0 %v2580
    %v2669 = vpop.f32.mrb[0].mxu0
    %v2670 = vadd.f32 %v2585, %v2669
    %v2671 = vpop.f32.mrb[0].mxu0
    %v2672 = vpop.f32.mrb[0].mxu0
    %v2673 = vpop.f32.mrb[0].mxu0
    %2674 = vdwg.mxu0
    %v2675 = vmax.f32 %v2670, 0.0
    %v2676 = vld [vmem:[%s13] sm:$0xff]
    %v2677 = vld [vmem:[%s13 + $0x8] sm:$0xff]
    %v2678 = vld [vmem:[%s13 + $0x10] sm:$0xff]
    %v2679 = vld [vmem:[%s13 + $0x18] sm:$0xff]
    %v2680 = vld [vmem:[%s13 + $0x20] sm:$0xff]
    %v2681 = vld [vmem:[%s13 + $0x28] sm:$0xff]
    %v2682 = vld [vmem:[%s13 + $0x30] sm:$0xff]
    %v2683 = vld [vmem:[%s13 + $0x38] sm:$0xff]
    %v2684 = vld [vmem:[%s13 + $0x40] sm:$0xff]
    %v2685 = vld [vmem:[%s13 + $0x48] sm:$0xff]
    %v2686 = vld [vmem:[%s13 + $0x50] sm:$0xff]
    %v2687 = vld [vmem:[%s13 + $0x58] sm:$0xff]
    %v2688 = vld [vmem:[%s13 + $0x60] sm:$0xff]
    %v2689 = vld [vmem:[%s13 + $0x68] sm:$0xff]
    %v2690 = vld [vmem:[%s13 + $0x70] sm:$0xff]
    %v2691 = vld [vmem:[%s13 + $0x78] sm:$0xff]
    %v2692 = vld [vmem:[%s14] sm:$0x3]
    %v2693 = vpack.c.bf16 %v2675, %v2675
    %v2695 = vlaneseq
    %v2696 = vshrl.u32 %v2695, 7
    %v2697 = vsub.s32 0, %v2696
    %v2698 = vrot.slane %v2692, %v2697
    %v2699 = vlaneseq
    %v2700 = vshrl.u32 %v2699, 7
    %v2701 = vsub.s32 1, %v2700
    %v2702 = vrot.slane %v2692, %v2701
    %v2721 = vunpack.c.l.b16 %v2676
    %v2722 = vunpack.c.h.b16 %v2676
    %v2723 = vunpack.c.l.b16 %v2677
    %v2724 = vunpack.c.h.b16 %v2677
    %v2725 = vunpack.c.l.b16 %v2678
    %v2726 = vunpack.c.h.b16 %v2678
    %v2727 = vunpack.c.l.b16 %v2679
    %v2728 = vunpack.c.h.b16 %v2679
    %v2729 = vunpack.c.l.b16 %v2680
    %v2730 = vunpack.c.h.b16 %v2680
    %v2731 = vunpack.c.l.b16 %v2681
    %v2732 = vunpack.c.h.b16 %v2681
    %v2733 = vunpack.c.l.b16 %v2682
    %v2734 = vunpack.c.h.b16 %v2682
    %v2735 = vunpack.c.l.b16 %v2683
    %v2736 = vunpack.c.h.b16 %v2683
    %v2737 = vunpack.c.l.b16 %v2684
    %v2738 = vunpack.c.h.b16 %v2684
    %v2739 = vunpack.c.l.b16 %v2685
    %v2740 = vunpack.c.h.b16 %v2685
    %v2741 = vunpack.c.l.b16 %v2686
    %v2742 = vunpack.c.h.b16 %v2686
    %v2743 = vunpack.c.l.b16 %v2687
    %v2744 = vunpack.c.h.b16 %v2687
    %v2745 = vunpack.c.l.b16 %v2688
    %v2746 = vunpack.c.h.b16 %v2688
    %v2747 = vunpack.c.l.b16 %v2689
    %v2748 = vunpack.c.h.b16 %v2689
    %v2749 = vunpack.c.l.b16 %v2690
    %v2750 = vunpack.c.h.b16 %v2690
    %v2751 = vunpack.c.l.b16 %v2691
    %v2752 = vunpack.c.h.b16 %v2691
    %v2753 = vpack.c.b16 %v2723, %v2721
    %v2754 = vpack.c.b16 %v2724, %v2722
    %v2755 = vpack.c.b16 %v2727, %v2725
    %v2756 = vpack.c.b16 %v2728, %v2726
    %v2757 = vpack.c.b16 %v2731, %v2729
    %v2758 = vpack.c.b16 %v2732, %v2730
    %v2759 = vpack.c.b16 %v2735, %v2733
    %v2760 = vpack.c.b16 %v2736, %v2734
    %v2761 = vpack.c.b16 %v2739, %v2737
    %v2762 = vpack.c.b16 %v2740, %v2738
    %v2763 = vpack.c.b16 %v2743, %v2741
    %v2764 = vpack.c.b16 %v2744, %v2742
    %v2765 = vpack.c.b16 %v2747, %v2745
    %v2766 = vpack.c.b16 %v2748, %v2746
    %v2767 = vpack.c.b16 %v2751, %v2749
    %v2768 = vpack.c.b16 %v2752, %v2750
    %2785 = vmatprep.subr.bf16.mxu0 %v2754
    %2786 = vmatpush1.bf16.msra.mxu0 %v2753
    %2787 = vmatprep.subr.bf16.mxu0 %v2756
    %2788 = vmatpush1.bf16.msra.mxu0 %v2755
    %2789 = vmatprep.subr.bf16.mxu0 %v2758
    %2790 = vmatpush1.bf16.msra.mxu0 %v2757
    %2791 = vmatprep.subr.bf16.mxu0 %v2760
    %2792 = vmatpush1.bf16.msra.mxu0 %v2759
    %2793 = vmatprep.subr.bf16.mxu0 %v2762
    %2794 = vmatpush1.bf16.msra.mxu0 %v2761
    %2795 = vmatprep.subr.bf16.mxu0 %v2764
    %2796 = vmatpush1.bf16.msra.mxu0 %v2763
    %2797 = vmatprep.subr.bf16.mxu0 %v2766
    %2798 = vmatpush1.bf16.msra.mxu0 %v2765
    %2799 = vmatprep.subr.bf16.mxu0 %v2768
    %2800 = vmatpush1.bf16.msra.mxu0 %v2767
    %2801 = vmatprep.subr.bf16.mxu0 0
    %2802 = vmatpush1.bf16.msra.mxu0 0
    %2803 = vmatprep.subr.bf16.mxu0 0
    %2804 = vmatpush1.bf16.msra.mxu0 0
    %2805 = vmatprep.subr.bf16.mxu0 0
    %2806 = vmatpush1.bf16.msra.mxu0 0
    %2807 = vmatprep.subr.bf16.mxu0 0
    %2808 = vmatpush1.bf16.msra.mxu0 0
    %2809 = vmatprep.subr.bf16.mxu0 0
    %2810 = vmatpush1.bf16.msra.mxu0 0
    %2811 = vmatprep.subr.bf16.mxu0 0
    %2812 = vmatpush1.bf16.msra.mxu0 0
    %2813 = vmatprep.subr.bf16.mxu0 0
    %2814 = vmatpush1.bf16.msra.mxu0 0
    %2815 = vmatprep.subr.bf16.mxu0 0
    %2816 = vmatpush1.bf16.msra.mxu0 0
    %2817 = vmatprep.mubr.bf16.mxu0 0
    %2818 = vmatmul.mubr.bf16.gmra.mrb[0].mxu0 %v2693
    %v2819 = vpop.f32.mrb[0].mxu0
    %v2820 = vadd.f32 %v2698, %v2819
    %v2821 = vpop.f32.mrb[0].mxu0
    %v2822 = vadd.f32 %v2702, %v2821
    %v2823 = vpop.f32.mrb[0].mxu0
    %v2824 = vpop.f32.mrb[0].mxu0
    %2825 = vdwg.mxu0
    %v2826 = vmax.f32 %v2820, 0.0
    %v2827 = vmax.f32 %v2822, 0.0
    %v2828 = vld [vmem:[%s15] sm:$0xff]
    %v2829 = vld [vmem:[%s15 + $0x8] sm:$0xf]
    %v2830 = vld [vmem:[%s15 + $0xc] sm:$0xff]
    %v2831 = vld [vmem:[%s15 + $0x14] sm:$0xf]
    %v2832 = vld [vmem:[%s15 + $0x18] sm:$0xff]
    %v2833 = vld [vmem:[%s15 + $0x20] sm:$0xf]
    %v2834 = vld [vmem:[%s15 + $0x24] sm:$0xff]
    %v2835 = vld [vmem:[%s15 + $0x2c] sm:$0xf]
    %v2836 = vld [vmem:[%s15 + $0x30] sm:$0xff]
    %v2837 = vld [vmem:[%s15 + $0x38] sm:$0xf]
    %v2838 = vld [vmem:[%s15 + $0x3c] sm:$0xff]
    %v2839 = vld [vmem:[%s15 + $0x44] sm:$0xf]
    %v2840 = vld [vmem:[%s15 + $0x48] sm:$0xff]
    %v2841 = vld [vmem:[%s15 + $0x50] sm:$0xf]
    %v2842 = vld [vmem:[%s15 + $0x54] sm:$0xff]
    %v2843 = vld [vmem:[%s15 + $0x5c] sm:$0xf]
    %v2844 = vld [vmem:[%s15 + $0x60] sm:$0xff]
    %v2845 = vld [vmem:[%s15 + $0x68] sm:$0xf]
    %v2846 = vld [vmem:[%s15 + $0x6c] sm:$0xff]
    %v2847 = vld [vmem:[%s15 + $0x74] sm:$0xf]
    %v2848 = vld [vmem:[%s15 + $0x78] sm:$0xff]
    %v2849 = vld [vmem:[%s15 + $0x80] sm:$0xf]
    %v2850 = vld [vmem:[%s15 + $0x84] sm:$0xff]
    %v2851 = vld [vmem:[%s15 + $0x8c] sm:$0xf]
    %v2852 = vld [vmem:[%s15 + $0x90] sm:$0xff]
    %v2853 = vld [vmem:[%s15 + $0x98] sm:$0xf]
    %v2854 = vld [vmem:[%s15 + $0x9c] sm:$0xff]
    %v2855 = vld [vmem:[%s15 + $0xa4] sm:$0xf]
    %v2856 = vld [vmem:[%s15 + $0xa8] sm:$0xff]
    %v2857 = vld [vmem:[%s15 + $0xb0] sm:$0xf]
    %v2858 = vld [vmem:[%s15 + $0xb4] sm:$0xff]
    %v2859 = vld [vmem:[%s15 + $0xbc] sm:$0xf]
    %v2860 = vld [vmem:[%s15 + $0xc0] sm:$0xff]
    %v2861 = vld [vmem:[%s15 + $0xc8] sm:$0xf]
    %v2862 = vld [vmem:[%s15 + $0xcc] sm:$0xff]
    %v2863 = vld [vmem:[%s15 + $0xd4] sm:$0xf]
    %v2864 = vld [vmem:[%s15 + $0xd8] sm:$0xff]
    %v2865 = vld [vmem:[%s15 + $0xe0] sm:$0xf]
    %v2866 = vld [vmem:[%s15 + $0xe4] sm:$0xff]
    %v2867 = vld [vmem:[%s15 + $0xec] sm:$0xf]
    %v2868 = vld [vmem:[%s15 + $0xf0] sm:$0xff]
    %v2869 = vld [vmem:[%s15 + $0xf8] sm:$0xf]
    %v2870 = vld [vmem:[%s15 + $0xfc] sm:$0xff]
    %v2871 = vld [vmem:[%s15 + $0x104] sm:$0xf]
    %v2872 = vld [vmem:[%s15 + $0x108] sm:$0xff]
    %v2873 = vld [vmem:[%s15 + $0x110] sm:$0xf]
    %v2874 = vld [vmem:[%s15 + $0x114] sm:$0xff]
    %v2875 = vld [vmem:[%s15 + $0x11c] sm:$0xf]
    %v2876 = vld [vmem:[%s15 + $0x120] sm:$0xff]
    %v2877 = vld [vmem:[%s15 + $0x128] sm:$0xf]
    %v2878 = vld [vmem:[%s15 + $0x12c] sm:$0xff]
    %v2879 = vld [vmem:[%s15 + $0x134] sm:$0xf]
    %v2880 = vld [vmem:[%s15 + $0x138] sm:$0xff]
    %v2881 = vld [vmem:[%s15 + $0x140] sm:$0xf]
    %v2882 = vld [vmem:[%s15 + $0x144] sm:$0xff]
    %v2883 = vld [vmem:[%s15 + $0x14c] sm:$0xf]
    %v2884 = vld [vmem:[%s15 + $0x150] sm:$0xff]
    %v2885 = vld [vmem:[%s15 + $0x158] sm:$0xf]
    %v2886 = vld [vmem:[%s15 + $0x15c] sm:$0xff]
    %v2887 = vld [vmem:[%s15 + $0x164] sm:$0xf]
    %v2888 = vld [vmem:[%s15 + $0x168] sm:$0xff]
    %v2889 = vld [vmem:[%s15 + $0x170] sm:$0xf]
    %v2890 = vld [vmem:[%s15 + $0x174] sm:$0xff]
    %v2891 = vld [vmem:[%s15 + $0x17c] sm:$0xf]
    %v2892 = vld [vmem:[%s16] sm:$0x7]
    %v2893 = vpack.c.bf16 %v2826, %v2826
    %v2894 = vpack.c.bf16 %v2827, %v2827
    %v2896 = vlaneseq
    %v2897 = vshrl.u32 %v2896, 7
    %v2898 = vsub.s32 0, %v2897
    %v2899 = vrot.slane %v2892, %v2898
    %v2900 = vlaneseq
    %v2901 = vshrl.u32 %v2900, 7
    %v2902 = vsub.s32 1, %v2901
    %v2903 = vrot.slane %v2892, %v2902
    %v2904 = vlaneseq
    %v2905 = vshrl.u32 %v2904, 7
    %v2906 = vsub.s32 2, %v2905
    %v2907 = vrot.slane %v2892, %v2906
    %v2975 = vunpack.c.l.b16 %v2828
    %v2976 = vunpack.c.h.b16 %v2828
    %v2977 = vunpack.c.l.b16 %v2829
    %v2978 = vunpack.c.l.b16 %v2830
    %v2979 = vunpack.c.h.b16 %v2830
    %v2980 = vunpack.c.l.b16 %v2831
    %v2981 = vunpack.c.l.b16 %v2832
    %v2982 = vunpack.c.h.b16 %v2832
    %v2983 = vunpack.c.l.b16 %v2833
    %v2984 = vunpack.c.l.b16 %v2834
    %v2985 = vunpack.c.h.b16 %v2834
    %v2986 = vunpack.c.l.b16 %v2835
    %v2987 = vunpack.c.l.b16 %v2836
    %v2988 = vunpack.c.h.b16 %v2836
    %v2989 = vunpack.c.l.b16 %v2837
    %v2990 = vunpack.c.l.b16 %v2838
    %v2991 = vunpack.c.h.b16 %v2838
    %v2992 = vunpack.c.l.b16 %v2839
    %v2993 = vunpack.c.l.b16 %v2840
    %v2994 = vunpack.c.h.b16 %v2840
    %v2995 = vunpack.c.l.b16 %v2841
    %v2996 = vunpack.c.l.b16 %v2842
    %v2997 = vunpack.c.h.b16 %v2842
    %v2998 = vunpack.c.l.b16 %v2843
    %v2999 = vunpack.c.l.b16 %v2844
    %v3000 = vunpack.c.h.b16 %v2844
    %v3001 = vunpack.c.l.b16 %v2845
    %v3002 = vunpack.c.l.b16 %v2846
    %v3003 = vunpack.c.h.b16 %v2846
    %v3004 = vunpack.c.l.b16 %v2847
    %v3005 = vunpack.c.l.b16 %v2848
    %v3006 = vunpack.c.h.b16 %v2848
    %v3007 = vunpack.c.l.b16 %v2849
    %v3008 = vunpack.c.l.b16 %v2850
    %v3009 = vunpack.c.h.b16 %v2850
    %v3010 = vunpack.c.l.b16 %v2851
    %v3011 = vunpack.c.l.b16 %v2852
    %v3012 = vunpack.c.h.b16 %v2852
    %v3013 = vunpack.c.l.b16 %v2853
    %v3014 = vunpack.c.l.b16 %v2854
    %v3015 = vunpack.c.h.b16 %v2854
    %v3016 = vunpack.c.l.b16 %v2855
    %v3017 = vunpack.c.l.b16 %v2856
    %v3018 = vunpack.c.h.b16 %v2856
    %v3019 = vunpack.c.l.b16 %v2857
    %v3020 = vunpack.c.l.b16 %v2858
    %v3021 = vunpack.c.h.b16 %v2858
    %v3022 = vunpack.c.l.b16 %v2859
    %v3023 = vunpack.c.l.b16 %v2860
    %v3024 = vunpack.c.h.b16 %v2860
    %v3025 = vunpack.c.l.b16 %v2861
    %v3026 = vunpack.c.l.b16 %v2862
    %v3027 = vunpack.c.h.b16 %v2862
    %v3028 = vunpack.c.l.b16 %v2863
    %v3029 = vunpack.c.l.b16 %v2864
    %v3030 = vunpack.c.h.b16 %v2864
    %v3031 = vunpack.c.l.b16 %v2865
    %v3032 = vunpack.c.l.b16 %v2866
    %v3033 = vunpack.c.h.b16 %v2866
    %v3034 = vunpack.c.l.b16 %v2867
    %v3035 = vunpack.c.l.b16 %v2868
    %v3036 = vunpack.c.h.b16 %v2868
    %v3037 = vunpack.c.l.b16 %v2869
    %v3038 = vunpack.c.l.b16 %v2870
    %v3039 = vunpack.c.h.b16 %v2870
    %v3040 = vunpack.c.l.b16 %v2871
    %v3041 = vunpack.c.l.b16 %v2872
    %v3042 = vunpack.c.h.b16 %v2872
    %v3043 = vunpack.c.l.b16 %v2873
    %v3044 = vunpack.c.l.b16 %v2874
    %v3045 = vunpack.c.h.b16 %v2874
    %v3046 = vunpack.c.l.b16 %v2875
    %v3047 = vunpack.c.l.b16 %v2876
    %v3048 = vunpack.c.h.b16 %v2876
    %v3049 = vunpack.c.l.b16 %v2877
    %v3050 = vunpack.c.l.b16 %v2878
    %v3051 = vunpack.c.h.b16 %v2878
    %v3052 = vunpack.c.l.b16 %v2879
    %v3053 = vunpack.c.l.b16 %v2880
    %v3054 = vunpack.c.h.b16 %v2880
    %v3055 = vunpack.c.l.b16 %v2881
    %v3056 = vunpack.c.l.b16 %v2882
    %v3057 = vunpack.c.h.b16 %v2882
    %v3058 = vunpack.c.l.b16 %v2883
    %v3059 = vunpack.c.l.b16 %v2884
    %v3060 = vunpack.c.h.b16 %v2884
    %v3061 = vunpack.c.l.b16 %v2885
    %v3062 = vunpack.c.l.b16 %v2886
    %v3063 = vunpack.c.h.b16 %v2886
    %v3064 = vunpack.c.l.b16 %v2887
    %v3065 = vunpack.c.l.b16 %v2888
    %v3066 = vunpack.c.h.b16 %v2888
    %v3067 = vunpack.c.l.b16 %v2889
    %v3068 = vunpack.c.l.b16 %v2890
    %v3069 = vunpack.c.h.b16 %v2890
    %v3070 = vunpack.c.l.b16 %v2891
    %v3071 = vpack.c.b16 %v2978, %v2975
    %v3072 = vpack.c.b16 %v2979, %v2976
    %v3073 = vpack.c.b16 %v2980, %v2977
    %v3074 = vpack.c.b16 %v2984, %v2981
    %v3075 = vpack.c.b16 %v2985, %v2982
    %v3076 = vpack.c.b16 %v2986, %v2983
    %v3077 = vpack.c.b16 %v2990, %v2987
    %v3078 = vpack.c.b16 %v2991, %v2988
    %v3079 = vpack.c.b16 %v2992, %v2989
    %v3080 = vpack.c.b16 %v2996, %v2993
    %v3081 = vpack.c.b16 %v2997, %v2994
    %v3082 = vpack.c.b16 %v2998, %v2995
    %v3083 = vpack.c.b16 %v3002, %v2999
    %v3084 = vpack.c.b16 %v3003, %v3000
    %v3085 = vpack.c.b16 %v3004, %v3001
    %v3086 = vpack.c.b16 %v3008, %v3005
    %v3087 = vpack.c.b16 %v3009, %v3006
    %v3088 = vpack.c.b16 %v3010, %v3007
    %v3089 = vpack.c.b16 %v3014, %v3011
    %v3090 = vpack.c.b16 %v3015, %v3012
    %v3091 = vpack.c.b16 %v3016, %v3013
    %v3092 = vpack.c.b16 %v3020, %v3017
    %v3093 = vpack.c.b16 %v3021, %v3018
    %v3094 = vpack.c.b16 %v3022, %v3019
    %v3095 = vpack.c.b16 %v3026, %v3023
    %v3096 = vpack.c.b16 %v3027, %v3024
    %v3097 = vpack.c.b16 %v3028, %v3025
    %v3098 = vpack.c.b16 %v3032, %v3029
    %v3099 = vpack.c.b16 %v3033, %v3030
    %v3100 = vpack.c.b16 %v3034, %v3031
    %v3101 = vpack.c.b16 %v3038, %v3035
    %v3102 = vpack.c.b16 %v3039, %v3036
    %v3103 = vpack.c.b16 %v3040, %v3037
    %v3104 = vpack.c.b16 %v3044, %v3041
    %v3105 = vpack.c.b16 %v3045, %v3042
    %v3106 = vpack.c.b16 %v3046, %v3043
    %v3107 = vpack.c.b16 %v3050, %v3047
    %v3108 = vpack.c.b16 %v3051, %v3048
    %v3109 = vpack.c.b16 %v3052, %v3049
    %v3110 = vpack.c.b16 %v3056, %v3053
    %v3111 = vpack.c.b16 %v3057, %v3054
    %v3112 = vpack.c.b16 %v3058, %v3055
    %v3113 = vpack.c.b16 %v3062, %v3059
    %v3114 = vpack.c.b16 %v3063, %v3060
    %v3115 = vpack.c.b16 %v3064, %v3061
    %v3116 = vpack.c.b16 %v3068, %v3065
    %v3117 = vpack.c.b16 %v3069, %v3066
    %v3118 = vpack.c.b16 %v3070, %v3067
    %3167 = vmatprep.subr.bf16.mxu0 %v3072
    %3168 = vmatpush1.bf16.msra.mxu0 %v3071
    %3169 = vmatprep.subr.bf16.mxu0 %v3075
    %3170 = vmatpush1.bf16.msra.mxu0 %v3074
    %3171 = vmatprep.subr.bf16.mxu0 %v3078
    %3172 = vmatpush1.bf16.msra.mxu0 %v3077
    %3173 = vmatprep.subr.bf16.mxu0 %v3081
    %3174 = vmatpush1.bf16.msra.mxu0 %v3080
    %3175 = vmatprep.subr.bf16.mxu0 %v3084
    %3176 = vmatpush1.bf16.msra.mxu0 %v3083
    %3177 = vmatprep.subr.bf16.mxu0 %v3087
    %3178 = vmatpush1.bf16.msra.mxu0 %v3086
    %3179 = vmatprep.subr.bf16.mxu0 %v3090
    %3180 = vmatpush1.bf16.msra.mxu0 %v3089
    %3181 = vmatprep.subr.bf16.mxu0 %v3093
    %3182 = vmatpush1.bf16.msra.mxu0 %v3092
    %3183 = vmatprep.subr.bf16.mxu0 %v3096
    %3184 = vmatpush1.bf16.msra.mxu0 %v3095
    %3185 = vmatprep.subr.bf16.mxu0 %v3099
    %3186 = vmatpush1.bf16.msra.mxu0 %v3098
    %3187 = vmatprep.subr.bf16.mxu0 %v3102
    %3188 = vmatpush1.bf16.msra.mxu0 %v3101
    %3189 = vmatprep.subr.bf16.mxu0 %v3105
    %3190 = vmatpush1.bf16.msra.mxu0 %v3104
    %3191 = vmatprep.subr.bf16.mxu0 %v3108
    %3192 = vmatpush1.bf16.msra.mxu0 %v3107
    %3193 = vmatprep.subr.bf16.mxu0 %v3111
    %3194 = vmatpush1.bf16.msra.mxu0 %v3110
    %3195 = vmatprep.subr.bf16.mxu0 %v3114
    %3196 = vmatpush1.bf16.msra.mxu0 %v3113
    %3197 = vmatprep.subr.bf16.mxu0 %v3117
    %3198 = vmatpush1.bf16.msra.mxu0 %v3116
    %3199 = vmatprep.mubr.bf16.mxu0 %v2894
    %3200 = vmatmul.mubr.bf16.gmra.mrb[0].mxu0 %v2893
    %v3201 = vpop.f32.mrb[0].mxu0
    %v3202 = vadd.f32 %v2899, %v3201
    %v3203 = vpop.f32.mrb[0].mxu0
    %v3204 = vadd.f32 %v2903, %v3203
    %v3205 = vpop.f32.mrb[0].mxu0
    %v3206 = vpop.f32.mrb[0].mxu0
    %3207 = vdwg.mxu0
    %3208 = vmatprep.subr.bf16.mxu0 0
    %3209 = vmatpush1.bf16.msra.mxu0 %v3073
    %3210 = vmatprep.subr.bf16.mxu0 0
    %3211 = vmatpush1.bf16.msra.mxu0 %v3076
    %3212 = vmatprep.subr.bf16.mxu0 0
    %3213 = vmatpush1.bf16.msra.mxu0 %v3079
    %3214 = vmatprep.subr.bf16.mxu0 0
    %3215 = vmatpush1.bf16.msra.mxu0 %v3082
    %3216 = vmatprep.subr.bf16.mxu0 0
    %3217 = vmatpush1.bf16.msra.mxu0 %v3085
    %3218 = vmatprep.subr.bf16.mxu0 0
    %3219 = vmatpush1.bf16.msra.mxu0 %v3088
    %3220 = vmatprep.subr.bf16.mxu0 0
    %3221 = vmatpush1.bf16.msra.mxu0 %v3091
    %3222 = vmatprep.subr.bf16.mxu0 0
    %3223 = vmatpush1.bf16.msra.mxu0 %v3094
    %3224 = vmatprep.subr.bf16.mxu0 0
    %3225 = vmatpush1.bf16.msra.mxu0 %v3097
    %3226 = vmatprep.subr.bf16.mxu0 0
    %3227 = vmatpush1.bf16.msra.mxu0 %v3100
    %3228 = vmatprep.subr.bf16.mxu0 0
    %3229 = vmatpush1.bf16.msra.mxu0 %v3103
    %3230 = vmatprep.subr.bf16.mxu0 0
    %3231 = vmatpush1.bf16.msra.mxu0 %v3106
    %3232 = vmatprep.subr.bf16.mxu0 0
    %3233 = vmatpush1.bf16.msra.mxu0 %v3109
    %3234 = vmatprep.subr.bf16.mxu0 0
    %3235 = vmatpush1.bf16.msra.mxu0 %v3112
    %3236 = vmatprep.subr.bf16.mxu0 0
    %3237 = vmatpush1.bf16.msra.mxu0 %v3115
    %3238 = vmatprep.subr.bf16.mxu0 0
    %3239 = vmatpush1.bf16.msra.mxu0 %v3118
    %3240 = vmatprep.mubr.bf16.mxu0 %v2894
    %3241 = vmatmul.mubr.bf16.gmra.mrb[0].mxu0 %v2893
    %v3242 = vpop.f32.mrb[0].mxu0
    %v3243 = vadd.f32 %v2907, %v3242
    %v3244 = vpop.f32.mrb[0].mxu0
    %v3245 = vpop.f32.mrb[0].mxu0
    %v3246 = vpop.f32.mrb[0].mxu0
    %3247 = vdwg.mxu0
    %v3248 = vmax.f32 %v3202, 0.0
    %v3249 = vmax.f32 %v3204, 0.0
    %v3250 = vmax.f32 %v3243, 0.0
    %v3251 = vld [vmem:[%s17] sm:$0xff]
    %v3252 = vld [vmem:[%s17 + $0x8] sm:$0xff]
    %v3253 = vld [vmem:[%s17 + $0x10] sm:$0xff]
    %v3254 = vld [vmem:[%s17 + $0x18] sm:$0xff]
    %v3255 = vld [vmem:[%s17 + $0x20] sm:$0xff]
    %v3256 = vld [vmem:[%s17 + $0x28] sm:$0xff]
    %v3257 = vld [vmem:[%s17 + $0x30] sm:$0xff]
    %v3258 = vld [vmem:[%s17 + $0x38] sm:$0xff]
    %v3259 = vld [vmem:[%s17 + $0x40] sm:$0xff]
    %v3260 = vld [vmem:[%s17 + $0x48] sm:$0xff]
    %v3261 = vld [vmem:[%s17 + $0x50] sm:$0xff]
    %v3262 = vld [vmem:[%s17 + $0x58] sm:$0xff]
    %v3263 = vld [vmem:[%s17 + $0x60] sm:$0xff]
    %v3264 = vld [vmem:[%s17 + $0x68] sm:$0xff]
    %v3265 = vld [vmem:[%s17 + $0x70] sm:$0xff]
    %v3266 = vld [vmem:[%s17 + $0x78] sm:$0xff]
    %v3267 = vld [vmem:[%s17 + $0x80] sm:$0xff]
    %v3268 = vld [vmem:[%s17 + $0x88] sm:$0xff]
    %v3269 = vld [vmem:[%s17 + $0x90] sm:$0xff]
    %v3270 = vld [vmem:[%s17 + $0x98] sm:$0xff]
    %v3271 = vld [vmem:[%s17 + $0xa0] sm:$0xff]
    %v3272 = vld [vmem:[%s17 + $0xa8] sm:$0xff]
    %v3273 = vld [vmem:[%s17 + $0xb0] sm:$0xff]
    %v3274 = vld [vmem:[%s17 + $0xb8] sm:$0xff]
    %v3275 = vld [vmem:[%s17 + $0xc0] sm:$0xff]
    %v3276 = vld [vmem:[%s17 + $0xc8] sm:$0xff]
    %v3277 = vld [vmem:[%s17 + $0xd0] sm:$0xff]
    %v3278 = vld [vmem:[%s17 + $0xd8] sm:$0xff]
    %v3279 = vld [vmem:[%s17 + $0xe0] sm:$0xff]
    %v3280 = vld [vmem:[%s17 + $0xe8] sm:$0xff]
    %v3281 = vld [vmem:[%s17 + $0xf0] sm:$0xff]
    %v3282 = vld [vmem:[%s17 + $0xf8] sm:$0xff]
    %v3283 = vld [vmem:[%s17 + $0x100] sm:$0xff]
    %v3284 = vld [vmem:[%s17 + $0x108] sm:$0xff]
    %v3285 = vld [vmem:[%s17 + $0x110] sm:$0xff]
    %v3286 = vld [vmem:[%s17 + $0x118] sm:$0xff]
    %v3287 = vld [vmem:[%s17 + $0x120] sm:$0xff]
    %v3288 = vld [vmem:[%s17 + $0x128] sm:$0xff]
    %v3289 = vld [vmem:[%s17 + $0x130] sm:$0xff]
    %v3290 = vld [vmem:[%s17 + $0x138] sm:$0xff]
    %v3291 = vld [vmem:[%s17 + $0x140] sm:$0xff]
    %v3292 = vld [vmem:[%s17 + $0x148] sm:$0xff]
    %v3293 = vld [vmem:[%s17 + $0x150] sm:$0xff]
    %v3294 = vld [vmem:[%s17 + $0x158] sm:$0xff]
    %v3295 = vld [vmem:[%s17 + $0x160] sm:$0xff]
    %v3296 = vld [vmem:[%s17 + $0x168] sm:$0xff]
    %v3297 = vld [vmem:[%s17 + $0x170] sm:$0xff]
    %v3298 = vld [vmem:[%s17 + $0x178] sm:$0xff]
    %v3299 = vld [vmem:[%s17 + $0x180] sm:$0xff]
    %v3300 = vld [vmem:[%s17 + $0x188] sm:$0xff]
    %v3301 = vld [vmem:[%s17 + $0x190] sm:$0xff]
    %v3302 = vld [vmem:[%s17 + $0x198] sm:$0xff]
    %v3303 = vld [vmem:[%s17 + $0x1a0] sm:$0xff]
    %v3304 = vld [vmem:[%s17 + $0x1a8] sm:$0xff]
    %v3305 = vld [vmem:[%s17 + $0x1b0] sm:$0xff]
    %v3306 = vld [vmem:[%s17 + $0x1b8] sm:$0xff]
    %v3307 = vld [vmem:[%s17 + $0x1c0] sm:$0xff]
    %v3308 = vld [vmem:[%s17 + $0x1c8] sm:$0xff]
    %v3309 = vld [vmem:[%s17 + $0x1d0] sm:$0xff]
    %v3310 = vld [vmem:[%s17 + $0x1d8] sm:$0xff]
    %v3311 = vld [vmem:[%s17 + $0x1e0] sm:$0xff]
    %v3312 = vld [vmem:[%s17 + $0x1e8] sm:$0xff]
    %v3313 = vld [vmem:[%s17 + $0x1f0] sm:$0xff]
    %v3314 = vld [vmem:[%s17 + $0x1f8] sm:$0xff]
    %v3315 = vld [vmem:[%s17 + $0x200] sm:$0xff]
    %v3316 = vld [vmem:[%s17 + $0x208] sm:$0xff]
    %v3317 = vld [vmem:[%s17 + $0x210] sm:$0xff]
    %v3318 = vld [vmem:[%s17 + $0x218] sm:$0xff]
    %v3319 = vld [vmem:[%s17 + $0x220] sm:$0xff]
    %v3320 = vld [vmem:[%s17 + $0x228] sm:$0xff]
    %v3321 = vld [vmem:[%s17 + $0x230] sm:$0xff]
    %v3322 = vld [vmem:[%s17 + $0x238] sm:$0xff]
    %v3323 = vld [vmem:[%s17 + $0x240] sm:$0xff]
    %v3324 = vld [vmem:[%s17 + $0x248] sm:$0xff]
    %v3325 = vld [vmem:[%s17 + $0x250] sm:$0xff]
    %v3326 = vld [vmem:[%s17 + $0x258] sm:$0xff]
    %v3327 = vld [vmem:[%s17 + $0x260] sm:$0xff]
    %v3328 = vld [vmem:[%s17 + $0x268] sm:$0xff]
    %v3329 = vld [vmem:[%s17 + $0x270] sm:$0xff]
    %v3330 = vld [vmem:[%s17 + $0x278] sm:$0xff]
    %v3331 = vld [vmem:[%s17 + $0x280] sm:$0xff]
    %v3332 = vld [vmem:[%s17 + $0x288] sm:$0xff]
    %v3333 = vld [vmem:[%s17 + $0x290] sm:$0xff]
    %v3334 = vld [vmem:[%s17 + $0x298] sm:$0xff]
    %v3335 = vld [vmem:[%s17 + $0x2a0] sm:$0xff]
    %v3336 = vld [vmem:[%s17 + $0x2a8] sm:$0xff]
    %v3337 = vld [vmem:[%s17 + $0x2b0] sm:$0xff]
    %v3338 = vld [vmem:[%s17 + $0x2b8] sm:$0xff]
    %v3339 = vld [vmem:[%s17 + $0x2c0] sm:$0xff]
    %v3340 = vld [vmem:[%s17 + $0x2c8] sm:$0xff]
    %v3341 = vld [vmem:[%s17 + $0x2d0] sm:$0xff]
    %v3342 = vld [vmem:[%s17 + $0x2d8] sm:$0xff]
    %v3343 = vld [vmem:[%s17 + $0x2e0] sm:$0xff]
    %v3344 = vld [vmem:[%s17 + $0x2e8] sm:$0xff]
    %v3345 = vld [vmem:[%s17 + $0x2f0] sm:$0xff]
    %v3346 = vld [vmem:[%s17 + $0x2f8] sm:$0xff]
    %v3347 = vld [vmem:[%s18] sm:$0xf]
    %v3348 = vpack.c.bf16 %v3248, %v3248
    %v3349 = vpack.c.bf16 %v3249, %v3249
    %v3350 = vpack.c.bf16 %v3250, %v3250
    %v3352 = vlaneseq
    %v3353 = vshrl.u32 %v3352, 7
    %v3354 = vsub.s32 0, %v3353
    %v3355 = vrot.slane %v3347, %v3354
    %v3356 = vlaneseq
    %v3357 = vshrl.u32 %v3356, 7
    %v3358 = vsub.s32 1, %v3357
    %v3359 = vrot.slane %v3347, %v3358
    %v3360 = vlaneseq
    %v3361 = vshrl.u32 %v3360, 7
    %v3362 = vsub.s32 2, %v3361
    %v3363 = vrot.slane %v3347, %v3362
    %v3364 = vlaneseq
    %v3365 = vshrl.u32 %v3364, 7
    %v3366 = vsub.s32 3, %v3365
    %v3367 = vrot.slane %v3347, %v3366
    %v3468 = vunpack.c.l.b16 %v3251
    %v3469 = vunpack.c.h.b16 %v3251
    %v3470 = vunpack.c.l.b16 %v3252
    %v3471 = vunpack.c.h.b16 %v3252
    %v3472 = vunpack.c.l.b16 %v3253
    %v3473 = vunpack.c.h.b16 %v3253
    %v3474 = vunpack.c.l.b16 %v3254
    %v3475 = vunpack.c.h.b16 %v3254
    %v3476 = vunpack.c.l.b16 %v3255
    %v3477 = vunpack.c.h.b16 %v3255
    %v3478 = vunpack.c.l.b16 %v3256
    %v3479 = vunpack.c.h.b16 %v3256
    %v3480 = vunpack.c.l.b16 %v3257
    %v3481 = vunpack.c.h.b16 %v3257
    %v3482 = vunpack.c.l.b16 %v3258
    %v3483 = vunpack.c.h.b16 %v3258
    %v3484 = vunpack.c.l.b16 %v3259
    %v3485 = vunpack.c.h.b16 %v3259
    %v3486 = vunpack.c.l.b16 %v3260
    %v3487 = vunpack.c.h.b16 %v3260
    %v3488 = vunpack.c.l.b16 %v3261
    %v3489 = vunpack.c.h.b16 %v3261
    %v3490 = vunpack.c.l.b16 %v3262
    %v3491 = vunpack.c.h.b16 %v3262
    %v3492 = vunpack.c.l.b16 %v3263
    %v3493 = vunpack.c.h.b16 %v3263
    %v3494 = vunpack.c.l.b16 %v3264
    %v3495 = vunpack.c.h.b16 %v3264
    %v3496 = vunpack.c.l.b16 %v3265
    %v3497 = vunpack.c.h.b16 %v3265
    %v3498 = vunpack.c.l.b16 %v3266
    %v3499 = vunpack.c.h.b16 %v3266
    %v3500 = vunpack.c.l.b16 %v3267
    %v3501 = vunpack.c.h.b16 %v3267
    %v3502 = vunpack.c.l.b16 %v3268
    %v3503 = vunpack.c.h.b16 %v3268
    %v3504 = vunpack.c.l.b16 %v3269
    %v3505 = vunpack.c.h.b16 %v3269
    %v3506 = vunpack.c.l.b16 %v3270
    %v3507 = vunpack.c.h.b16 %v3270
    %v3508 = vunpack.c.l.b16 %v3271
    %v3509 = vunpack.c.h.b16 %v3271
    %v3510 = vunpack.c.l.b16 %v3272
    %v3511 = vunpack.c.h.b16 %v3272
    %v3512 = vunpack.c.l.b16 %v3273
    %v3513 = vunpack.c.h.b16 %v3273
    %v3514 = vunpack.c.l.b16 %v3274
    %v3515 = vunpack.c.h.b16 %v3274
    %v3516 = vunpack.c.l.b16 %v3275
    %v3517 = vunpack.c.h.b16 %v3275
    %v3518 = vunpack.c.l.b16 %v3276
    %v3519 = vunpack.c.h.b16 %v3276
    %v3520 = vunpack.c.l.b16 %v3277
    %v3521 = vunpack.c.h.b16 %v3277
    %v3522 = vunpack.c.l.b16 %v3278
    %v3523 = vunpack.c.h.b16 %v3278
    %v3524 = vunpack.c.l.b16 %v3279
    %v3525 = vunpack.c.h.b16 %v3279
    %v3526 = vunpack.c.l.b16 %v3280
    %v3527 = vunpack.c.h.b16 %v3280
    %v3528 = vunpack.c.l.b16 %v3281
    %v3529 = vunpack.c.h.b16 %v3281
    %v3530 = vunpack.c.l.b16 %v3282
    %v3531 = vunpack.c.h.b16 %v3282
    %v3532 = vunpack.c.l.b16 %v3283
    %v3533 = vunpack.c.h.b16 %v3283
    %v3534 = vunpack.c.l.b16 %v3284
    %v3535 = vunpack.c.h.b16 %v3284
    %v3536 = vunpack.c.l.b16 %v3285
    %v3537 = vunpack.c.h.b16 %v3285
    %v3538 = vunpack.c.l.b16 %v3286
    %v3539 = vunpack.c.h.b16 %v3286
    %v3540 = vunpack.c.l.b16 %v3287
    %v3541 = vunpack.c.h.b16 %v3287
    %v3542 = vunpack.c.l.b16 %v3288
    %v3543 = vunpack.c.h.b16 %v3288
    %v3544 = vunpack.c.l.b16 %v3289
    %v3545 = vunpack.c.h.b16 %v3289
    %v3546 = vunpack.c.l.b16 %v3290
    %v3547 = vunpack.c.h.b16 %v3290
    %v3548 = vunpack.c.l.b16 %v3291
    %v3549 = vunpack.c.h.b16 %v3291
    %v3550 = vunpack.c.l.b16 %v3292
    %v3551 = vunpack.c.h.b16 %v3292
    %v3552 = vunpack.c.l.b16 %v3293
    %v3553 = vunpack.c.h.b16 %v3293
    %v3554 = vunpack.c.l.b16 %v3294
    %v3555 = vunpack.c.h.b16 %v3294
    %v3556 = vunpack.c.l.b16 %v3295
    %v3557 = vunpack.c.h.b16 %v3295
    %v3558 = vunpack.c.l.b16 %v3296
    %v3559 = vunpack.c.h.b16 %v3296
    %v3560 = vunpack.c.l.b16 %v3297
    %v3561 = vunpack.c.h.b16 %v3297
    %v3562 = vunpack.c.l.b16 %v3298
    %v3563 = vunpack.c.h.b16 %v3298
    %v3564 = vunpack.c.l.b16 %v3299
    %v3565 = vunpack.c.h.b16 %v3299
    %v3566 = vunpack.c.l.b16 %v3300
    %v3567 = vunpack.c.h.b16 %v3300
    %v3568 = vunpack.c.l.b16 %v3301
    %v3569 = vunpack.c.h.b16 %v3301
    %v3570 = vunpack.c.l.b16 %v3302
    %v3571 = vunpack.c.h.b16 %v3302
    %v3572 = vunpack.c.l.b16 %v3303
    %v3573 = vunpack.c.h.b16 %v3303
    %v3574 = vunpack.c.l.b16 %v3304
    %v3575 = vunpack.c.h.b16 %v3304
    %v3576 = vunpack.c.l.b16 %v3305
    %v3577 = vunpack.c.h.b16 %v3305
    %v3578 = vunpack.c.l.b16 %v3306
    %v3579 = vunpack.c.h.b16 %v3306
    %v3580 = vunpack.c.l.b16 %v3307
    %v3581 = vunpack.c.h.b16 %v3307
    %v3582 = vunpack.c.l.b16 %v3308
    %v3583 = vunpack.c.h.b16 %v3308
    %v3584 = vunpack.c.l.b16 %v3309
    %v3585 = vunpack.c.h.b16 %v3309
    %v3586 = vunpack.c.l.b16 %v3310
    %v3587 = vunpack.c.h.b16 %v3310
    %v3588 = vunpack.c.l.b16 %v3311
    %v3589 = vunpack.c.h.b16 %v3311
    %v3590 = vunpack.c.l.b16 %v3312
    %v3591 = vunpack.c.h.b16 %v3312
    %v3592 = vunpack.c.l.b16 %v3313
    %v3593 = vunpack.c.h.b16 %v3313
    %v3594 = vunpack.c.l.b16 %v3314
    %v3595 = vunpack.c.h.b16 %v3314
    %v3596 = vunpack.c.l.b16 %v3315
    %v3597 = vunpack.c.h.b16 %v3315
    %v3598 = vunpack.c.l.b16 %v3316
    %v3599 = vunpack.c.h.b16 %v3316
    %v3600 = vunpack.c.l.b16 %v3317
    %v3601 = vunpack.c.h.b16 %v3317
    %v3602 = vunpack.c.l.b16 %v3318
    %v3603 = vunpack.c.h.b16 %v3318
    %v3604 = vunpack.c.l.b16 %v3319
    %v3605 = vunpack.c.h.b16 %v3319
    %v3606 = vunpack.c.l.b16 %v3320
    %v3607 = vunpack.c.h.b16 %v3320
    %v3608 = vunpack.c.l.b16 %v3321
    %v3609 = vunpack.c.h.b16 %v3321
    %v3610 = vunpack.c.l.b16 %v3322
    %v3611 = vunpack.c.h.b16 %v3322
    %v3612 = vunpack.c.l.b16 %v3323
    %v3613 = vunpack.c.h.b16 %v3323
    %v3614 = vunpack.c.l.b16 %v3324
    %v3615 = vunpack.c.h.b16 %v3324
    %v3616 = vunpack.c.l.b16 %v3325
    %v3617 = vunpack.c.h.b16 %v3325
    %v3618 = vunpack.c.l.b16 %v3326
    %v3619 = vunpack.c.h.b16 %v3326
    %v3620 = vunpack.c.l.b16 %v3327
    %v3621 = vunpack.c.h.b16 %v3327
    %v3622 = vunpack.c.l.b16 %v3328
    %v3623 = vunpack.c.h.b16 %v3328
    %v3624 = vunpack.c.l.b16 %v3329
    %v3625 = vunpack.c.h.b16 %v3329
    %v3626 = vunpack.c.l.b16 %v3330
    %v3627 = vunpack.c.h.b16 %v3330
    %v3628 = vunpack.c.l.b16 %v3331
    %v3629 = vunpack.c.h.b16 %v3331
    %v3630 = vunpack.c.l.b16 %v3332
    %v3631 = vunpack.c.h.b16 %v3332
    %v3632 = vunpack.c.l.b16 %v3333
    %v3633 = vunpack.c.h.b16 %v3333
    %v3634 = vunpack.c.l.b16 %v3334
    %v3635 = vunpack.c.h.b16 %v3334
    %v3636 = vunpack.c.l.b16 %v3335
    %v3637 = vunpack.c.h.b16 %v3335
    %v3638 = vunpack.c.l.b16 %v3336
    %v3639 = vunpack.c.h.b16 %v3336
    %v3640 = vunpack.c.l.b16 %v3337
    %v3641 = vunpack.c.h.b16 %v3337
    %v3642 = vunpack.c.l.b16 %v3338
    %v3643 = vunpack.c.h.b16 %v3338
    %v3644 = vunpack.c.l.b16 %v3339
    %v3645 = vunpack.c.h.b16 %v3339
    %v3646 = vunpack.c.l.b16 %v3340
    %v3647 = vunpack.c.h.b16 %v3340
    %v3648 = vunpack.c.l.b16 %v3341
    %v3649 = vunpack.c.h.b16 %v3341
    %v3650 = vunpack.c.l.b16 %v3342
    %v3651 = vunpack.c.h.b16 %v3342
    %v3652 = vunpack.c.l.b16 %v3343
    %v3653 = vunpack.c.h.b16 %v3343
    %v3654 = vunpack.c.l.b16 %v3344
    %v3655 = vunpack.c.h.b16 %v3344
    %v3656 = vunpack.c.l.b16 %v3345
    %v3657 = vunpack.c.h.b16 %v3345
    %v3658 = vunpack.c.l.b16 %v3346
    %v3659 = vunpack.c.h.b16 %v3346
    %v3660 = vpack.c.b16 %v3472, %v3468
    %v3661 = vpack.c.b16 %v3473, %v3469
    %v3662 = vpack.c.b16 %v3474, %v3470
    %v3663 = vpack.c.b16 %v3475, %v3471
    %v3664 = vpack.c.b16 %v3480, %v3476
    %v3665 = vpack.c.b16 %v3481, %v3477
    %v3666 = vpack.c.b16 %v3482, %v3478
    %v3667 = vpack.c.b16 %v3483, %v3479
    %v3668 = vpack.c.b16 %v3488, %v3484
    %v3669 = vpack.c.b16 %v3489, %v3485
    %v3670 = vpack.c.b16 %v3490, %v3486
    %v3671 = vpack.c.b16 %v3491, %v3487
    %v3672 = vpack.c.b16 %v3496, %v3492
    %v3673 = vpack.c.b16 %v3497, %v3493
    %v3674 = vpack.c.b16 %v3498, %v3494
    %v3675 = vpack.c.b16 %v3499, %v3495
    %v3676 = vpack.c.b16 %v3504, %v3500
    %v3677 = vpack.c.b16 %v3505, %v3501
    %v3678 = vpack.c.b16 %v3506, %v3502
    %v3679 = vpack.c.b16 %v3507, %v3503
    %v3680 = vpack.c.b16 %v3512, %v3508
    %v3681 = vpack.c.b16 %v3513, %v3509
    %v3682 = vpack.c.b16 %v3514, %v3510
    %v3683 = vpack.c.b16 %v3515, %v3511
    %v3684 = vpack.c.b16 %v3520, %v3516
    %v3685 = vpack.c.b16 %v3521, %v3517
    %v3686 = vpack.c.b16 %v3522, %v3518
    %v3687 = vpack.c.b16 %v3523, %v3519
    %v3688 = vpack.c.b16 %v3528, %v3524
    %v3689 = vpack.c.b16 %v3529, %v3525
    %v3690 = vpack.c.b16 %v3530, %v3526
    %v3691 = vpack.c.b16 %v3531, %v3527
    %v3692 = vpack.c.b16 %v3536, %v3532
    %v3693 = vpack.c.b16 %v3537, %v3533
    %v3694 = vpack.c.b16 %v3538, %v3534
    %v3695 = vpack.c.b16 %v3539, %v3535
    %v3696 = vpack.c.b16 %v3544, %v3540
    %v3697 = vpack.c.b16 %v3545, %v3541
    %v3698 = vpack.c.b16 %v3546, %v3542
    %v3699 = vpack.c.b16 %v3547, %v3543
    %v3700 = vpack.c.b16 %v3552, %v3548
    %v3701 = vpack.c.b16 %v3553, %v3549
    %v3702 = vpack.c.b16 %v3554, %v3550
    %v3703 = vpack.c.b16 %v3555, %v3551
    %v3704 = vpack.c.b16 %v3560, %v3556
    %v3705 = vpack.c.b16 %v3561, %v3557
    %v3706 = vpack.c.b16 %v3562, %v3558
    %v3707 = vpack.c.b16 %v3563, %v3559
    %v3708 = vpack.c.b16 %v3568, %v3564
    %v3709 = vpack.c.b16 %v3569, %v3565
    %v3710 = vpack.c.b16 %v3570, %v3566
    %v3711 = vpack.c.b16 %v3571, %v3567
    %v3712 = vpack.c.b16 %v3576, %v3572
    %v3713 = vpack.c.b16 %v3577, %v3573
    %v3714 = vpack.c.b16 %v3578, %v3574
    %v3715 = vpack.c.b16 %v3579, %v3575
    %v3716 = vpack.c.b16 %v3584, %v3580
    %v3717 = vpack.c.b16 %v3585, %v3581
    %v3718 = vpack.c.b16 %v3586, %v3582
    %v3719 = vpack.c.b16 %v3587, %v3583
    %v3720 = vpack.c.b16 %v3592, %v3588
    %v3721 = vpack.c.b16 %v3593, %v3589
    %v3722 = vpack.c.b16 %v3594, %v3590
    %v3723 = vpack.c.b16 %v3595, %v3591
    %v3724 = vpack.c.b16 %v3600, %v3596
    %v3725 = vpack.c.b16 %v3601, %v3597
    %v3726 = vpack.c.b16 %v3602, %v3598
    %v3727 = vpack.c.b16 %v3603, %v3599
    %v3728 = vpack.c.b16 %v3608, %v3604
    %v3729 = vpack.c.b16 %v3609, %v3605
    %v3730 = vpack.c.b16 %v3610, %v3606
    %v3731 = vpack.c.b16 %v3611, %v3607
    %v3732 = vpack.c.b16 %v3616, %v3612
    %v3733 = vpack.c.b16 %v3617, %v3613
    %v3734 = vpack.c.b16 %v3618, %v3614
    %v3735 = vpack.c.b16 %v3619, %v3615
    %v3736 = vpack.c.b16 %v3624, %v3620
    %v3737 = vpack.c.b16 %v3625, %v3621
    %v3738 = vpack.c.b16 %v3626, %v3622
    %v3739 = vpack.c.b16 %v3627, %v3623
    %v3740 = vpack.c.b16 %v3632, %v3628
    %v3741 = vpack.c.b16 %v3633, %v3629
    %v3742 = vpack.c.b16 %v3634, %v3630
    %v3743 = vpack.c.b16 %v3635, %v3631
    %v3744 = vpack.c.b16 %v3640, %v3636
    %v3745 = vpack.c.b16 %v3641, %v3637
    %v3746 = vpack.c.b16 %v3642, %v3638
    %v3747 = vpack.c.b16 %v3643, %v3639
    %v3748 = vpack.c.b16 %v3648, %v3644
    %v3749 = vpack.c.b16 %v3649, %v3645
    %v3750 = vpack.c.b16 %v3650, %v3646
    %v3751 = vpack.c.b16 %v3651, %v3647
    %v3752 = vpack.c.b16 %v3656, %v3652
    %v3753 = vpack.c.b16 %v3657, %v3653
    %v3754 = vpack.c.b16 %v3658, %v3654
    %v3755 = vpack.c.b16 %v3659, %v3655
    %3852 = vmatprep.subr.bf16.mxu0 %v3661
    %3853 = vmatpush1.bf16.msra.mxu0 %v3660
    %3854 = vmatprep.subr.bf16.mxu0 %v3665
    %3855 = vmatpush1.bf16.msra.mxu0 %v3664
    %3856 = vmatprep.subr.bf16.mxu0 %v3669
    %3857 = vmatpush1.bf16.msra.mxu0 %v3668
    %3858 = vmatprep.subr.bf16.mxu0 %v3673
    %3859 = vmatpush1.bf16.msra.mxu0 %v3672
    %3860 = vmatprep.subr.bf16.mxu0 %v3677
    %3861 = vmatpush1.bf16.msra.mxu0 %v3676
    %3862 = vmatprep.subr.bf16.mxu0 %v3681
    %3863 = vmatpush1.bf16.msra.mxu0 %v3680
    %3864 = vmatprep.subr.bf16.mxu0 %v3685
    %3865 = vmatpush1.bf16.msra.mxu0 %v3684
    %3866 = vmatprep.subr.bf16.mxu0 %v3689
    %3867 = vmatpush1.bf16.msra.mxu0 %v3688
    %3868 = vmatprep.subr.bf16.mxu0 %v3693
    %3869 = vmatpush1.bf16.msra.mxu0 %v3692
    %3870 = vmatprep.subr.bf16.mxu0 %v3697
    %3871 = vmatpush1.bf16.msra.mxu0 %v3696
    %3872 = vmatprep.subr.bf16.mxu0 %v3701
    %3873 = vmatpush1.bf16.msra.mxu0 %v3700
    %3874 = vmatprep.subr.bf16.mxu0 %v3705
    %3875 = vmatpush1.bf16.msra.mxu0 %v3704
    %3876 = vmatprep.subr.bf16.mxu0 %v3709
    %3877 = vmatpush1.bf16.msra.mxu0 %v3708
    %3878 = vmatprep.subr.bf16.mxu0 %v3713
    %3879 = vmatpush1.bf16.msra.mxu0 %v3712
    %3880 = vmatprep.subr.bf16.mxu0 %v3717
    %3881 = vmatpush1.bf16.msra.mxu0 %v3716
    %3882 = vmatprep.subr.bf16.mxu0 %v3721
    %3883 = vmatpush1.bf16.msra.mxu0 %v3720
    %3884 = vmatprep.mubr.bf16.mxu0 %v3349
    %3885 = vmatmul.mubr.bf16.gmra.mrb[0].mxu0 %v3348
    %v3886 = vpop.f32.mrb[0].mxu0
    %v3887 = vadd.f32 %v3355, %v3886
    %v3888 = vpop.f32.mrb[0].mxu0
    %v3889 = vadd.f32 %v3359, %v3888
    %v3890 = vpop.f32.mrb[0].mxu0
    %v3891 = vpop.f32.mrb[0].mxu0
    %3892 = vdwg.mxu0
    %3893 = vmatprep.subr.bf16.mxu0 %v3725
    %3894 = vmatpush1.bf16.msra.mxu0 %v3724
    %3895 = vmatprep.subr.bf16.mxu0 %v3729
    %3896 = vmatpush1.bf16.msra.mxu0 %v3728
    %3897 = vmatprep.subr.bf16.mxu0 %v3733
    %3898 = vmatpush1.bf16.msra.mxu0 %v3732
    %3899 = vmatprep.subr.bf16.mxu0 %v3737
    %3900 = vmatpush1.bf16.msra.mxu0 %v3736
    %3901 = vmatprep.subr.bf16.mxu0 %v3741
    %3902 = vmatpush1.bf16.msra.mxu0 %v3740
    %3903 = vmatprep.subr.bf16.mxu0 %v3745
    %3904 = vmatpush1.bf16.msra.mxu0 %v3744
    %3905 = vmatprep.subr.bf16.mxu0 %v3749
    %3906 = vmatpush1.bf16.msra.mxu0 %v3748
    %3907 = vmatprep.subr.bf16.mxu0 %v3753
    %3908 = vmatpush1.bf16.msra.mxu0 %v3752
    %3909 = vmatprep.subr.bf16.mxu0 0
    %3910 = vmatpush1.bf16.msra.mxu0 0
    %3911 = vmatprep.subr.bf16.mxu0 0
    %3912 = vmatpush1.bf16.msra.mxu0 0
    %3913 = vmatprep.subr.bf16.mxu0 0
    %3914 = vmatpush1.bf16.msra.mxu0 0
    %3915 = vmatprep.subr.bf16.mxu0 0
    %3916 = vmatpush1.bf16.msra.mxu0 0
    %3917 = vmatprep.subr.bf16.mxu0 0
    %3918 = vmatpush1.bf16.msra.mxu0 0
    %3919 = vmatprep.subr.bf16.mxu0 0
    %3920 = vmatpush1.bf16.msra.mxu0 0
    %3921 = vmatprep.subr.bf16.mxu0 0
    %3922 = vmatpush1.bf16.msra.mxu0 0
    %3923 = vmatprep.subr.bf16.mxu0 0
    %3924 = vmatpush1.bf16.msra.mxu0 0
    %3925 = vmatprep.mubr.bf16.mxu0 0
    %3926 = vmatmul.mubr.bf16.gmra.mrb[0].mxu0 %v3350
    %v3927 = vpop.f32.mrb[0].mxu0
    %v3928 = vadd.f32 %v3887, %v3927
    %v3929 = vpop.f32.mrb[0].mxu0
    %v3930 = vadd.f32 %v3889, %v3929
    %v3931 = vpop.f32.mrb[0].mxu0
    %v3932 = vpop.f32.mrb[0].mxu0
    %3933 = vdwg.mxu0
    %3934 = vmatprep.subr.bf16.mxu0 %v3663
    %3935 = vmatpush1.bf16.msra.mxu0 %v3662
    %3936 = vmatprep.subr.bf16.mxu0 %v3667
    %3937 = vmatpush1.bf16.msra.mxu0 %v3666
    %3938 = vmatprep.subr.bf16.mxu0 %v3671
    %3939 = vmatpush1.bf16.msra.mxu0 %v3670
    %3940 = vmatprep.subr.bf16.mxu0 %v3675
    %3941 = vmatpush1.bf16.msra.mxu0 %v3674
    %3942 = vmatprep.subr.bf16.mxu0 %v3679
    %3943 = vmatpush1.bf16.msra.mxu0 %v3678
    %3944 = vmatprep.subr.bf16.mxu0 %v3683
    %3945 = vmatpush1.bf16.msra.mxu0 %v3682
    %3946 = vmatprep.subr.bf16.mxu0 %v3687
    %3947 = vmatpush1.bf16.msra.mxu0 %v3686
    %3948 = vmatprep.subr.bf16.mxu0 %v3691
    %3949 = vmatpush1.bf16.msra.mxu0 %v3690
    %3950 = vmatprep.subr.bf16.mxu0 %v3695
    %3951 = vmatpush1.bf16.msra.mxu0 %v3694
    %3952 = vmatprep.subr.bf16.mxu0 %v3699
    %3953 = vmatpush1.bf16.msra.mxu0 %v3698
    %3954 = vmatprep.subr.bf16.mxu0 %v3703
    %3955 = vmatpush1.bf16.msra.mxu0 %v3702
    %3956 = vmatprep.subr.bf16.mxu0 %v3707
    %3957 = vmatpush1.bf16.msra.mxu0 %v3706
    %3958 = vmatprep.subr.bf16.mxu0 %v3711
    %3959 = vmatpush1.bf16.msra.mxu0 %v3710
    %3960 = vmatprep.subr.bf16.mxu0 %v3715
    %3961 = vmatpush1.bf16.msra.mxu0 %v3714
    %3962 = vmatprep.subr.bf16.mxu0 %v3719
    %3963 = vmatpush1.bf16.msra.mxu0 %v3718
    %3964 = vmatprep.subr.bf16.mxu0 %v3723
    %3965 = vmatpush1.bf16.msra.mxu0 %v3722
    %3966 = vmatprep.mubr.bf16.mxu0 %v3349
    %3967 = vmatmul.mubr.bf16.gmra.mrb[0].mxu0 %v3348
    %v3968 = vpop.f32.mrb[0].mxu0
    %v3969 = vadd.f32 %v3363, %v3968
    %v3970 = vpop.f32.mrb[0].mxu0
    %v3971 = vadd.f32 %v3367, %v3970
    %v3972 = vpop.f32.mrb[0].mxu0
    %v3973 = vpop.f32.mrb[0].mxu0
    %3974 = vdwg.mxu0
    %3975 = vmatprep.subr.bf16.mxu0 %v3727
    %3976 = vmatpush1.bf16.msra.mxu0 %v3726
    %3977 = vmatprep.subr.bf16.mxu0 %v3731
    %3978 = vmatpush1.bf16.msra.mxu0 %v3730
    %3979 = vmatprep.subr.bf16.mxu0 %v3735
    %3980 = vmatpush1.bf16.msra.mxu0 %v3734
    %3981 = vmatprep.subr.bf16.mxu0 %v3739
    %3982 = vmatpush1.bf16.msra.mxu0 %v3738
    %3983 = vmatprep.subr.bf16.mxu0 %v3743
    %3984 = vmatpush1.bf16.msra.mxu0 %v3742
    %3985 = vmatprep.subr.bf16.mxu0 %v3747
    %3986 = vmatpush1.bf16.msra.mxu0 %v3746
    %3987 = vmatprep.subr.bf16.mxu0 %v3751
    %3988 = vmatpush1.bf16.msra.mxu0 %v3750
    %3989 = vmatprep.subr.bf16.mxu0 %v3755
    %3990 = vmatpush1.bf16.msra.mxu0 %v3754
    %3991 = vmatprep.subr.bf16.mxu0 0
    %3992 = vmatpush1.bf16.msra.mxu0 0
    %3993 = vmatprep.subr.bf16.mxu0 0
    %3994 = vmatpush1.bf16.msra.mxu0 0
    %3995 = vmatprep.subr.bf16.mxu0 0
    %3996 = vmatpush1.bf16.msra.mxu0 0
    %3997 = vmatprep.subr.bf16.mxu0 0
    %3998 = vmatpush1.bf16.msra.mxu0 0
    %3999 = vmatprep.subr.bf16.mxu0 0
    %4000 = vmatpush1.bf16.msra.mxu0 0
    %4001 = vmatprep.subr.bf16.mxu0 0
    %4002 = vmatpush1.bf16.msra.mxu0 0
    %4003 = vmatprep.subr.bf16.mxu0 0
    %4004 = vmatpush1.bf16.msra.mxu0 0
    %4005 = vmatprep.subr.bf16.mxu0 0
    %4006 = vmatpush1.bf16.msra.mxu0 0
    %4007 = vmatprep.mubr.bf16.mxu0 0
    %4008 = vmatmul.mubr.bf16.gmra.mrb[0].mxu0 %v3350
    %v4009 = vpop.f32.mrb[0].mxu0
    %v4010 = vadd.f32 %v3969, %v4009
    %v4011 = vpop.f32.mrb[0].mxu0
    %v4012 = vadd.f32 %v3971, %v4011
    %v4013 = vpop.f32.mrb[0].mxu0
    %v4014 = vpop.f32.mrb[0].mxu0
    %4015 = vdwg.mxu0
    %v4016 = vmax.f32 %v3928, 0.0
    %v4017 = vmax.f32 %v3930, 0.0
    %v4018 = vmax.f32 %v4010, 0.0
    %v4019 = vmax.f32 %v4012, 0.0
    %v4020 = vld [vmem:[%s19] sm:$0xff]
    %v4021 = vld [vmem:[%s19 + $0x8] sm:$0xff]
    %v4022 = vld [vmem:[%s19 + $0x10] sm:$0xff]
    %v4023 = vld [vmem:[%s19 + $0x18] sm:$0xff]
    %v4024 = vld [vmem:[%s19 + $0x20] sm:$0xff]
    %v4025 = vld [vmem:[%s19 + $0x28] sm:$0xff]
    %v4026 = vld [vmem:[%s19 + $0x30] sm:$0xff]
    %v4027 = vld [vmem:[%s19 + $0x38] sm:$0xff]
    %v4028 = vld [vmem:[%s19 + $0x40] sm:$0xff]
    %v4029 = vld [vmem:[%s19 + $0x48] sm:$0xff]
    %v4030 = vld [vmem:[%s19 + $0x50] sm:$0xff]
    %v4031 = vld [vmem:[%s19 + $0x58] sm:$0xff]
    %v4032 = vld [vmem:[%s19 + $0x60] sm:$0xff]
    %v4033 = vld [vmem:[%s19 + $0x68] sm:$0xff]
    %v4034 = vld [vmem:[%s19 + $0x70] sm:$0xff]
    %v4035 = vld [vmem:[%s19 + $0x78] sm:$0xff]
    %v4036 = vld [vmem:[%s19 + $0x80] sm:$0xff]
    %v4037 = vld [vmem:[%s19 + $0x88] sm:$0xff]
    %v4038 = vld [vmem:[%s19 + $0x90] sm:$0xff]
    %v4039 = vld [vmem:[%s19 + $0x98] sm:$0xff]
    %v4040 = vld [vmem:[%s19 + $0xa0] sm:$0xff]
    %v4041 = vld [vmem:[%s19 + $0xa8] sm:$0xff]
    %v4042 = vld [vmem:[%s19 + $0xb0] sm:$0xff]
    %v4043 = vld [vmem:[%s19 + $0xb8] sm:$0xff]
    %v4044 = vld [vmem:[%s19 + $0xc0] sm:$0xff]
    %v4045 = vld [vmem:[%s19 + $0xc8] sm:$0xff]
    %v4046 = vld [vmem:[%s19 + $0xd0] sm:$0xff]
    %v4047 = vld [vmem:[%s19 + $0xd8] sm:$0xff]
    %v4048 = vld [vmem:[%s19 + $0xe0] sm:$0xff]
    %v4049 = vld [vmem:[%s19 + $0xe8] sm:$0xff]
    %v4050 = vld [vmem:[%s19 + $0xf0] sm:$0xff]
    %v4051 = vld [vmem:[%s19 + $0xf8] sm:$0xff]
    %v4052 = vld [vmem:[%s19 + $0x100] sm:$0xff]
    %v4053 = vld [vmem:[%s19 + $0x108] sm:$0xff]
    %v4054 = vld [vmem:[%s19 + $0x110] sm:$0xff]
    %v4055 = vld [vmem:[%s19 + $0x118] sm:$0xff]
    %v4056 = vld [vmem:[%s19 + $0x120] sm:$0xff]
    %v4057 = vld [vmem:[%s19 + $0x128] sm:$0xff]
    %v4058 = vld [vmem:[%s19 + $0x130] sm:$0xff]
    %v4059 = vld [vmem:[%s19 + $0x138] sm:$0xff]
    %v4060 = vld [vmem:[%s19 + $0x140] sm:$0xff]
    %v4061 = vld [vmem:[%s19 + $0x148] sm:$0xff]
    %v4062 = vld [vmem:[%s19 + $0x150] sm:$0xff]
    %v4063 = vld [vmem:[%s19 + $0x158] sm:$0xff]
    %v4064 = vld [vmem:[%s19 + $0x160] sm:$0xff]
    %v4065 = vld [vmem:[%s19 + $0x168] sm:$0xff]
    %v4066 = vld [vmem:[%s19 + $0x170] sm:$0xff]
    %v4067 = vld [vmem:[%s19 + $0x178] sm:$0xff]
    %v4068 = vld [vmem:[%s19 + $0x180] sm:$0xff]
    %v4069 = vld [vmem:[%s19 + $0x188] sm:$0xff]
    %v4070 = vld [vmem:[%s19 + $0x190] sm:$0xff]
    %v4071 = vld [vmem:[%s19 + $0x198] sm:$0xff]
    %v4072 = vld [vmem:[%s19 + $0x1a0] sm:$0xff]
    %v4073 = vld [vmem:[%s19 + $0x1a8] sm:$0xff]
    %v4074 = vld [vmem:[%s19 + $0x1b0] sm:$0xff]
    %v4075 = vld [vmem:[%s19 + $0x1b8] sm:$0xff]
    %v4076 = vld [vmem:[%s19 + $0x1c0] sm:$0xff]
    %v4077 = vld [vmem:[%s19 + $0x1c8] sm:$0xff]
    %v4078 = vld [vmem:[%s19 + $0x1d0] sm:$0xff]
    %v4079 = vld [vmem:[%s19 + $0x1d8] sm:$0xff]
    %v4080 = vld [vmem:[%s19 + $0x1e0] sm:$0xff]
    %v4081 = vld [vmem:[%s19 + $0x1e8] sm:$0xff]
    %v4082 = vld [vmem:[%s19 + $0x1f0] sm:$0xff]
    %v4083 = vld [vmem:[%s19 + $0x1f8] sm:$0xff]
    %v4084 = vld [vmem:[%s19 + $0x200] sm:$0xff]
    %v4085 = vld [vmem:[%s19 + $0x208] sm:$0xff]
    %v4086 = vld [vmem:[%s19 + $0x210] sm:$0xff]
    %v4087 = vld [vmem:[%s19 + $0x218] sm:$0xff]
    %v4088 = vld [vmem:[%s19 + $0x220] sm:$0xff]
    %v4089 = vld [vmem:[%s19 + $0x228] sm:$0xff]
    %v4090 = vld [vmem:[%s19 + $0x230] sm:$0xff]
    %v4091 = vld [vmem:[%s19 + $0x238] sm:$0xff]
    %v4092 = vld [vmem:[%s19 + $0x240] sm:$0xff]
    %v4093 = vld [vmem:[%s19 + $0x248] sm:$0xff]
    %v4094 = vld [vmem:[%s19 + $0x250] sm:$0xff]
    %v4095 = vld [vmem:[%s19 + $0x258] sm:$0xff]
    %v4096 = vld [vmem:[%s19 + $0x260] sm:$0xff]
    %v4097 = vld [vmem:[%s19 + $0x268] sm:$0xff]
    %v4098 = vld [vmem:[%s19 + $0x270] sm:$0xff]
    %v4099 = vld [vmem:[%s19 + $0x278] sm:$0xff]
    %v4100 = vld [vmem:[%s19 + $0x280] sm:$0xff]
    %v4101 = vld [vmem:[%s19 + $0x288] sm:$0xff]
    %v4102 = vld [vmem:[%s19 + $0x290] sm:$0xff]
    %v4103 = vld [vmem:[%s19 + $0x298] sm:$0xff]
    %v4104 = vld [vmem:[%s19 + $0x2a0] sm:$0xff]
    %v4105 = vld [vmem:[%s19 + $0x2a8] sm:$0xff]
    %v4106 = vld [vmem:[%s19 + $0x2b0] sm:$0xff]
    %v4107 = vld [vmem:[%s19 + $0x2b8] sm:$0xff]
    %v4108 = vld [vmem:[%s19 + $0x2c0] sm:$0xff]
    %v4109 = vld [vmem:[%s19 + $0x2c8] sm:$0xff]
    %v4110 = vld [vmem:[%s19 + $0x2d0] sm:$0xff]
    %v4111 = vld [vmem:[%s19 + $0x2d8] sm:$0xff]
    %v4112 = vld [vmem:[%s19 + $0x2e0] sm:$0xff]
    %v4113 = vld [vmem:[%s19 + $0x2e8] sm:$0xff]
    %v4114 = vld [vmem:[%s19 + $0x2f0] sm:$0xff]
    %v4115 = vld [vmem:[%s19 + $0x2f8] sm:$0xff]
    %v4116 = vld [vmem:[%s19 + $0x300] sm:$0xff]
    %v4117 = vld [vmem:[%s19 + $0x308] sm:$0xff]
    %v4118 = vld [vmem:[%s19 + $0x310] sm:$0xff]
    %v4119 = vld [vmem:[%s19 + $0x318] sm:$0xff]
    %v4120 = vld [vmem:[%s19 + $0x320] sm:$0xff]
    %v4121 = vld [vmem:[%s19 + $0x328] sm:$0xff]
    %v4122 = vld [vmem:[%s19 + $0x330] sm:$0xff]
    %v4123 = vld [vmem:[%s19 + $0x338] sm:$0xff]
    %v4124 = vld [vmem:[%s19 + $0x340] sm:$0xff]
    %v4125 = vld [vmem:[%s19 + $0x348] sm:$0xff]
    %v4126 = vld [vmem:[%s19 + $0x350] sm:$0xff]
    %v4127 = vld [vmem:[%s19 + $0x358] sm:$0xff]
    %v4128 = vld [vmem:[%s19 + $0x360] sm:$0xff]
    %v4129 = vld [vmem:[%s19 + $0x368] sm:$0xff]
    %v4130 = vld [vmem:[%s19 + $0x370] sm:$0xff]
    %v4131 = vld [vmem:[%s19 + $0x378] sm:$0xff]
    %v4132 = vld [vmem:[%s19 + $0x380] sm:$0xff]
    %v4133 = vld [vmem:[%s19 + $0x388] sm:$0xff]
    %v4134 = vld [vmem:[%s19 + $0x390] sm:$0xff]
    %v4135 = vld [vmem:[%s19 + $0x398] sm:$0xff]
    %v4136 = vld [vmem:[%s19 + $0x3a0] sm:$0xff]
    %v4137 = vld [vmem:[%s19 + $0x3a8] sm:$0xff]
    %v4138 = vld [vmem:[%s19 + $0x3b0] sm:$0xff]
    %v4139 = vld [vmem:[%s19 + $0x3b8] sm:$0xff]
    %v4140 = vld [vmem:[%s19 + $0x3c0] sm:$0xff]
    %v4141 = vld [vmem:[%s19 + $0x3c8] sm:$0xff]
    %v4142 = vld [vmem:[%s19 + $0x3d0] sm:$0xff]
    %v4143 = vld [vmem:[%s19 + $0x3d8] sm:$0xff]
    %v4144 = vld [vmem:[%s19 + $0x3e0] sm:$0xff]
    %v4145 = vld [vmem:[%s19 + $0x3e8] sm:$0xff]
    %v4146 = vld [vmem:[%s19 + $0x3f0] sm:$0xff]
    %v4147 = vld [vmem:[%s19 + $0x3f8] sm:$0xff]
    %v4148 = vld [vmem:[%s20] sm:$0xf]
    %v4149 = vpack.c.bf16 %v4016, %v4016
    %v4150 = vpack.c.bf16 %v4017, %v4017
    %v4151 = vpack.c.bf16 %v4018, %v4018
    %v4152 = vpack.c.bf16 %v4019, %v4019
    %v4154 = vlaneseq
    %v4155 = vshrl.u32 %v4154, 7
    %v4156 = vsub.s32 0, %v4155
    %v4157 = vrot.slane %v4148, %v4156
    %v4158 = vlaneseq
    %v4159 = vshrl.u32 %v4158, 7
    %v4160 = vsub.s32 1, %v4159
    %v4161 = vrot.slane %v4148, %v4160
    %v4162 = vlaneseq
    %v4163 = vshrl.u32 %v4162, 7
    %v4164 = vsub.s32 2, %v4163
    %v4165 = vrot.slane %v4148, %v4164
    %v4166 = vlaneseq
    %v4167 = vshrl.u32 %v4166, 7
    %v4168 = vsub.s32 3, %v4167
    %v4169 = vrot.slane %v4148, %v4168
    %v4302 = vunpack.c.l.b16 %v4020
    %v4303 = vunpack.c.h.b16 %v4020
    %v4304 = vunpack.c.l.b16 %v4021
    %v4305 = vunpack.c.h.b16 %v4021
    %v4306 = vunpack.c.l.b16 %v4022
    %v4307 = vunpack.c.h.b16 %v4022
    %v4308 = vunpack.c.l.b16 %v4023
    %v4309 = vunpack.c.h.b16 %v4023
    %v4310 = vunpack.c.l.b16 %v4024
    %v4311 = vunpack.c.h.b16 %v4024
    %v4312 = vunpack.c.l.b16 %v4025
    %v4313 = vunpack.c.h.b16 %v4025
    %v4314 = vunpack.c.l.b16 %v4026
    %v4315 = vunpack.c.h.b16 %v4026
    %v4316 = vunpack.c.l.b16 %v4027
    %v4317 = vunpack.c.h.b16 %v4027
    %v4318 = vunpack.c.l.b16 %v4028
    %v4319 = vunpack.c.h.b16 %v4028
    %v4320 = vunpack.c.l.b16 %v4029
    %v4321 = vunpack.c.h.b16 %v4029
    %v4322 = vunpack.c.l.b16 %v4030
    %v4323 = vunpack.c.h.b16 %v4030
    %v4324 = vunpack.c.l.b16 %v4031
    %v4325 = vunpack.c.h.b16 %v4031
    %v4326 = vunpack.c.l.b16 %v4032
    %v4327 = vunpack.c.h.b16 %v4032
    %v4328 = vunpack.c.l.b16 %v4033
    %v4329 = vunpack.c.h.b16 %v4033
    %v4330 = vunpack.c.l.b16 %v4034
    %v4331 = vunpack.c.h.b16 %v4034
    %v4332 = vunpack.c.l.b16 %v4035
    %v4333 = vunpack.c.h.b16 %v4035
    %v4334 = vunpack.c.l.b16 %v4036
    %v4335 = vunpack.c.h.b16 %v4036
    %v4336 = vunpack.c.l.b16 %v4037
    %v4337 = vunpack.c.h.b16 %v4037
    %v4338 = vunpack.c.l.b16 %v4038
    %v4339 = vunpack.c.h.b16 %v4038
    %v4340 = vunpack.c.l.b16 %v4039
    %v4341 = vunpack.c.h.b16 %v4039
    %v4342 = vunpack.c.l.b16 %v4040
    %v4343 = vunpack.c.h.b16 %v4040
    %v4344 = vunpack.c.l.b16 %v4041
    %v4345 = vunpack.c.h.b16 %v4041
    %v4346 = vunpack.c.l.b16 %v4042
    %v4347 = vunpack.c.h.b16 %v4042
    %v4348 = vunpack.c.l.b16 %v4043
    %v4349 = vunpack.c.h.b16 %v4043
    %v4350 = vunpack.c.l.b16 %v4044
    %v4351 = vunpack.c.h.b16 %v4044
    %v4352 = vunpack.c.l.b16 %v4045
    %v4353 = vunpack.c.h.b16 %v4045
    %v4354 = vunpack.c.l.b16 %v4046
    %v4355 = vunpack.c.h.b16 %v4046
    %v4356 = vunpack.c.l.b16 %v4047
    %v4357 = vunpack.c.h.b16 %v4047
    %v4358 = vunpack.c.l.b16 %v4048
    %v4359 = vunpack.c.h.b16 %v4048
    %v4360 = vunpack.c.l.b16 %v4049
    %v4361 = vunpack.c.h.b16 %v4049
    %v4362 = vunpack.c.l.b16 %v4050
    %v4363 = vunpack.c.h.b16 %v4050
    %v4364 = vunpack.c.l.b16 %v4051
    %v4365 = vunpack.c.h.b16 %v4051
    %v4366 = vunpack.c.l.b16 %v4052
    %v4367 = vunpack.c.h.b16 %v4052
    %v4368 = vunpack.c.l.b16 %v4053
    %v4369 = vunpack.c.h.b16 %v4053
    %v4370 = vunpack.c.l.b16 %v4054
    %v4371 = vunpack.c.h.b16 %v4054
    %v4372 = vunpack.c.l.b16 %v4055
    %v4373 = vunpack.c.h.b16 %v4055
    %v4374 = vunpack.c.l.b16 %v4056
    %v4375 = vunpack.c.h.b16 %v4056
    %v4376 = vunpack.c.l.b16 %v4057
    %v4377 = vunpack.c.h.b16 %v4057
    %v4378 = vunpack.c.l.b16 %v4058
    %v4379 = vunpack.c.h.b16 %v4058
    %v4380 = vunpack.c.l.b16 %v4059
    %v4381 = vunpack.c.h.b16 %v4059
    %v4382 = vunpack.c.l.b16 %v4060
    %v4383 = vunpack.c.h.b16 %v4060
    %v4384 = vunpack.c.l.b16 %v4061
    %v4385 = vunpack.c.h.b16 %v4061
    %v4386 = vunpack.c.l.b16 %v4062
    %v4387 = vunpack.c.h.b16 %v4062
    %v4388 = vunpack.c.l.b16 %v4063
    %v4389 = vunpack.c.h.b16 %v4063
    %v4390 = vunpack.c.l.b16 %v4064
    %v4391 = vunpack.c.h.b16 %v4064
    %v4392 = vunpack.c.l.b16 %v4065
    %v4393 = vunpack.c.h.b16 %v4065
    %v4394 = vunpack.c.l.b16 %v4066
    %v4395 = vunpack.c.h.b16 %v4066
    %v4396 = vunpack.c.l.b16 %v4067
    %v4397 = vunpack.c.h.b16 %v4067
    %v4398 = vunpack.c.l.b16 %v4068
    %v4399 = vunpack.c.h.b16 %v4068
    %v4400 = vunpack.c.l.b16 %v4069
    %v4401 = vunpack.c.h.b16 %v4069
    %v4402 = vunpack.c.l.b16 %v4070
    %v4403 = vunpack.c.h.b16 %v4070
    %v4404 = vunpack.c.l.b16 %v4071
    %v4405 = vunpack.c.h.b16 %v4071
    %v4406 = vunpack.c.l.b16 %v4072
    %v4407 = vunpack.c.h.b16 %v4072
    %v4408 = vunpack.c.l.b16 %v4073
    %v4409 = vunpack.c.h.b16 %v4073
    %v4410 = vunpack.c.l.b16 %v4074
    %v4411 = vunpack.c.h.b16 %v4074
    %v4412 = vunpack.c.l.b16 %v4075
    %v4413 = vunpack.c.h.b16 %v4075
    %v4414 = vunpack.c.l.b16 %v4076
    %v4415 = vunpack.c.h.b16 %v4076
    %v4416 = vunpack.c.l.b16 %v4077
    %v4417 = vunpack.c.h.b16 %v4077
    %v4418 = vunpack.c.l.b16 %v4078
    %v4419 = vunpack.c.h.b16 %v4078
    %v4420 = vunpack.c.l.b16 %v4079
    %v4421 = vunpack.c.h.b16 %v4079
    %v4422 = vunpack.c.l.b16 %v4080
    %v4423 = vunpack.c.h.b16 %v4080
    %v4424 = vunpack.c.l.b16 %v4081
    %v4425 = vunpack.c.h.b16 %v4081
    %v4426 = vunpack.c.l.b16 %v4082
    %v4427 = vunpack.c.h.b16 %v4082
    %v4428 = vunpack.c.l.b16 %v4083
    %v4429 = vunpack.c.h.b16 %v4083
    %v4430 = vunpack.c.l.b16 %v4084
    %v4431 = vunpack.c.h.b16 %v4084
    %v4432 = vunpack.c.l.b16 %v4085
    %v4433 = vunpack.c.h.b16 %v4085
    %v4434 = vunpack.c.l.b16 %v4086
    %v4435 = vunpack.c.h.b16 %v4086
    %v4436 = vunpack.c.l.b16 %v4087
    %v4437 = vunpack.c.h.b16 %v4087
    %v4438 = vunpack.c.l.b16 %v4088
    %v4439 = vunpack.c.h.b16 %v4088
    %v4440 = vunpack.c.l.b16 %v4089
    %v4441 = vunpack.c.h.b16 %v4089
    %v4442 = vunpack.c.l.b16 %v4090
    %v4443 = vunpack.c.h.b16 %v4090
    %v4444 = vunpack.c.l.b16 %v4091
    %v4445 = vunpack.c.h.b16 %v4091
    %v4446 = vunpack.c.l.b16 %v4092
    %v4447 = vunpack.c.h.b16 %v4092
    %v4448 = vunpack.c.l.b16 %v4093
    %v4449 = vunpack.c.h.b16 %v4093
    %v4450 = vunpack.c.l.b16 %v4094
    %v4451 = vunpack.c.h.b16 %v4094
    %v4452 = vunpack.c.l.b16 %v4095
    %v4453 = vunpack.c.h.b16 %v4095
    %v4454 = vunpack.c.l.b16 %v4096
    %v4455 = vunpack.c.h.b16 %v4096
    %v4456 = vunpack.c.l.b16 %v4097
    %v4457 = vunpack.c.h.b16 %v4097
    %v4458 = vunpack.c.l.b16 %v4098
    %v4459 = vunpack.c.h.b16 %v4098
    %v4460 = vunpack.c.l.b16 %v4099
    %v4461 = vunpack.c.h.b16 %v4099
    %v4462 = vunpack.c.l.b16 %v4100
    %v4463 = vunpack.c.h.b16 %v4100
    %v4464 = vunpack.c.l.b16 %v4101
    %v4465 = vunpack.c.h.b16 %v4101
    %v4466 = vunpack.c.l.b16 %v4102
    %v4467 = vunpack.c.h.b16 %v4102
    %v4468 = vunpack.c.l.b16 %v4103
    %v4469 = vunpack.c.h.b16 %v4103
    %v4470 = vunpack.c.l.b16 %v4104
    %v4471 = vunpack.c.h.b16 %v4104
    %v4472 = vunpack.c.l.b16 %v4105
    %v4473 = vunpack.c.h.b16 %v4105
    %v4474 = vunpack.c.l.b16 %v4106
    %v4475 = vunpack.c.h.b16 %v4106
    %v4476 = vunpack.c.l.b16 %v4107
    %v4477 = vunpack.c.h.b16 %v4107
    %v4478 = vunpack.c.l.b16 %v4108
    %v4479 = vunpack.c.h.b16 %v4108
    %v4480 = vunpack.c.l.b16 %v4109
    %v4481 = vunpack.c.h.b16 %v4109
    %v4482 = vunpack.c.l.b16 %v4110
    %v4483 = vunpack.c.h.b16 %v4110
    %v4484 = vunpack.c.l.b16 %v4111
    %v4485 = vunpack.c.h.b16 %v4111
    %v4486 = vunpack.c.l.b16 %v4112
    %v4487 = vunpack.c.h.b16 %v4112
    %v4488 = vunpack.c.l.b16 %v4113
    %v4489 = vunpack.c.h.b16 %v4113
    %v4490 = vunpack.c.l.b16 %v4114
    %v4491 = vunpack.c.h.b16 %v4114
    %v4492 = vunpack.c.l.b16 %v4115
    %v4493 = vunpack.c.h.b16 %v4115
    %v4494 = vunpack.c.l.b16 %v4116
    %v4495 = vunpack.c.h.b16 %v4116
    %v4496 = vunpack.c.l.b16 %v4117
    %v4497 = vunpack.c.h.b16 %v4117
    %v4498 = vunpack.c.l.b16 %v4118
    %v4499 = vunpack.c.h.b16 %v4118
    %v4500 = vunpack.c.l.b16 %v4119
    %v4501 = vunpack.c.h.b16 %v4119
    %v4502 = vunpack.c.l.b16 %v4120
    %v4503 = vunpack.c.h.b16 %v4120
    %v4504 = vunpack.c.l.b16 %v4121
    %v4505 = vunpack.c.h.b16 %v4121
    %v4506 = vunpack.c.l.b16 %v4122
    %v4507 = vunpack.c.h.b16 %v4122
    %v4508 = vunpack.c.l.b16 %v4123
    %v4509 = vunpack.c.h.b16 %v4123
    %v4510 = vunpack.c.l.b16 %v4124
    %v4511 = vunpack.c.h.b16 %v4124
    %v4512 = vunpack.c.l.b16 %v4125
    %v4513 = vunpack.c.h.b16 %v4125
    %v4514 = vunpack.c.l.b16 %v4126
    %v4515 = vunpack.c.h.b16 %v4126
    %v4516 = vunpack.c.l.b16 %v4127
    %v4517 = vunpack.c.h.b16 %v4127
    %v4518 = vunpack.c.l.b16 %v4128
    %v4519 = vunpack.c.h.b16 %v4128
    %v4520 = vunpack.c.l.b16 %v4129
    %v4521 = vunpack.c.h.b16 %v4129
    %v4522 = vunpack.c.l.b16 %v4130
    %v4523 = vunpack.c.h.b16 %v4130
    %v4524 = vunpack.c.l.b16 %v4131
    %v4525 = vunpack.c.h.b16 %v4131
    %v4526 = vunpack.c.l.b16 %v4132
    %v4527 = vunpack.c.h.b16 %v4132
    %v4528 = vunpack.c.l.b16 %v4133
    %v4529 = vunpack.c.h.b16 %v4133
    %v4530 = vunpack.c.l.b16 %v4134
    %v4531 = vunpack.c.h.b16 %v4134
    %v4532 = vunpack.c.l.b16 %v4135
    %v4533 = vunpack.c.h.b16 %v4135
    %v4534 = vunpack.c.l.b16 %v4136
    %v4535 = vunpack.c.h.b16 %v4136
    %v4536 = vunpack.c.l.b16 %v4137
    %v4537 = vunpack.c.h.b16 %v4137
    %v4538 = vunpack.c.l.b16 %v4138
    %v4539 = vunpack.c.h.b16 %v4138
    %v4540 = vunpack.c.l.b16 %v4139
    %v4541 = vunpack.c.h.b16 %v4139
    %v4542 = vunpack.c.l.b16 %v4140
    %v4543 = vunpack.c.h.b16 %v4140
    %v4544 = vunpack.c.l.b16 %v4141
    %v4545 = vunpack.c.h.b16 %v4141
    %v4546 = vunpack.c.l.b16 %v4142
    %v4547 = vunpack.c.h.b16 %v4142
    %v4548 = vunpack.c.l.b16 %v4143
    %v4549 = vunpack.c.h.b16 %v4143
    %v4550 = vunpack.c.l.b16 %v4144
    %v4551 = vunpack.c.h.b16 %v4144
    %v4552 = vunpack.c.l.b16 %v4145
    %v4553 = vunpack.c.h.b16 %v4145
    %v4554 = vunpack.c.l.b16 %v4146
    %v4555 = vunpack.c.h.b16 %v4146
    %v4556 = vunpack.c.l.b16 %v4147
    %v4557 = vunpack.c.h.b16 %v4147
    %v4558 = vpack.c.b16 %v4306, %v4302
    %v4559 = vpack.c.b16 %v4307, %v4303
    %v4560 = vpack.c.b16 %v4308, %v4304
    %v4561 = vpack.c.b16 %v4309, %v4305
    %v4562 = vpack.c.b16 %v4314, %v4310
    %v4563 = vpack.c.b16 %v4315, %v4311
    %v4564 = vpack.c.b16 %v4316, %v4312
    %v4565 = vpack.c.b16 %v4317, %v4313
    %v4566 = vpack.c.b16 %v4322, %v4318
    %v4567 = vpack.c.b16 %v4323, %v4319
    %v4568 = vpack.c.b16 %v4324, %v4320
    %v4569 = vpack.c.b16 %v4325, %v4321
    %v4570 = vpack.c.b16 %v4330, %v4326
    %v4571 = vpack.c.b16 %v4331, %v4327
    %v4572 = vpack.c.b16 %v4332, %v4328
    %v4573 = vpack.c.b16 %v4333, %v4329
    %v4574 = vpack.c.b16 %v4338, %v4334
    %v4575 = vpack.c.b16 %v4339, %v4335
    %v4576 = vpack.c.b16 %v4340, %v4336
    %v4577 = vpack.c.b16 %v4341, %v4337
    %v4578 = vpack.c.b16 %v4346, %v4342
    %v4579 = vpack.c.b16 %v4347, %v4343
    %v4580 = vpack.c.b16 %v4348, %v4344
    %v4581 = vpack.c.b16 %v4349, %v4345
    %v4582 = vpack.c.b16 %v4354, %v4350
    %v4583 = vpack.c.b16 %v4355, %v4351
    %v4584 = vpack.c.b16 %v4356, %v4352
    %v4585 = vpack.c.b16 %v4357, %v4353
    %v4586 = vpack.c.b16 %v4362, %v4358
    %v4587 = vpack.c.b16 %v4363, %v4359
    %v4588 = vpack.c.b16 %v4364, %v4360
    %v4589 = vpack.c.b16 %v4365, %v4361
    %v4590 = vpack.c.b16 %v4370, %v4366
    %v4591 = vpack.c.b16 %v4371, %v4367
    %v4592 = vpack.c.b16 %v4372, %v4368
    %v4593 = vpack.c.b16 %v4373, %v4369
    %v4594 = vpack.c.b16 %v4378, %v4374
    %v4595 = vpack.c.b16 %v4379, %v4375
    %v4596 = vpack.c.b16 %v4380, %v4376
    %v4597 = vpack.c.b16 %v4381, %v4377
    %v4598 = vpack.c.b16 %v4386, %v4382
    %v4599 = vpack.c.b16 %v4387, %v4383
    %v4600 = vpack.c.b16 %v4388, %v4384
    %v4601 = vpack.c.b16 %v4389, %v4385
    %v4602 = vpack.c.b16 %v4394, %v4390
    %v4603 = vpack.c.b16 %v4395, %v4391
    %v4604 = vpack.c.b16 %v4396, %v4392
    %v4605 = vpack.c.b16 %v4397, %v4393
    %v4606 = vpack.c.b16 %v4402, %v4398
    %v4607 = vpack.c.b16 %v4403, %v4399
    %v4608 = vpack.c.b16 %v4404, %v4400
    %v4609 = vpack.c.b16 %v4405, %v4401
    %v4610 = vpack.c.b16 %v4410, %v4406
    %v4611 = vpack.c.b16 %v4411, %v4407
    %v4612 = vpack.c.b16 %v4412, %v4408
    %v4613 = vpack.c.b16 %v4413, %v4409
    %v4614 = vpack.c.b16 %v4418, %v4414
    %v4615 = vpack.c.b16 %v4419, %v4415
    %v4616 = vpack.c.b16 %v4420, %v4416
    %v4617 = vpack.c.b16 %v4421, %v4417
    %v4618 = vpack.c.b16 %v4426, %v4422
    %v4619 = vpack.c.b16 %v4427, %v4423
    %v4620 = vpack.c.b16 %v4428, %v4424
    %v4621 = vpack.c.b16 %v4429, %v4425
    %v4622 = vpack.c.b16 %v4434, %v4430
    %v4623 = vpack.c.b16 %v4435, %v4431
    %v4624 = vpack.c.b16 %v4436, %v4432
    %v4625 = vpack.c.b16 %v4437, %v4433
    %v4626 = vpack.c.b16 %v4442, %v4438
    %v4627 = vpack.c.b16 %v4443, %v4439
    %v4628 = vpack.c.b16 %v4444, %v4440
    %v4629 = vpack.c.b16 %v4445, %v4441
    %v4630 = vpack.c.b16 %v4450, %v4446
    %v4631 = vpack.c.b16 %v4451, %v4447
    %v4632 = vpack.c.b16 %v4452, %v4448
    %v4633 = vpack.c.b16 %v4453, %v4449
    %v4634 = vpack.c.b16 %v4458, %v4454
    %v4635 = vpack.c.b16 %v4459, %v4455
    %v4636 = vpack.c.b16 %v4460, %v4456
    %v4637 = vpack.c.b16 %v4461, %v4457
    %v4638 = vpack.c.b16 %v4466, %v4462
    %v4639 = vpack.c.b16 %v4467, %v4463
    %v4640 = vpack.c.b16 %v4468, %v4464
    %v4641 = vpack.c.b16 %v4469, %v4465
    %v4642 = vpack.c.b16 %v4474, %v4470
    %v4643 = vpack.c.b16 %v4475, %v4471
    %v4644 = vpack.c.b16 %v4476, %v4472
    %v4645 = vpack.c.b16 %v4477, %v4473
    %v4646 = vpack.c.b16 %v4482, %v4478
    %v4647 = vpack.c.b16 %v4483, %v4479
    %v4648 = vpack.c.b16 %v4484, %v4480
    %v4649 = vpack.c.b16 %v4485, %v4481
    %v4650 = vpack.c.b16 %v4490, %v4486
    %v4651 = vpack.c.b16 %v4491, %v4487
    %v4652 = vpack.c.b16 %v4492, %v4488
    %v4653 = vpack.c.b16 %v4493, %v4489
    %v4654 = vpack.c.b16 %v4498, %v4494
    %v4655 = vpack.c.b16 %v4499, %v4495
    %v4656 = vpack.c.b16 %v4500, %v4496
    %v4657 = vpack.c.b16 %v4501, %v4497
    %v4658 = vpack.c.b16 %v4506, %v4502
    %v4659 = vpack.c.b16 %v4507, %v4503
    %v4660 = vpack.c.b16 %v4508, %v4504
    %v4661 = vpack.c.b16 %v4509, %v4505
    %v4662 = vpack.c.b16 %v4514, %v4510
    %v4663 = vpack.c.b16 %v4515, %v4511
    %v4664 = vpack.c.b16 %v4516, %v4512
    %v4665 = vpack.c.b16 %v4517, %v4513
    %v4666 = vpack.c.b16 %v4522, %v4518
    %v4667 = vpack.c.b16 %v4523, %v4519
    %v4668 = vpack.c.b16 %v4524, %v4520
    %v4669 = vpack.c.b16 %v4525, %v4521
    %v4670 = vpack.c.b16 %v4530, %v4526
    %v4671 = vpack.c.b16 %v4531, %v4527
    %v4672 = vpack.c.b16 %v4532, %v4528
    %v4673 = vpack.c.b16 %v4533, %v4529
    %v4674 = vpack.c.b16 %v4538, %v4534
    %v4675 = vpack.c.b16 %v4539, %v4535
    %v4676 = vpack.c.b16 %v4540, %v4536
    %v4677 = vpack.c.b16 %v4541, %v4537
    %v4678 = vpack.c.b16 %v4546, %v4542
    %v4679 = vpack.c.b16 %v4547, %v4543
    %v4680 = vpack.c.b16 %v4548, %v4544
    %v4681 = vpack.c.b16 %v4549, %v4545
    %v4682 = vpack.c.b16 %v4554, %v4550
    %v4683 = vpack.c.b16 %v4555, %v4551
    %v4684 = vpack.c.b16 %v4556, %v4552
    %v4685 = vpack.c.b16 %v4557, %v4553
    %4814 = vmatprep.subr.bf16.mxu0 %v4559
    %4815 = vmatpush1.bf16.msra.mxu0 %v4558
    %4816 = vmatprep.subr.bf16.mxu0 %v4563
    %4817 = vmatpush1.bf16.msra.mxu0 %v4562
    %4818 = vmatprep.subr.bf16.mxu0 %v4567
    %4819 = vmatpush1.bf16.msra.mxu0 %v4566
    %4820 = vmatprep.subr.bf16.mxu0 %v4571
    %4821 = vmatpush1.bf16.msra.mxu0 %v4570
    %4822 = vmatprep.subr.bf16.mxu0 %v4575
    %4823 = vmatpush1.bf16.msra.mxu0 %v4574
    %4824 = vmatprep.subr.bf16.mxu0 %v4579
    %4825 = vmatpush1.bf16.msra.mxu0 %v4578
    %4826 = vmatprep.subr.bf16.mxu0 %v4583
    %4827 = vmatpush1.bf16.msra.mxu0 %v4582
    %4828 = vmatprep.subr.bf16.mxu0 %v4587
    %4829 = vmatpush1.bf16.msra.mxu0 %v4586
    %4830 = vmatprep.subr.bf16.mxu0 %v4591
    %4831 = vmatpush1.bf16.msra.mxu0 %v4590
    %4832 = vmatprep.subr.bf16.mxu0 %v4595
    %4833 = vmatpush1.bf16.msra.mxu0 %v4594
    %4834 = vmatprep.subr.bf16.mxu0 %v4599
    %4835 = vmatpush1.bf16.msra.mxu0 %v4598
    %4836 = vmatprep.subr.bf16.mxu0 %v4603
    %4837 = vmatpush1.bf16.msra.mxu0 %v4602
    %4838 = vmatprep.subr.bf16.mxu0 %v4607
    %4839 = vmatpush1.bf16.msra.mxu0 %v4606
    %4840 = vmatprep.subr.bf16.mxu0 %v4611
    %4841 = vmatpush1.bf16.msra.mxu0 %v4610
    %4842 = vmatprep.subr.bf16.mxu0 %v4615
    %4843 = vmatpush1.bf16.msra.mxu0 %v4614
    %4844 = vmatprep.subr.bf16.mxu0 %v4619
    %4845 = vmatpush1.bf16.msra.mxu0 %v4618
    %4846 = vmatprep.mubr.bf16.mxu0 %v4150
    %4847 = vmatmul.mubr.bf16.gmra.mrb[0].mxu0 %v4149
    %v4848 = vpop.f32.mrb[0].mxu0
    %v4849 = vadd.f32 %v4157, %v4848
    %v4850 = vpop.f32.mrb[0].mxu0
    %v4851 = vadd.f32 %v4161, %v4850
    %v4852 = vpop.f32.mrb[0].mxu0
    %v4853 = vpop.f32.mrb[0].mxu0
    %4854 = vdwg.mxu0
    %4855 = vmatprep.subr.bf16.mxu0 %v4623
    %4856 = vmatpush1.bf16.msra.mxu0 %v4622
    %4857 = vmatprep.subr.bf16.mxu0 %v4627
    %4858 = vmatpush1.bf16.msra.mxu0 %v4626
    %4859 = vmatprep.subr.bf16.mxu0 %v4631
    %4860 = vmatpush1.bf16.msra.mxu0 %v4630
    %4861 = vmatprep.subr.bf16.mxu0 %v4635
    %4862 = vmatpush1.bf16.msra.mxu0 %v4634
    %4863 = vmatprep.subr.bf16.mxu0 %v4639
    %4864 = vmatpush1.bf16.msra.mxu0 %v4638
    %4865 = vmatprep.subr.bf16.mxu0 %v4643
    %4866 = vmatpush1.bf16.msra.mxu0 %v4642
    %4867 = vmatprep.subr.bf16.mxu0 %v4647
    %4868 = vmatpush1.bf16.msra.mxu0 %v4646
    %4869 = vmatprep.subr.bf16.mxu0 %v4651
    %4870 = vmatpush1.bf16.msra.mxu0 %v4650
    %4871 = vmatprep.subr.bf16.mxu0 %v4655
    %4872 = vmatpush1.bf16.msra.mxu0 %v4654
    %4873 = vmatprep.subr.bf16.mxu0 %v4659
    %4874 = vmatpush1.bf16.msra.mxu0 %v4658
    %4875 = vmatprep.subr.bf16.mxu0 %v4663
    %4876 = vmatpush1.bf16.msra.mxu0 %v4662
    %4877 = vmatprep.subr.bf16.mxu0 %v4667
    %4878 = vmatpush1.bf16.msra.mxu0 %v4666
    %4879 = vmatprep.subr.bf16.mxu0 %v4671
    %4880 = vmatpush1.bf16.msra.mxu0 %v4670
    %4881 = vmatprep.subr.bf16.mxu0 %v4675
    %4882 = vmatpush1.bf16.msra.mxu0 %v4674
    %4883 = vmatprep.subr.bf16.mxu0 %v4679
    %4884 = vmatpush1.bf16.msra.mxu0 %v4678
    %4885 = vmatprep.subr.bf16.mxu0 %v4683
    %4886 = vmatpush1.bf16.msra.mxu0 %v4682
    %4887 = vmatprep.mubr.bf16.mxu0 %v4152
    %4888 = vmatmul.mubr.bf16.gmra.mrb[0].mxu0 %v4151
    %v4889 = vpop.f32.mrb[0].mxu0
    %v4890 = vadd.f32 %v4849, %v4889
    %v4891 = vpop.f32.mrb[0].mxu0
    %v4892 = vadd.f32 %v4851, %v4891
    %v4893 = vpop.f32.mrb[0].mxu0
    %v4894 = vpop.f32.mrb[0].mxu0
    %4895 = vdwg.mxu0
    %4896 = vmatprep.subr.bf16.mxu0 %v4561
    %4897 = vmatpush1.bf16.msra.mxu0 %v4560
    %4898 = vmatprep.subr.bf16.mxu0 %v4565
    %4899 = vmatpush1.bf16.msra.mxu0 %v4564
    %4900 = vmatprep.subr.bf16.mxu0 %v4569
    %4901 = vmatpush1.bf16.msra.mxu0 %v4568
    %4902 = vmatprep.subr.bf16.mxu0 %v4573
    %4903 = vmatpush1.bf16.msra.mxu0 %v4572
    %4904 = vmatprep.subr.bf16.mxu0 %v4577
    %4905 = vmatpush1.bf16.msra.mxu0 %v4576
    %4906 = vmatprep.subr.bf16.mxu0 %v4581
    %4907 = vmatpush1.bf16.msra.mxu0 %v4580
    %4908 = vmatprep.subr.bf16.mxu0 %v4585
    %4909 = vmatpush1.bf16.msra.mxu0 %v4584
    %4910 = vmatprep.subr.bf16.mxu0 %v4589
    %4911 = vmatpush1.bf16.msra.mxu0 %v4588
    %4912 = vmatprep.subr.bf16.mxu0 %v4593
    %4913 = vmatpush1.bf16.msra.mxu0 %v4592
    %4914 = vmatprep.subr.bf16.mxu0 %v4597
    %4915 = vmatpush1.bf16.msra.mxu0 %v4596
    %4916 = vmatprep.subr.bf16.mxu0 %v4601
    %4917 = vmatpush1.bf16.msra.mxu0 %v4600
    %4918 = vmatprep.subr.bf16.mxu0 %v4605
    %4919 = vmatpush1.bf16.msra.mxu0 %v4604
    %4920 = vmatprep.subr.bf16.mxu0 %v4609
    %4921 = vmatpush1.bf16.msra.mxu0 %v4608
    %4922 = vmatprep.subr.bf16.mxu0 %v4613
    %4923 = vmatpush1.bf16.msra.mxu0 %v4612
    %4924 = vmatprep.subr.bf16.mxu0 %v4617
    %4925 = vmatpush1.bf16.msra.mxu0 %v4616
    %4926 = vmatprep.subr.bf16.mxu0 %v4621
    %4927 = vmatpush1.bf16.msra.mxu0 %v4620
    %4928 = vmatprep.mubr.bf16.mxu0 %v4150
    %4929 = vmatmul.mubr.bf16.gmra.mrb[0].mxu0 %v4149
    %v4930 = vpop.f32.mrb[0].mxu0
    %v4931 = vadd.f32 %v4165, %v4930
    %v4932 = vpop.f32.mrb[0].mxu0
    %v4933 = vadd.f32 %v4169, %v4932
    %v4934 = vpop.f32.mrb[0].mxu0
    %v4935 = vpop.f32.mrb[0].mxu0
    %4936 = vdwg.mxu0
    %4937 = vmatprep.subr.bf16.mxu0 %v4625
    %4938 = vmatpush1.bf16.msra.mxu0 %v4624
    %4939 = vmatprep.subr.bf16.mxu0 %v4629
    %4940 = vmatpush1.bf16.msra.mxu0 %v4628
    %4941 = vmatprep.subr.bf16.mxu0 %v4633
    %4942 = vmatpush1.bf16.msra.mxu0 %v4632
    %4943 = vmatprep.subr.bf16.mxu0 %v4637
    %4944 = vmatpush1.bf16.msra.mxu0 %v4636
    %4945 = vmatprep.subr.bf16.mxu0 %v4641
    %4946 = vmatpush1.bf16.msra.mxu0 %v4640
    %4947 = vmatprep.subr.bf16.mxu0 %v4645
    %4948 = vmatpush1.bf16.msra.mxu0 %v4644
    %4949 = vmatprep.subr.bf16.mxu0 %v4649
    %4950 = vmatpush1.bf16.msra.mxu0 %v4648
    %4951 = vmatprep.subr.bf16.mxu0 %v4653
    %4952 = vmatpush1.bf16.msra.mxu0 %v4652
    %4953 = vmatprep.subr.bf16.mxu0 %v4657
    %4954 = vmatpush1.bf16.msra.mxu0 %v4656
    %4955 = vmatprep.subr.bf16.mxu0 %v4661
    %4956 = vmatpush1.bf16.msra.mxu0 %v4660
    %4957 = vmatprep.subr.bf16.mxu0 %v4665
    %4958 = vmatpush1.bf16.msra.mxu0 %v4664
    %4959 = vmatprep.subr.bf16.mxu0 %v4669
    %4960 = vmatpush1.bf16.msra.mxu0 %v4668
    %4961 = vmatprep.subr.bf16.mxu0 %v4673
    %4962 = vmatpush1.bf16.msra.mxu0 %v4672
    %4963 = vmatprep.subr.bf16.mxu0 %v4677
    %4964 = vmatpush1.bf16.msra.mxu0 %v4676
    %4965 = vmatprep.subr.bf16.mxu0 %v4681
    %4966 = vmatpush1.bf16.msra.mxu0 %v4680
    %4967 = vmatprep.subr.bf16.mxu0 %v4685
    %4968 = vmatpush1.bf16.msra.mxu0 %v4684
    %4969 = vmatprep.mubr.bf16.mxu0 %v4152
    %4970 = vmatmul.mubr.bf16.gmra.mrb[0].mxu0 %v4151
    %v4971 = vpop.f32.mrb[0].mxu0
    %v4972 = vadd.f32 %v4931, %v4971
    %v4973 = vpop.f32.mrb[0].mxu0
    %v4974 = vadd.f32 %v4933, %v4973
    %v4975 = vpop.f32.mrb[0].mxu0
    %v4976 = vpop.f32.mrb[0].mxu0
    %4977 = vdwg.mxu0
    %v4982 = vcombine.low %v4890, %v4892
    %v4983 = vcombine.low %v4972, %v4974
    %v4985 = vunpack.c.l.s4 1983009808
    %v4986 = vunpack.c.0.s8 %v4985
    %v4987 = vlaneseq
    %v4988 = vshrl.u32 %v4987, 7
    %v4989 = vsub.s32 %v4986, %v4988
    %v4990 = vrot.slane %v4982, %v4989
    %v4992 = vunpack.c.l.s4 1983009808
    %v4993 = vunpack.c.0.s8 %v4992
    %v4994 = vlaneseq
    %v4995 = vshrl.u32 %v4994, 7
    %v4996 = vsub.s32 %v4993, %v4995
    %v4997 = vrot.slane %v4983, %v4996
    %v4998 = vcombine.low %v4990, %v4997
    %5000 = vst [vmem:[#allocation4] sm:$0xff] %v4998
    // Predicated region
    $region86: #{autoencoder_forward.1} parent=1 // pred_check
      _
    $region87: #{autoencoder_forward.1} parent=1 // pred_check_branch
      %5002 = sbr.rel (0) target = $region89
    $region88: #{autoencoder_forward.1} parent=1 // pred_region
      %s5004 = ssub.s32 32, 32
      %5005 = vsyncadd [#allocation3], %s5004
      %s5007 = sshll.u32 [#allocation2], 4
      %s5008 = int_to_ptr.vmem [resolvable:$true] %s5007
      %5010 = dma.vmem_to_hbm [thread:$0]  %s5008, 32, %s21, [#allocation3]
    $region89: #{autoencoder_forward.1} parent=1 // pred_fallthru
      _
    // Predicated region
    $region90: #{autoencoder_forward.1} parent=1 // pred_check
      _
    $region91: #{autoencoder_forward.1} parent=1 // pred_check_branch
      %5012 = sbr.rel (0) target = $region93
    $region92: #{autoencoder_forward.1} parent=1 // pred_region
      %s5014 = ssub.s32 128, 128
      %5015 = vsyncadd [#allocation5], %s5014
      %s5017 = sshll.u32 [#allocation4], 4
      %s5018 = int_to_ptr.vmem [resolvable:$true] %s5017
      %5020 = dma.vmem_to_hbm [thread:$0]  %s5018, 128, %s22, [#allocation5]
    $region93: #{autoencoder_forward.1} parent=1 // pred_fallthru
      _
    // Predicated region
    $region94: #{autoencoder_forward.1} parent=1 // pred_check
      _
    $region95: #{autoencoder_forward.1} parent=1 // pred_check_branch
      %5022 = sbr.rel (0) target = $region97
    $region96: #{autoencoder_forward.1} parent=1 // pred_region
      %5023 = dma.done [#allocation3], 32
    $region97: #{autoencoder_forward.1} parent=1 // pred_fallthru
      _
    // Predicated region
    $region98: #{autoencoder_forward.1} parent=1 // pred_check
      _
    $region99: #{autoencoder_forward.1} parent=1 // pred_check_branch
      %5025 = sbr.rel (0) target = $region101
    $region100: #{autoencoder_forward.1} parent=1 // pred_region
      %5026 = dma.done [#allocation5], 128
    $region101: #{autoencoder_forward.1} parent=1 // pred_fallthru
      _
    %5027 = vsyncpa [#allocation3], 1
    %5028 = vsyncpa [#allocation5], 1

</llo_original>
